<compile_context>
chip_gen: v7x
topology: tpu7x:2x2x1
jax: 0.10.0
libtpu: 0.0.40
codegen_flags: <defaults>
</compile_context>

<pallas_src>
import jax
import jax.numpy as jnp
from jax.experimental import pallas as pl
from jax.experimental.pallas import tpu as pltpu

HIDDEN = 800  # as in the PyTorch module for 'mlp_mnist'


def _round_up(v, m):
    return ((v + m - 1) // m) * m


def _num_tensorcores():
    """Best-effort TensorCores-per-chip: v7x has 2, v5e/v6e have 1."""
    try:
        kind = jax.devices()[0].device_kind.lower()
    except Exception:
        return 1
    return 2 if "v7" in kind else 1


_BUFFERED_OK = None


def _buffered_weights_supported():
    """Probe pl.Buffered(1) (single-buffered resident weights) exactly once."""
    global _BUFFERED_OK
    if _BUFFERED_OK is not None:
        return _BUFFERED_OK
    try:
        def k(x_ref, w_ref, o_ref):
            o_ref[...] = x_ref[...] + w_ref[...]

        x = jnp.zeros((8, 128), jnp.float32)
        f = pl.pallas_call(
            k,
            out_shape=jax.ShapeDtypeStruct((8, 128), jnp.float32),
            grid_spec=pltpu.PrefetchScalarGridSpec(
                num_scalar_prefetch=0,
                grid=(1,),
                in_specs=[
                    pl.BlockSpec((8, 128), lambda i: (0, 0)),
                    pl.BlockSpec((8, 128), lambda i: (0, 0),
                                 pipeline_mode=pl.Buffered(1)),
                ],
                out_specs=pl.BlockSpec((8, 128), lambda i: (0, 0)),
            ),
        )
        jax.block_until_ready(f(x, x))
        _BUFFERED_OK = True
    except Exception:
        _BUFFERED_OK = False
    return _BUFFERED_OK


def _pick_tb(B, num_cores):
    """Batch tile. 1 TC: single big tile (fewer grid steps). 2 TCs (v7x):
    >=2 grid steps, full 256/512-row MXU tiles when B allows."""
    if num_cores <= 1:
        return min(_round_up(max(B, 1), 16), 512)
    if B >= 1024:
        return 512
    if B >= 512:
        return 256
    if B >= 32:
        return _round_up(-(-B // 2), 16)   # two-ish steps -> both cores busy
    return min(_round_up(max(B, 1), 16), 512)


def _mlp_kernel(x_ref, w1_ref, b1_ref, w2_ref, b2_ref, w3_ref, b3_ref, o_ref):
    wdt = w1_ref.dtype  # matmul operand dtype (bf16 by default, f32 optional)
    x = x_ref[...].astype(wdt)
    # Layer 1: Linear + ReLU  (MXU, f32 accumulation; bias/ReLU in f32 on VPU)
    h1 = jnp.dot(x, w1_ref[...], preferred_element_type=jnp.float32)
    h1 = jnp.maximum(h1 + b1_ref[...], 0.0)
    # Layer 2: Linear + ReLU
    h2 = jnp.dot(h1.astype(wdt), w2_ref[...], preferred_element_type=jnp.float32)
    h2 = jnp.maximum(h2 + b2_ref[...], 0.0)
    # Layer 3: Linear (no activation) -> mean_t (lane-dense padded slab)
    out = jnp.dot(h2.astype(wdt), w3_ref[...], preferred_element_type=jnp.float32)
    o_ref[...] = (out + b3_ref[...]).astype(o_ref.dtype)


def prepare_params(params, *, K, n_x, weight_dtype=jnp.bfloat16):
    """One-time re-layout: transpose to (in, out), zero-pad out-dims to 128, cast.

    weight_dtype=jnp.float32 for exact PyTorch-f32 semantics; bf16 (default)
    halves HBM weight traffic with f32 accumulation on the MXU."""
    w1, b1, w2, b2, w3, b3 = params
    out_dim = 2 * K
    hid_p = _round_up(HIDDEN, 128)               # 800 -> 896
    out_p = _round_up(max(out_dim, 128), 128)

    # PyTorch Linear computes x @ W.T + b with W of shape (out, in).
    w1t = jnp.pad(w1.T.astype(jnp.float32),
                  ((0, 0), (0, hid_p - HIDDEN))).astype(weight_dtype)          # (n_x, hid_p)
    w2t = jnp.pad(w2.T.astype(jnp.float32),
                  ((0, hid_p - HIDDEN), (0, hid_p - HIDDEN))).astype(weight_dtype)
    w3t = jnp.pad(w3.T.astype(jnp.float32),
                  ((0, hid_p - HIDDEN), (0, out_p - out_dim))).astype(weight_dtype)
    b1r = jnp.pad(b1.astype(jnp.float32), (0, hid_p - HIDDEN)).reshape(1, hid_p)
    b2r = jnp.pad(b2.astype(jnp.float32), (0, hid_p - HIDDEN)).reshape(1, hid_p)
    b3r = jnp.pad(b3.astype(jnp.float32), (0, out_p - out_dim)).reshape(1, out_p)
    return dict(w1t=w1t, b1=b1r, w2t=w2t, b2=b2r, w3t=w3t, b3=b3r,
                n_x=n_x, hid_p=hid_p, out_p=out_p, out_dim=out_dim)


def make_encoder_forward(prepared, *, tb=None, vmem_limit_bytes=32 * 1024 * 1024):
    """Build the jitted forward once. Returned fn: x (any shape, prod of
    trailing dims == n_x per row) -> mean_t (B, 2K) float32."""
    n_x = prepared["n_x"]
    hid_p = prepared["hid_p"]
    out_p = prepared["out_p"]
    out_dim = prepared["out_dim"]
    compute_dtype = prepared["w1t"].dtype
    num_cores = _num_tensorcores()
    use_buffered = _buffered_weights_supported()
    weights = (prepared["w1t"], prepared["b1"], prepared["w2t"], prepared["b2"],
               prepared["w3t"], prepared["b3"])

    def fwd(x, w1t, b1, w2t, b2, w3t, b3):
        x2d = x.reshape(-1, n_x).astype(compute_dtype)   # torch .view(-1, n_x)
        B = x2d.shape[0]
        tb_ = tb if tb is not None else _pick_tb(B, num_cores)
        grid = (pl.cdiv(B, tb_),)

        def w_spec(shape):
            kw = {"pipeline_mode": pl.Buffered(1)} if use_buffered else {}
            return pl.BlockSpec(shape, lambda i: (0, 0), **kw)

        in_specs = [
            pl.BlockSpec((tb_, n_x), lambda i: (i, 0)),   # x tile (full feature dim)
            w_spec((n_x, hid_p)),                         # W1^T (resident)
            w_spec((1, hid_p)),                           # b1
            w_spec((hid_p, hid_p)),                       # W2^T
            w_spec((1, hid_p)),                           # b2
            w_spec((hid_p, out_p)),                       # W3^T
            w_spec((1, out_p)),                           # b3
        ]
        out = pl.pallas_call(
            _mlp_kernel,
            out_shape=jax.ShapeDtypeStruct((B, out_p), jnp.float32),
            grid_spec=pltpu.PrefetchScalarGridSpec(
                num_scalar_prefetch=0,
                grid=grid,
                in_specs=in_specs,
                out_specs=pl.BlockSpec((tb_, out_p), lambda i: (i, 0)),
            ),
            compiler_params=pltpu.CompilerParams(
                dimension_semantics=("parallel",),
                vmem_limit_bytes=vmem_limit_bytes,
            ),
        )(x2d, w1t, b1, w2t, b2, w3t, b3)
        if out_p != out_dim:
            out = out[:, :out_dim]
        return out

    jitted = jax.jit(fwd)
    return lambda x: jitted(x, *weights)


def init_params(key, K, n_x):
    """Deterministic init mirroring PyTorch Linear default (uniform +/- 1/sqrt(fan_in))."""
    ks = jax.random.split(key, 6)

    def lin(kw, kb, fan_in, fan_out):
        bound = 1.0 / jnp.sqrt(fan_in)
        w = jax.random.uniform(kw, (fan_out, fan_in), jnp.float32, -bound, bound)
        b = jax.random.uniform(kb, (fan_out,), jnp.float32, -bound, bound)
        return w, b

    w1, b1 = lin(ks[0], ks[1], n_x, HIDDEN)
    w2, b2 = lin(ks[2], ks[3], HIDDEN, HIDDEN)
    w3, b3 = lin(ks[4], ks[5], HIDDEN, 2 * K)
    return (w1, b1, w2, b2, w3, b3)


def reference_forward_f32(x, params, *, n_x):
    """Pure-JAX float32 reference matching the PyTorch module (highest precision)."""
    w1, b1, w2, b2, w3, b3 = params
    hp = jax.lax.Precision.HIGHEST
    x2d = x.reshape(-1, n_x).astype(jnp.float32)
    h1 = jnp.maximum(jnp.dot(x2d, w1.T, precision=hp) + b1, 0.0)
    h2 = jnp.maximum(jnp.dot(h1, w2.T, precision=hp) + b2, 0.0)
    return jnp.dot(h2, w3.T, precision=hp) + b3


if __name__ == "__main__":
    # Small MNIST-like setup: batch=8, single channel 16x16 images -> n_x = 256, K = 32.
    K = 32
    C, H, W = 1, 16, 16
    n_x = C * H * W
    B = 8

    key = jax.random.PRNGKey(0)
    kx, kp = jax.random.split(key)
    x = jax.random.normal(kx, (B, C, H, W), jnp.float32)  # NCHW, flattened inside
    params = init_params(kp, K, n_x)
    ref = reference_forward_f32(x, params, n_x=n_x)

    # 1) bf16-weight fast path vs float32 reference (loose tolerance).
    fwd_bf16 = make_encoder_forward(prepare_params(params, K=K, n_x=n_x,
                                                   weight_dtype=jnp.bfloat16))
    mean_t = jax.block_until_ready(fwd_bf16(x))
    assert mean_t.shape == (B, 2 * K)
    assert jnp.allclose(mean_t, ref, atol=5e-2, rtol=5e-2)

    # 2) f32-weight path vs float32 reference (tight tolerance).
    fwd_f32 = make_encoder_forward(prepare_params(params, K=K, n_x=n_x,
                                                  weight_dtype=jnp.float32))
    mean_f32 = jax.block_until_ready(fwd_f32(x))
    assert jnp.allclose(mean_f32, ref, atol=1e-2, rtol=1e-2)

    # 3) Ragged batch (B=5 < batch tile) + feature dim not a 128-multiple (784).
    n_x2, B2 = 784, 5
    x2 = jax.random.normal(jax.random.PRNGKey(1), (B2, 1, 28, 28), jnp.float32)
    params2 = init_params(jax.random.PRNGKey(2), K, n_x2)
    fwd2 = make_encoder_forward(prepare_params(params2, K=K, n_x=n_x2,
                                               weight_dtype=jnp.float32))
    out2 = jax.block_until_ready(fwd2(x2))
    ref2 = reference_forward_f32(x2, params2, n_x=n_x2)
    assert out2.shape == (B2, 2 * K)
    assert jnp.allclose(out2, ref2, atol=1e-2, rtol=1e-2)

    print("KERNEL_OK")
</pallas_src>

<mosaic_0001>
module attributes {stable_mosaic.version = 11 : i64} {
  func.func @k(%arg0: i32, %arg1: memref<8x128xf32, #tpu.memory_space<vmem>>, %arg2: memref<8x128xf32, #tpu.memory_space<vmem>>, %arg3: memref<8x128xf32, #tpu.memory_space<vmem>>) attributes {dimension_semantics = [#tpu.dimension_semantics<arbitrary>], iteration_bounds = array<i64: 1>, scalar_prefetch = 0 : i64, scratch_operands = 0 : i64, tpu.core_type = #tpu.core_type<tc>, window_params = [{pipeline_mode = #tpu.pipeline_mode<synchronous>, transform_indices = @transform_0, window_bounds = array<i64: 8, 128>}, {pipeline_mode = #tpu.pipeline_mode<synchronous>, transform_indices = @transform_1, window_bounds = array<i64: 8, 128>}, {pipeline_mode = #tpu.pipeline_mode<synchronous>, transform_indices = @transform_2, window_bounds = array<i64: 8, 128>}]} {
    %c0 = arith.constant 0 : index
    %c0_0 = arith.constant 0 : index
    %0 = vector.load %arg1[%c0, %c0_0] : memref<8x128xf32, #tpu.memory_space<vmem>>, vector<8x128xf32>
    %c0_1 = arith.constant 0 : index
    %c0_2 = arith.constant 0 : index
    %1 = vector.load %arg2[%c0_1, %c0_2] : memref<8x128xf32, #tpu.memory_space<vmem>>, vector<8x128xf32>
    %2 = arith.addf %0, %1 : vector<8x128xf32>
    %c0_3 = arith.constant 0 : index
    %c0_4 = arith.constant 0 : index
    %3 = vector.load %arg3[%c0_3, %c0_4] : memref<8x128xf32, #tpu.memory_space<vmem>>, vector<8x128xf32>
    tpu.vector_store %arg3[%c0_3, %c0_4], %2 {strides = array<i32>} : memref<8x128xf32, #tpu.memory_space<vmem>>, vector<8x128xf32>,
    return
  }
  func.func @transform_0(%arg0: i32) -> (i32, i32) {
    %c0_i32 = arith.constant 0 : i32
    %c0_i32_0 = arith.constant 0 : i32
    %c0_i32_1 = arith.constant 0 : i32
    return %c0_i32, %c0_i32_0 : i32, i32
  }
  func.func @transform_1(%arg0: i32) -> (i32, i32) {
    %c0_i32 = arith.constant 0 : i32
    %c0_i32_0 = arith.constant 0 : i32
    %c0_i32_1 = arith.constant 0 : i32
    return %c0_i32, %c0_i32_0 : i32, i32
  }
  func.func @transform_2(%arg0: i32) -> (i32, i32) {
    %c0_i32 = arith.constant 0 : i32
    %c0_i32_0 = arith.constant 0 : i32
    %c0_i32_1 = arith.constant 0 : i32
    return %c0_i32, %c0_i32_0 : i32, i32
  }
}

module attributes {stable_mosaic.version = 11 : i64} {
  func.func @_mlp_kernel(%arg0: i32, %arg1: memref<16x256xbf16, #tpu.memory_space<vmem>>, %arg2: memref<256x896xbf16, #tpu.memory_space<vmem>>, %arg3: memref<1x896xf32, #tpu.memory_space<vmem>>, %arg4: memref<896x896xbf16, #tpu.memory_space<vmem>>, %arg5: memref<1x896xf32, #tpu.memory_space<vmem>>, %arg6: memref<896x128xbf16, #tpu.memory_space<vmem>>, %arg7: memref<1x128xf32, #tpu.memory_space<vmem>>, %arg8: memref<16x128xf32, #tpu.memory_space<vmem>>) attributes {dimension_semantics = [#tpu.dimension_semantics<parallel>], iteration_bounds = array<i64: 1>, scalar_prefetch = 0 : i64, scratch_operands = 0 : i64, tpu.core_type = #tpu.core_type<tc>, window_params = [{transform_indices = @transform_0, window_bounds = array<i64: 16, 256>}, {pipeline_mode = #tpu.pipeline_mode<synchronous>, transform_indices = @transform_1, window_bounds = array<i64: 256, 896>}, {pipeline_mode = #tpu.pipeline_mode<synchronous>, transform_indices = @transform_2, window_bounds = array<i64: 1, 896>}, {pipeline_mode = #tpu.pipeline_mode<synchronous>, transform_indices = @transform_3, window_bounds = array<i64: 896, 896>}, {pipeline_mode = #tpu.pipeline_mode<synchronous>, transform_indices = @transform_4, window_bounds = array<i64: 1, 896>}, {pipeline_mode = #tpu.pipeline_mode<synchronous>, transform_indices = @transform_5, window_bounds = array<i64: 896, 128>}, {pipeline_mode = #tpu.pipeline_mode<synchronous>, transform_indices = @transform_6, window_bounds = array<i64: 1, 128>}, {transform_indices = @transform_7, window_bounds = array<i64: 16, 128>}]} {
    %c0 = arith.constant 0 : index
    %c0_0 = arith.constant 0 : index
    %0 = vector.load %arg1[%c0, %c0_0] : memref<16x256xbf16, #tpu.memory_space<vmem>>, vector<16x256xbf16>
    %c0_1 = arith.constant 0 : index
    %c0_2 = arith.constant 0 : index
    %1 = vector.load %arg2[%c0_1, %c0_2] : memref<256x896xbf16, #tpu.memory_space<vmem>>, vector<256x896xbf16>
    %cst = arith.constant dense<0.000000e+00> : vector<16x896xf32>
    %2 = tpu.matmul %0, %1, %cst {dimension_numbers = #tpu.dot_dimension_numbers<[1], [0], [0], [1], [0, 0, 1, 1], [], []>} : vector<16x256xbf16>, vector<256x896xbf16>, vector<16x896xf32> -> vector<16x896xf32>
    %c0_3 = arith.constant 0 : index
    %c0_4 = arith.constant 0 : index
    %3 = vector.load %arg3[%c0_3, %c0_4] : memref<1x896xf32, #tpu.memory_space<vmem>>, vector<1x896xf32>
    %4 = vector.broadcast %3 : vector<1x896xf32> to vector<16x896xf32>
    %5 = arith.addf %2, %4 : vector<16x896xf32>
    %cst_5 = arith.constant 0.000000e+00 : f32
    %6 = vector.broadcast %cst_5 : f32 to vector<16x896xf32>
    %7 = arith.maximumf %5, %6 : vector<16x896xf32>
    %8 = arith.truncf %7 : vector<16x896xf32> to vector<16x896xbf16>
    %c0_6 = arith.constant 0 : index
    %c0_7 = arith.constant 0 : index
    %9 = vector.load %arg4[%c0_6, %c0_7] : memref<896x896xbf16, #tpu.memory_space<vmem>>, vector<896x896xbf16>
    %cst_8 = arith.constant dense<0.000000e+00> : vector<16x896xf32>
    %10 = tpu.matmul %8, %9, %cst_8 {dimension_numbers = #tpu.dot_dimension_numbers<[1], [0], [0], [1], [0, 0, 1, 1], [], []>} : vector<16x896xbf16>, vector<896x896xbf16>, vector<16x896xf32> -> vector<16x896xf32>
    %c0_9 = arith.constant 0 : index
    %c0_10 = arith.constant 0 : index
    %11 = vector.load %arg5[%c0_9, %c0_10] : memref<1x896xf32, #tpu.memory_space<vmem>>, vector<1x896xf32>
    %12 = vector.broadcast %11 : vector<1x896xf32> to vector<16x896xf32>
    %13 = arith.addf %10, %12 : vector<16x896xf32>
    %cst_11 = arith.constant 0.000000e+00 : f32
    %14 = vector.broadcast %cst_11 : f32 to vector<16x896xf32>
    %15 = arith.maximumf %13, %14 : vector<16x896xf32>
    %16 = arith.truncf %15 : vector<16x896xf32> to vector<16x896xbf16>
    %c0_12 = arith.constant 0 : index
    %c0_13 = arith.constant 0 : index
    %17 = vector.load %arg6[%c0_12, %c0_13] : memref<896x128xbf16, #tpu.memory_space<vmem>>, vector<896x128xbf16>
    %cst_14 = arith.constant dense<0.000000e+00> : vector<16x128xf32>
    %18 = tpu.matmul %16, %17, %cst_14 {dimension_numbers = #tpu.dot_dimension_numbers<[1], [0], [0], [1], [0, 0, 1, 1], [], []>} : vector<16x896xbf16>, vector<896x128xbf16>, vector<16x128xf32> -> vector<16x128xf32>
    %c0_15 = arith.constant 0 : index
    %c0_16 = arith.constant 0 : index
    %19 = vector.load %arg7[%c0_15, %c0_16] : memref<1x128xf32, #tpu.memory_space<vmem>>, vector<1x128xf32>
    %20 = vector.broadcast %19 : vector<1x128xf32> to vector<16x128xf32>
    %21 = arith.addf %18, %20 : vector<16x128xf32>
    %c0_17 = arith.constant 0 : index
    %c0_18 = arith.constant 0 : index
    %22 = vector.load %arg8[%c0_17, %c0_18] : memref<16x128xf32, #tpu.memory_space<vmem>>, vector<16x128xf32>
    tpu.vector_store %arg8[%c0_17, %c0_18], %21 {strides = array<i32>} : memref<16x128xf32, #tpu.memory_space<vmem>>, vector<16x128xf32>,
    return
  }
  func.func @transform_0(%arg0: i32) -> (i32, i32) {
    %c0_i32 = arith.constant 0 : i32
    %c0_i32_0 = arith.constant 0 : i32
    return %arg0, %c0_i32 : i32, i32
  }
  func.func @transform_1(%arg0: i32) -> (i32, i32) {
    %c0_i32 = arith.constant 0 : i32
    %c0_i32_0 = arith.constant 0 : i32
    %c0_i32_1 = arith.constant 0 : i32
    return %c0_i32, %c0_i32_0 : i32, i32
  }
  func.func @transform_2(%arg0: i32) -> (i32, i32) {
    %c0_i32 = arith.constant 0 : i32
    %c0_i32_0 = arith.constant 0 : i32
    %c0_i32_1 = arith.constant 0 : i32
    return %c0_i32, %c0_i32_0 : i32, i32
  }
  func.func @transform_3(%arg0: i32) -> (i32, i32) {
    %c0_i32 = arith.constant 0 : i32
    %c0_i32_0 = arith.constant 0 : i32
    %c0_i32_1 = arith.constant 0 : i32
    return %c0_i32, %c0_i32_0 : i32, i32
  }
  func.func @transform_4(%arg0: i32) -> (i32, i32) {
    %c0_i32 = arith.constant 0 : i32
    %c0_i32_0 = arith.constant 0 : i32
    %c0_i32_1 = arith.constant 0 : i32
    return %c0_i32, %c0_i32_0 : i32, i32
  }
  func.func @transform_5(%arg0: i32) -> (i32, i32) {
    %c0_i32 = arith.constant 0 : i32
    %c0_i32_0 = arith.constant 0 : i32
    %c0_i32_1 = arith.constant 0 : i32
    return %c0_i32, %c0_i32_0 : i32, i32
  }
  func.func @transform_6(%arg0: i32) -> (i32, i32) {
    %c0_i32 = arith.constant 0 : i32
    %c0_i32_0 = arith.constant 0 : i32
    %c0_i32_1 = arith.constant 0 : i32
    return %c0_i32, %c0_i32_0 : i32, i32
  }
  func.func @transform_7(%arg0: i32) -> (i32, i32) {
    %c0_i32 = arith.constant 0 : i32
    %c0_i32_0 = arith.constant 0 : i32
    return %arg0, %c0_i32 : i32, i32
  }
}

</mosaic_0001>

<llo_original>
// kernel: tpu_custom_call.1
$region0: #{tpu_custom_call.1}
  #allocation0 [shape = 'u32[]', space=smem, size = 0x4, offset = 0x4, fixed_abs, tag = 'smem constant byte address 0x4 - core index']
  #allocation1 [shape = 'u32[144,128]{1,0:T(1,128)}', space=vmem, size = 0x12000, scoped, tag = 'internal scratch']
  %s0 = inlined_call_operand.hbm [shape: f32[8,128], index: 0, kind: input, shape index: {}]
  %s1 = inlined_call_operand.hbm [shape: f32[8,128], index: 1, kind: input, shape index: {}]
  %s2 = inlined_call_operand.hbm [shape: f32[8,128], index: 2, kind: output, shape index: {}]
  %s3 = sld [smem:[#allocation0]]
  $region26: #{tpu_custom_call.1} parent=0
    _
  %s5 = ssub.s32 1, %s3
  %s6 = scalar_select 0, %s5, %s3
  $region1: #{tpu_custom_call.1} parent=0
    #allocation2 [shape = 'u8[4096]{0}', space=vmem, size = 0x1000, scoped, tag = 'input window, operand 0, single buffered']
    #allocation3 [shape = 's32[1]{0}', space=sflag, size = 0x4, scoped, tag = 'scoped memory for tpu_custom_call.1']
    #allocation4 [shape = 's32[1]{0}', space=sflag, size = 0x4, scoped, tag = 'scoped memory for tpu_custom_call.1']
    #allocation5 [shape = 'u8[4096]{0}', space=vmem, size = 0x1000, scoped, tag = 'input window, operand 1, single buffered']
    #allocation6 [shape = 's32[1]{0}', space=sflag, size = 0x4, scoped, tag = 'scoped memory for tpu_custom_call.1']
    #allocation7 [shape = 'u8[4096]{0}', space=vmem, size = 0x1000, scoped, tag = 'output window, operand 0, single buffered']
    %7 = vsyncpa [#allocation3], 0
    %8 = vsyncpa [#allocation6], 0
    %9 = vsyncpa [#allocation4], 0
    // Predicated region
    $region2: #{tpu_custom_call.1} parent=1 // pred_check
      _
    $region3: #{tpu_custom_call.1} parent=1 // pred_check_branch
      %11 = sbr.rel (0) target = $region5
    $region4: #{tpu_custom_call.1} parent=1 // pred_region
      %s13 = ssub.s32 128, 128
      %14 = vsyncadd [#allocation3], %s13
      %s16 = sshll.u32 [#allocation2], 4
      %s17 = int_to_ptr.vmem [resolvable:$true] %s16
      %19 = dma.hbm_to_vmem [thread:$0]  %s0, 128, %s17, [#allocation3]
    $region5: #{tpu_custom_call.1} parent=1 // pred_fallthru
      _
    // Predicated region
    $region6: #{tpu_custom_call.1} parent=1 // pred_check
      _
    $region7: #{tpu_custom_call.1} parent=1 // pred_check_branch
      %21 = sbr.rel (0) target = $region9
    $region8: #{tpu_custom_call.1} parent=1 // pred_region
      %s23 = ssub.s32 128, 128
      %24 = vsyncadd [#allocation6], %s23
      %s26 = sshll.u32 [#allocation5], 4
      %s27 = int_to_ptr.vmem [resolvable:$true] %s26
      %29 = dma.hbm_to_vmem [thread:$0]  %s1, 128, %s27, [#allocation6]
    $region9: #{tpu_custom_call.1} parent=1 // pred_fallthru
      _
    // Predicated region
    $region10: #{tpu_custom_call.1} parent=1 // pred_check
      _
    $region11: #{tpu_custom_call.1} parent=1 // pred_check_branch
      %31 = sbr.rel (0) target = $region13
    $region12: #{tpu_custom_call.1} parent=1 // pred_region
      %32 = dma.done [#allocation3], 128
    $region13: #{tpu_custom_call.1} parent=1 // pred_fallthru
      _
    // Predicated region
    $region14: #{tpu_custom_call.1} parent=1 // pred_check
      _
    $region15: #{tpu_custom_call.1} parent=1 // pred_check_branch
      %34 = sbr.rel (0) target = $region17
    $region16: #{tpu_custom_call.1} parent=1 // pred_region
      %35 = dma.done [#allocation6], 128
    $region17: #{tpu_custom_call.1} parent=1 // pred_fallthru
      _
    %v36 = vld [vmem:[#allocation2] sm:$0xff]
    %v37 = vld [vmem:[#allocation5] sm:$0xff]
    %v38 = vadd.f32 %v36, %v37
    %39 = vst [vmem:[#allocation7] sm:$0xff] %v38
    // Predicated region
    $region18: #{tpu_custom_call.1} parent=1 // pred_check
      _
    $region19: #{tpu_custom_call.1} parent=1 // pred_check_branch
      %41 = sbr.rel (0) target = $region21
    $region20: #{tpu_custom_call.1} parent=1 // pred_region
      %s43 = ssub.s32 128, 128
      %44 = vsyncadd [#allocation4], %s43
      %s46 = sshll.u32 [#allocation7], 4
      %s47 = int_to_ptr.vmem [resolvable:$true] %s46
      %49 = dma.vmem_to_hbm [thread:$0]  %s47, 128, %s2, [#allocation4]
    $region21: #{tpu_custom_call.1} parent=1 // pred_fallthru
      _
    // Predicated region
    $region22: #{tpu_custom_call.1} parent=1 // pred_check
      _
    $region23: #{tpu_custom_call.1} parent=1 // pred_check_branch
      %51 = sbr.rel (0) target = $region25
    $region24: #{tpu_custom_call.1} parent=1 // pred_region
      %52 = dma.done [#allocation4], 128
    $region25: #{tpu_custom_call.1} parent=1 // pred_fallthru
      _
    %53 = vsyncpa [#allocation3], 1
    %54 = vsyncpa [#allocation6], 1
    %55 = vsyncpa [#allocation4], 1

// kernel: fwd.1
$region0: #{fwd.1}
  #allocation0 [shape = 'u32[]', space=smem, size = 0x4, offset = 0x4, fixed_abs, tag = 'smem constant byte address 0x4 - core index']
  #allocation1 [shape = 'u32[144,128]{1,0:T(1,128)}', space=vmem, size = 0x12000, scoped, tag = 'internal scratch']
  %s0 = inlined_call_operand.vmem [shape: bf16[8,256], index: 0, kind: input, shape index: {}]
  %s1 = inlined_call_operand.hbm [shape: bf16[256,896], index: 1, kind: input, shape index: {}]
  %s2 = inlined_call_operand.hbm [shape: f32[1,896], index: 2, kind: input, shape index: {}]
  %s3 = inlined_call_operand.hbm [shape: bf16[896,896], index: 3, kind: input, shape index: {}]
  %s4 = inlined_call_operand.hbm [shape: f32[1,896], index: 4, kind: input, shape index: {}]
  %s5 = inlined_call_operand.hbm [shape: bf16[896,128], index: 5, kind: input, shape index: {}]
  %s6 = inlined_call_operand.hbm [shape: f32[1,128], index: 6, kind: input, shape index: {}]
  %s7 = inlined_call_operand.hbm [shape: f32[8,128], index: 7, kind: output, shape index: {}]
  %s8 = sld [smem:[#allocation0]]
  $region62: #{fwd.1} parent=0
    _
  %s10 = ssub.s32 1, %s8
  %s11 = scalar_select 0, %s10, %s8
  $region1: #{fwd.1} parent=0
    #allocation2 [shape = 'u8[458752]{0}', space=vmem, size = 0x70000, scoped, tag = 'input window, operand 1, single buffered']
    #allocation3 [shape = 's32[1]{0}', space=sflag, size = 0x4, scoped, tag = 'scoped memory for fwd.1']
    #allocation4 [shape = 's32[1]{0}', space=sflag, size = 0x4, scoped, tag = 'scoped memory for fwd.1']
    #allocation5 [shape = 'u8[3584]{0}', space=vmem, size = 0x1000, scoped, tag = 'input window, operand 2, single buffered']
    #allocation6 [shape = 's32[1]{0}', space=sflag, size = 0x4, scoped, tag = 'scoped memory for fwd.1']
    #allocation7 [shape = 'u8[1605632]{0}', space=vmem, size = 0x188000, scoped, tag = 'input window, operand 3, single buffered']
    #allocation8 [shape = 'u8[3584]{0}', space=vmem, size = 0x1000, scoped, tag = 'input window, operand 4, single buffered']
    #allocation9 [shape = 's32[1]{0}', space=sflag, size = 0x4, scoped, tag = 'scoped memory for fwd.1']
    #allocation10 [shape = 'u8[229376]{0}', space=vmem, size = 0x38000, scoped, tag = 'input window, operand 5, single buffered']
    #allocation11 [shape = 'u8[512]{0}', space=vmem, size = 0x400, scoped, tag = 'input window, operand 6, single buffered']
    #allocation12 [shape = 's32[1]{0}', space=sflag, size = 0x4, scoped, tag = 'scoped memory for fwd.1']
    #allocation13 [shape = 'u8[8192]{0}', space=vmem, size = 0x2000, scoped, tag = 'output window, operand 0, single buffered']
    %12 = vsyncpa [#allocation3], 0
    %13 = vsyncpa [#allocation6], 0
    %14 = vsyncpa [#allocation9], 0
    %15 = vsyncpa [#allocation12], 0
    %16 = vsyncpa [#allocation4], 0
    // Predicated region
    $region2: #{fwd.1} parent=1 // pred_check
      _
    $region3: #{fwd.1} parent=1 // pred_check_branch
      %18 = sbr.rel (0) target = $region5
    $region4: #{fwd.1} parent=1 // pred_region
      _
    $region5: #{fwd.1} parent=1 // pred_fallthru
      _
    // Predicated region
    $region6: #{fwd.1} parent=1 // pred_check
      _
    $region7: #{fwd.1} parent=1 // pred_check_branch
      %20 = sbr.rel (0) target = $region9
    $region8: #{fwd.1} parent=1 // pred_region
      %s22 = ssub.s32 14336, 14336
      %23 = vsyncadd [#allocation3], %s22
      %s24 = sshll.u32 [#allocation2], 4
      %s25 = int_to_ptr.vmem [resolvable:$true] %s24
      %30 = dma.hbm_to_vmem [thread:$0]  %s1, 14336, %s25, [#allocation3], 448, 448, 28
    $region9: #{fwd.1} parent=1 // pred_fallthru
      _
    // Predicated region
    $region10: #{fwd.1} parent=1 // pred_check
      _
    $region11: #{fwd.1} parent=1 // pred_check_branch
      %32 = sbr.rel (0) target = $region13
    $region12: #{fwd.1} parent=1 // pred_region
      %s34 = ssub.s32 112, 112
      %35 = vsyncadd [#allocation6], %s34
      %s37 = sshll.u32 [#allocation5], 4
      %s38 = int_to_ptr.vmem [resolvable:$true] %s37
      %40 = dma.hbm_to_vmem [thread:$0]  %s2, 112, %s38, [#allocation6]
    $region13: #{fwd.1} parent=1 // pred_fallthru
      _
    // Predicated region
    $region14: #{fwd.1} parent=1 // pred_check
      _
    $region15: #{fwd.1} parent=1 // pred_check_branch
      %42 = sbr.rel (0) target = $region17
    $region16: #{fwd.1} parent=1 // pred_region
      %s44 = ssub.s32 50176, 50176
      %45 = vsyncadd [#allocation6], %s44
      %s46 = sshll.u32 [#allocation7], 4
      %s47 = int_to_ptr.vmem [resolvable:$true] %s46
      %52 = dma.hbm_to_vmem [thread:$0]  %s3, 50176, %s47, [#allocation6], 448, 448, 28
    $region17: #{fwd.1} parent=1 // pred_fallthru
      _
    // Predicated region
    $region18: #{fwd.1} parent=1 // pred_check
      _
    $region19: #{fwd.1} parent=1 // pred_check_branch
      %54 = sbr.rel (0) target = $region21
    $region20: #{fwd.1} parent=1 // pred_region
      %s56 = ssub.s32 112, 112
      %57 = vsyncadd [#allocation9], %s56
      %s59 = sshll.u32 [#allocation8], 4
      %s60 = int_to_ptr.vmem [resolvable:$true] %s59
      %62 = dma.hbm_to_vmem [thread:$0]  %s4, 112, %s60, [#allocation9]
    $region21: #{fwd.1} parent=1 // pred_fallthru
      _
    // Predicated region
    $region22: #{fwd.1} parent=1 // pred_check
      _
    $region23: #{fwd.1} parent=1 // pred_check_branch
      %64 = sbr.rel (0) target = $region25
    $region24: #{fwd.1} parent=1 // pred_region
      %s66 = ssub.s32 7168, 7168
      %67 = vsyncadd [#allocation9], %s66
      %s68 = sshll.u32 [#allocation10], 4
      %s69 = int_to_ptr.vmem [resolvable:$true] %s68
      %74 = dma.hbm_to_vmem [thread:$0]  %s5, 7168, %s69, [#allocation9], 64, 64, 4
    $region25: #{fwd.1} parent=1 // pred_fallthru
      _
    // Predicated region
    $region26: #{fwd.1} parent=1 // pred_check
      _
    $region27: #{fwd.1} parent=1 // pred_check_branch
      %76 = sbr.rel (0) target = $region29
    $region28: #{fwd.1} parent=1 // pred_region
      %s78 = ssub.s32 16, 16
      %79 = vsyncadd [#allocation12], %s78
      %s81 = sshll.u32 [#allocation11], 4
      %s82 = int_to_ptr.vmem [resolvable:$true] %s81
      %84 = dma.hbm_to_vmem [thread:$0]  %s6, 16, %s82, [#allocation12]
    $region29: #{fwd.1} parent=1 // pred_fallthru
      _
    // Predicated region
    $region30: #{fwd.1} parent=1 // pred_check
      _
    $region31: #{fwd.1} parent=1 // pred_check_branch
      %86 = sbr.rel (0) target = $region33
    $region32: #{fwd.1} parent=1 // pred_region
      %87 = dma.done [#allocation3], 14336
    $region33: #{fwd.1} parent=1 // pred_fallthru
      _
    // Predicated region
    $region34: #{fwd.1} parent=1 // pred_check
      _
    $region35: #{fwd.1} parent=1 // pred_check_branch
      %89 = sbr.rel (0) target = $region37
    $region36: #{fwd.1} parent=1 // pred_region
      %90 = dma.done [#allocation6], 112
    $region37: #{fwd.1} parent=1 // pred_fallthru
      _
    // Predicated region
    $region38: #{fwd.1} parent=1 // pred_check
      _
    $region39: #{fwd.1} parent=1 // pred_check_branch
      %92 = sbr.rel (0) target = $region41
    $region40: #{fwd.1} parent=1 // pred_region
      %93 = dma.done [#allocation6], 50176
    $region41: #{fwd.1} parent=1 // pred_fallthru
      _
    // Predicated region
    $region42: #{fwd.1} parent=1 // pred_check
      _
    $region43: #{fwd.1} parent=1 // pred_check_branch
      %95 = sbr.rel (0) target = $region45
    $region44: #{fwd.1} parent=1 // pred_region
      %96 = dma.done [#allocation9], 112
    $region45: #{fwd.1} parent=1 // pred_fallthru
      _
    // Predicated region
    $region46: #{fwd.1} parent=1 // pred_check
      _
    $region47: #{fwd.1} parent=1 // pred_check_branch
      %98 = sbr.rel (0) target = $region49
    $region48: #{fwd.1} parent=1 // pred_region
      %99 = dma.done [#allocation9], 7168
    $region49: #{fwd.1} parent=1 // pred_fallthru
      _
    // Predicated region
    $region50: #{fwd.1} parent=1 // pred_check
      _
    $region51: #{fwd.1} parent=1 // pred_check_branch
      %101 = sbr.rel (0) target = $region53
    $region52: #{fwd.1} parent=1 // pred_region
      %102 = dma.done [#allocation12], 16
    $region53: #{fwd.1} parent=1 // pred_fallthru
      _
    %v104 = vld [vmem:[%s0] sm:$0xff]
    %v105 = vld [vmem:[%s0 + $0x8] sm:$0xff]
    %v106 = vld [vmem:[#allocation2] sm:$0xff]
    %v107 = vld [vmem:[#allocation2 + $0x8] sm:$0xff]
    %v108 = vld [vmem:[#allocation2 + $0x10] sm:$0xff]
    %v109 = vld [vmem:[#allocation2 + $0x18] sm:$0xf]
    %v110 = vld [vmem:[#allocation2 + $0x1c] sm:$0xff]
    %v111 = vld [vmem:[#allocation2 + $0x24] sm:$0xff]
    %v112 = vld [vmem:[#allocation2 + $0x2c] sm:$0xff]
    %v113 = vld [vmem:[#allocation2 + $0x34] sm:$0xf]
    %v114 = vld [vmem:[#allocation2 + $0x38] sm:$0xff]
    %v115 = vld [vmem:[#allocation2 + $0x40] sm:$0xff]
    %v116 = vld [vmem:[#allocation2 + $0x48] sm:$0xff]
    %v117 = vld [vmem:[#allocation2 + $0x50] sm:$0xf]
    %v118 = vld [vmem:[#allocation2 + $0x54] sm:$0xff]
    %v119 = vld [vmem:[#allocation2 + $0x5c] sm:$0xff]
    %v120 = vld [vmem:[#allocation2 + $0x64] sm:$0xff]
    %v121 = vld [vmem:[#allocation2 + $0x6c] sm:$0xf]
    %v122 = vld [vmem:[#allocation2 + $0x70] sm:$0xff]
    %v123 = vld [vmem:[#allocation2 + $0x78] sm:$0xff]
    %v124 = vld [vmem:[#allocation2 + $0x80] sm:$0xff]
    %v125 = vld [vmem:[#allocation2 + $0x88] sm:$0xf]
    %v126 = vld [vmem:[#allocation2 + $0x8c] sm:$0xff]
    %v127 = vld [vmem:[#allocation2 + $0x94] sm:$0xff]
    %v128 = vld [vmem:[#allocation2 + $0x9c] sm:$0xff]
    %v129 = vld [vmem:[#allocation2 + $0xa4] sm:$0xf]
    %v130 = vld [vmem:[#allocation2 + $0xa8] sm:$0xff]
    %v131 = vld [vmem:[#allocation2 + $0xb0] sm:$0xff]
    %v132 = vld [vmem:[#allocation2 + $0xb8] sm:$0xff]
    %v133 = vld [vmem:[#allocation2 + $0xc0] sm:$0xf]
    %v134 = vld [vmem:[#allocation2 + $0xc4] sm:$0xff]
    %v135 = vld [vmem:[#allocation2 + $0xcc] sm:$0xff]
    %v136 = vld [vmem:[#allocation2 + $0xd4] sm:$0xff]
    %v137 = vld [vmem:[#allocation2 + $0xdc] sm:$0xf]
    %v138 = vld [vmem:[#allocation2 + $0xe0] sm:$0xff]
    %v139 = vld [vmem:[#allocation2 + $0xe8] sm:$0xff]
    %v140 = vld [vmem:[#allocation2 + $0xf0] sm:$0xff]
    %v141 = vld [vmem:[#allocation2 + $0xf8] sm:$0xf]
    %v142 = vld [vmem:[#allocation2 + $0xfc] sm:$0xff]
    %v143 = vld [vmem:[#allocation2 + $0x104] sm:$0xff]
    %v144 = vld [vmem:[#allocation2 + $0x10c] sm:$0xff]
    %v145 = vld [vmem:[#allocation2 + $0x114] sm:$0xf]
    %v146 = vld [vmem:[#allocation2 + $0x118] sm:$0xff]
    %v147 = vld [vmem:[#allocation2 + $0x120] sm:$0xff]
    %v148 = vld [vmem:[#allocation2 + $0x128] sm:$0xff]
    %v149 = vld [vmem:[#allocation2 + $0x130] sm:$0xf]
    %v150 = vld [vmem:[#allocation2 + $0x134] sm:$0xff]
    %v151 = vld [vmem:[#allocation2 + $0x13c] sm:$0xff]
    %v152 = vld [vmem:[#allocation2 + $0x144] sm:$0xff]
    %v153 = vld [vmem:[#allocation2 + $0x14c] sm:$0xf]
    %v154 = vld [vmem:[#allocation2 + $0x150] sm:$0xff]
    %v155 = vld [vmem:[#allocation2 + $0x158] sm:$0xff]
    %v156 = vld [vmem:[#allocation2 + $0x160] sm:$0xff]
    %v157 = vld [vmem:[#allocation2 + $0x168] sm:$0xf]
    %v158 = vld [vmem:[#allocation2 + $0x16c] sm:$0xff]
    %v159 = vld [vmem:[#allocation2 + $0x174] sm:$0xff]
    %v160 = vld [vmem:[#allocation2 + $0x17c] sm:$0xff]
    %v161 = vld [vmem:[#allocation2 + $0x184] sm:$0xf]
    %v162 = vld [vmem:[#allocation2 + $0x188] sm:$0xff]
    %v163 = vld [vmem:[#allocation2 + $0x190] sm:$0xff]
    %v164 = vld [vmem:[#allocation2 + $0x198] sm:$0xff]
    %v165 = vld [vmem:[#allocation2 + $0x1a0] sm:$0xf]
    %v166 = vld [vmem:[#allocation2 + $0x1a4] sm:$0xff]
    %v167 = vld [vmem:[#allocation2 + $0x1ac] sm:$0xff]
    %v168 = vld [vmem:[#allocation2 + $0x1b4] sm:$0xff]
    %v169 = vld [vmem:[#allocation2 + $0x1bc] sm:$0xf]
    %v170 = vld [vmem:[#allocation2 + $0x1c0] sm:$0xff]
    %v171 = vld [vmem:[#allocation2 + $0x1c8] sm:$0xff]
    %v172 = vld [vmem:[#allocation2 + $0x1d0] sm:$0xff]
    %v173 = vld [vmem:[#allocation2 + $0x1d8] sm:$0xf]
    %v174 = vld [vmem:[#allocation2 + $0x1dc] sm:$0xff]
    %v175 = vld [vmem:[#allocation2 + $0x1e4] sm:$0xff]
    %v176 = vld [vmem:[#allocation2 + $0x1ec] sm:$0xff]
    %v177 = vld [vmem:[#allocation2 + $0x1f4] sm:$0xf]
    %v178 = vld [vmem:[#allocation2 + $0x1f8] sm:$0xff]
    %v179 = vld [vmem:[#allocation2 + $0x200] sm:$0xff]
    %v180 = vld [vmem:[#allocation2 + $0x208] sm:$0xff]
    %v181 = vld [vmem:[#allocation2 + $0x210] sm:$0xf]
    %v182 = vld [vmem:[#allocation2 + $0x214] sm:$0xff]
    %v183 = vld [vmem:[#allocation2 + $0x21c] sm:$0xff]
    %v184 = vld [vmem:[#allocation2 + $0x224] sm:$0xff]
    %v185 = vld [vmem:[#allocation2 + $0x22c] sm:$0xf]
    %v186 = vld [vmem:[#allocation2 + $0x230] sm:$0xff]
    %v187 = vld [vmem:[#allocation2 + $0x238] sm:$0xff]
    %v188 = vld [vmem:[#allocation2 + $0x240] sm:$0xff]
    %v189 = vld [vmem:[#allocation2 + $0x248] sm:$0xf]
    %v190 = vld [vmem:[#allocation2 + $0x24c] sm:$0xff]
    %v191 = vld [vmem:[#allocation2 + $0x254] sm:$0xff]
    %v192 = vld [vmem:[#allocation2 + $0x25c] sm:$0xff]
    %v193 = vld [vmem:[#allocation2 + $0x264] sm:$0xf]
    %v194 = vld [vmem:[#allocation2 + $0x268] sm:$0xff]
    %v195 = vld [vmem:[#allocation2 + $0x270] sm:$0xff]
    %v196 = vld [vmem:[#allocation2 + $0x278] sm:$0xff]
    %v197 = vld [vmem:[#allocation2 + $0x280] sm:$0xf]
    %v198 = vld [vmem:[#allocation2 + $0x284] sm:$0xff]
    %v199 = vld [vmem:[#allocation2 + $0x28c] sm:$0xff]
    %v200 = vld [vmem:[#allocation2 + $0x294] sm:$0xff]
    %v201 = vld [vmem:[#allocation2 + $0x29c] sm:$0xf]
    %v202 = vld [vmem:[#allocation2 + $0x2a0] sm:$0xff]
    %v203 = vld [vmem:[#allocation2 + $0x2a8] sm:$0xff]
    %v204 = vld [vmem:[#allocation2 + $0x2b0] sm:$0xff]
    %v205 = vld [vmem:[#allocation2 + $0x2b8] sm:$0xf]
    %v206 = vld [vmem:[#allocation2 + $0x2bc] sm:$0xff]
    %v207 = vld [vmem:[#allocation2 + $0x2c4] sm:$0xff]
    %v208 = vld [vmem:[#allocation2 + $0x2cc] sm:$0xff]
    %v209 = vld [vmem:[#allocation2 + $0x2d4] sm:$0xf]
    %v210 = vld [vmem:[#allocation2 + $0x2d8] sm:$0xff]
    %v211 = vld [vmem:[#allocation2 + $0x2e0] sm:$0xff]
    %v212 = vld [vmem:[#allocation2 + $0x2e8] sm:$0xff]
    %v213 = vld [vmem:[#allocation2 + $0x2f0] sm:$0xf]
    %v214 = vld [vmem:[#allocation2 + $0x2f4] sm:$0xff]
    %v215 = vld [vmem:[#allocation2 + $0x2fc] sm:$0xff]
    %v216 = vld [vmem:[#allocation2 + $0x304] sm:$0xff]
    %v217 = vld [vmem:[#allocation2 + $0x30c] sm:$0xf]
    %v218 = vld [vmem:[#allocation2 + $0x310] sm:$0xff]
    %v219 = vld [vmem:[#allocation2 + $0x318] sm:$0xff]
    %v220 = vld [vmem:[#allocation2 + $0x320] sm:$0xff]
    %v221 = vld [vmem:[#allocation2 + $0x328] sm:$0xf]
    %v222 = vld [vmem:[#allocation2 + $0x32c] sm:$0xff]
    %v223 = vld [vmem:[#allocation2 + $0x334] sm:$0xff]
    %v224 = vld [vmem:[#allocation2 + $0x33c] sm:$0xff]
    %v225 = vld [vmem:[#allocation2 + $0x344] sm:$0xf]
    %v226 = vld [vmem:[#allocation2 + $0x348] sm:$0xff]
    %v227 = vld [vmem:[#allocation2 + $0x350] sm:$0xff]
    %v228 = vld [vmem:[#allocation2 + $0x358] sm:$0xff]
    %v229 = vld [vmem:[#allocation2 + $0x360] sm:$0xf]
    %v230 = vld [vmem:[#allocation2 + $0x364] sm:$0xff]
    %v231 = vld [vmem:[#allocation2 + $0x36c] sm:$0xff]
    %v232 = vld [vmem:[#allocation2 + $0x374] sm:$0xff]
    %v233 = vld [vmem:[#allocation2 + $0x37c] sm:$0xf]
    %v234 = vld [vmem:[#allocation5] sm:$0xff]
    %v236 = vlaneseq
    %v237 = vshrl.u32 %v236, 7
    %v238 = vsub.s32 0, %v237
    %v239 = vrot.slane %v234, %v238
    %v240 = vlaneseq
    %v241 = vshrl.u32 %v240, 7
    %v242 = vsub.s32 1, %v241
    %v243 = vrot.slane %v234, %v242
    %v244 = vlaneseq
    %v245 = vshrl.u32 %v244, 7
    %v246 = vsub.s32 2, %v245
    %v247 = vrot.slane %v234, %v246
    %v248 = vlaneseq
    %v249 = vshrl.u32 %v248, 7
    %v250 = vsub.s32 3, %v249
    %v251 = vrot.slane %v234, %v250
    %v252 = vlaneseq
    %v253 = vshrl.u32 %v252, 7
    %v254 = vsub.s32 4, %v253
    %v255 = vrot.slane %v234, %v254
    %v256 = vlaneseq
    %v257 = vshrl.u32 %v256, 7
    %v258 = vsub.s32 5, %v257
    %v259 = vrot.slane %v234, %v258
    %v260 = vlaneseq
    %v261 = vshrl.u32 %v260, 7
    %v262 = vsub.s32 6, %v261
    %v263 = vrot.slane %v234, %v262
    %v273 = vunpack.c.l.b16 %v104
    %v274 = vunpack.c.h.b16 %v104
    %v275 = vunpack.c.l.b16 %v105
    %v276 = vunpack.c.h.b16 %v105
    %v277 = vpack.c.b16 %v275, %v273
    %v278 = vpack.c.b16 %v276, %v274
    %v409 = vunpack.c.l.b16 %v106
    %v410 = vunpack.c.h.b16 %v106
    %v411 = vunpack.c.l.b16 %v107
    %v412 = vunpack.c.h.b16 %v107
    %v413 = vunpack.c.l.b16 %v108
    %v414 = vunpack.c.h.b16 %v108
    %v415 = vunpack.c.l.b16 %v109
    %v416 = vunpack.c.l.b16 %v110
    %v417 = vunpack.c.h.b16 %v110
    %v418 = vunpack.c.l.b16 %v111
    %v419 = vunpack.c.h.b16 %v111
    %v420 = vunpack.c.l.b16 %v112
    %v421 = vunpack.c.h.b16 %v112
    %v422 = vunpack.c.l.b16 %v113
    %v423 = vunpack.c.l.b16 %v114
    %v424 = vunpack.c.h.b16 %v114
    %v425 = vunpack.c.l.b16 %v115
    %v426 = vunpack.c.h.b16 %v115
    %v427 = vunpack.c.l.b16 %v116
    %v428 = vunpack.c.h.b16 %v116
    %v429 = vunpack.c.l.b16 %v117
    %v430 = vunpack.c.l.b16 %v118
    %v431 = vunpack.c.h.b16 %v118
    %v432 = vunpack.c.l.b16 %v119
    %v433 = vunpack.c.h.b16 %v119
    %v434 = vunpack.c.l.b16 %v120
    %v435 = vunpack.c.h.b16 %v120
    %v436 = vunpack.c.l.b16 %v121
    %v437 = vunpack.c.l.b16 %v122
    %v438 = vunpack.c.h.b16 %v122
    %v439 = vunpack.c.l.b16 %v123
    %v440 = vunpack.c.h.b16 %v123
    %v441 = vunpack.c.l.b16 %v124
    %v442 = vunpack.c.h.b16 %v124
    %v443 = vunpack.c.l.b16 %v125
    %v444 = vunpack.c.l.b16 %v126
    %v445 = vunpack.c.h.b16 %v126
    %v446 = vunpack.c.l.b16 %v127
    %v447 = vunpack.c.h.b16 %v127
    %v448 = vunpack.c.l.b16 %v128
    %v449 = vunpack.c.h.b16 %v128
    %v450 = vunpack.c.l.b16 %v129
    %v451 = vunpack.c.l.b16 %v130
    %v452 = vunpack.c.h.b16 %v130
    %v453 = vunpack.c.l.b16 %v131
    %v454 = vunpack.c.h.b16 %v131
    %v455 = vunpack.c.l.b16 %v132
    %v456 = vunpack.c.h.b16 %v132
    %v457 = vunpack.c.l.b16 %v133
    %v458 = vunpack.c.l.b16 %v134
    %v459 = vunpack.c.h.b16 %v134
    %v460 = vunpack.c.l.b16 %v135
    %v461 = vunpack.c.h.b16 %v135
    %v462 = vunpack.c.l.b16 %v136
    %v463 = vunpack.c.h.b16 %v136
    %v464 = vunpack.c.l.b16 %v137
    %v465 = vunpack.c.l.b16 %v138
    %v466 = vunpack.c.h.b16 %v138
    %v467 = vunpack.c.l.b16 %v139
    %v468 = vunpack.c.h.b16 %v139
    %v469 = vunpack.c.l.b16 %v140
    %v470 = vunpack.c.h.b16 %v140
    %v471 = vunpack.c.l.b16 %v141
    %v472 = vunpack.c.l.b16 %v142
    %v473 = vunpack.c.h.b16 %v142
    %v474 = vunpack.c.l.b16 %v143
    %v475 = vunpack.c.h.b16 %v143
    %v476 = vunpack.c.l.b16 %v144
    %v477 = vunpack.c.h.b16 %v144
    %v478 = vunpack.c.l.b16 %v145
    %v479 = vunpack.c.l.b16 %v146
    %v480 = vunpack.c.h.b16 %v146
    %v481 = vunpack.c.l.b16 %v147
    %v482 = vunpack.c.h.b16 %v147
    %v483 = vunpack.c.l.b16 %v148
    %v484 = vunpack.c.h.b16 %v148
    %v485 = vunpack.c.l.b16 %v149
    %v486 = vunpack.c.l.b16 %v150
    %v487 = vunpack.c.h.b16 %v150
    %v488 = vunpack.c.l.b16 %v151
    %v489 = vunpack.c.h.b16 %v151
    %v490 = vunpack.c.l.b16 %v152
    %v491 = vunpack.c.h.b16 %v152
    %v492 = vunpack.c.l.b16 %v153
    %v493 = vunpack.c.l.b16 %v154
    %v494 = vunpack.c.h.b16 %v154
    %v495 = vunpack.c.l.b16 %v155
    %v496 = vunpack.c.h.b16 %v155
    %v497 = vunpack.c.l.b16 %v156
    %v498 = vunpack.c.h.b16 %v156
    %v499 = vunpack.c.l.b16 %v157
    %v500 = vunpack.c.l.b16 %v158
    %v501 = vunpack.c.h.b16 %v158
    %v502 = vunpack.c.l.b16 %v159
    %v503 = vunpack.c.h.b16 %v159
    %v504 = vunpack.c.l.b16 %v160
    %v505 = vunpack.c.h.b16 %v160
    %v506 = vunpack.c.l.b16 %v161
    %v507 = vunpack.c.l.b16 %v162
    %v508 = vunpack.c.h.b16 %v162
    %v509 = vunpack.c.l.b16 %v163
    %v510 = vunpack.c.h.b16 %v163
    %v511 = vunpack.c.l.b16 %v164
    %v512 = vunpack.c.h.b16 %v164
    %v513 = vunpack.c.l.b16 %v165
    %v514 = vunpack.c.l.b16 %v166
    %v515 = vunpack.c.h.b16 %v166
    %v516 = vunpack.c.l.b16 %v167
    %v517 = vunpack.c.h.b16 %v167
    %v518 = vunpack.c.l.b16 %v168
    %v519 = vunpack.c.h.b16 %v168
    %v520 = vunpack.c.l.b16 %v169
    %v521 = vunpack.c.l.b16 %v170
    %v522 = vunpack.c.h.b16 %v170
    %v523 = vunpack.c.l.b16 %v171
    %v524 = vunpack.c.h.b16 %v171
    %v525 = vunpack.c.l.b16 %v172
    %v526 = vunpack.c.h.b16 %v172
    %v527 = vunpack.c.l.b16 %v173
    %v528 = vunpack.c.l.b16 %v174
    %v529 = vunpack.c.h.b16 %v174
    %v530 = vunpack.c.l.b16 %v175
    %v531 = vunpack.c.h.b16 %v175
    %v532 = vunpack.c.l.b16 %v176
    %v533 = vunpack.c.h.b16 %v176
    %v534 = vunpack.c.l.b16 %v177
    %v535 = vunpack.c.l.b16 %v178
    %v536 = vunpack.c.h.b16 %v178
    %v537 = vunpack.c.l.b16 %v179
    %v538 = vunpack.c.h.b16 %v179
    %v539 = vunpack.c.l.b16 %v180
    %v540 = vunpack.c.h.b16 %v180
    %v541 = vunpack.c.l.b16 %v181
    %v542 = vunpack.c.l.b16 %v182
    %v543 = vunpack.c.h.b16 %v182
    %v544 = vunpack.c.l.b16 %v183
    %v545 = vunpack.c.h.b16 %v183
    %v546 = vunpack.c.l.b16 %v184
    %v547 = vunpack.c.h.b16 %v184
    %v548 = vunpack.c.l.b16 %v185
    %v549 = vunpack.c.l.b16 %v186
    %v550 = vunpack.c.h.b16 %v186
    %v551 = vunpack.c.l.b16 %v187
    %v552 = vunpack.c.h.b16 %v187
    %v553 = vunpack.c.l.b16 %v188
    %v554 = vunpack.c.h.b16 %v188
    %v555 = vunpack.c.l.b16 %v189
    %v556 = vunpack.c.l.b16 %v190
    %v557 = vunpack.c.h.b16 %v190
    %v558 = vunpack.c.l.b16 %v191
    %v559 = vunpack.c.h.b16 %v191
    %v560 = vunpack.c.l.b16 %v192
    %v561 = vunpack.c.h.b16 %v192
    %v562 = vunpack.c.l.b16 %v193
    %v563 = vunpack.c.l.b16 %v194
    %v564 = vunpack.c.h.b16 %v194
    %v565 = vunpack.c.l.b16 %v195
    %v566 = vunpack.c.h.b16 %v195
    %v567 = vunpack.c.l.b16 %v196
    %v568 = vunpack.c.h.b16 %v196
    %v569 = vunpack.c.l.b16 %v197
    %v570 = vunpack.c.l.b16 %v198
    %v571 = vunpack.c.h.b16 %v198
    %v572 = vunpack.c.l.b16 %v199
    %v573 = vunpack.c.h.b16 %v199
    %v574 = vunpack.c.l.b16 %v200
    %v575 = vunpack.c.h.b16 %v200
    %v576 = vunpack.c.l.b16 %v201
    %v577 = vunpack.c.l.b16 %v202
    %v578 = vunpack.c.h.b16 %v202
    %v579 = vunpack.c.l.b16 %v203
    %v580 = vunpack.c.h.b16 %v203
    %v581 = vunpack.c.l.b16 %v204
    %v582 = vunpack.c.h.b16 %v204
    %v583 = vunpack.c.l.b16 %v205
    %v584 = vunpack.c.l.b16 %v206
    %v585 = vunpack.c.h.b16 %v206
    %v586 = vunpack.c.l.b16 %v207
    %v587 = vunpack.c.h.b16 %v207
    %v588 = vunpack.c.l.b16 %v208
    %v589 = vunpack.c.h.b16 %v208
    %v590 = vunpack.c.l.b16 %v209
    %v591 = vunpack.c.l.b16 %v210
    %v592 = vunpack.c.h.b16 %v210
    %v593 = vunpack.c.l.b16 %v211
    %v594 = vunpack.c.h.b16 %v211
    %v595 = vunpack.c.l.b16 %v212
    %v596 = vunpack.c.h.b16 %v212
    %v597 = vunpack.c.l.b16 %v213
    %v598 = vunpack.c.l.b16 %v214
    %v599 = vunpack.c.h.b16 %v214
    %v600 = vunpack.c.l.b16 %v215
    %v601 = vunpack.c.h.b16 %v215
    %v602 = vunpack.c.l.b16 %v216
    %v603 = vunpack.c.h.b16 %v216
    %v604 = vunpack.c.l.b16 %v217
    %v605 = vunpack.c.l.b16 %v218
    %v606 = vunpack.c.h.b16 %v218
    %v607 = vunpack.c.l.b16 %v219
    %v608 = vunpack.c.h.b16 %v219
    %v609 = vunpack.c.l.b16 %v220
    %v610 = vunpack.c.h.b16 %v220
    %v611 = vunpack.c.l.b16 %v221
    %v612 = vunpack.c.l.b16 %v222
    %v613 = vunpack.c.h.b16 %v222
    %v614 = vunpack.c.l.b16 %v223
    %v615 = vunpack.c.h.b16 %v223
    %v616 = vunpack.c.l.b16 %v224
    %v617 = vunpack.c.h.b16 %v224
    %v618 = vunpack.c.l.b16 %v225
    %v619 = vunpack.c.l.b16 %v226
    %v620 = vunpack.c.h.b16 %v226
    %v621 = vunpack.c.l.b16 %v227
    %v622 = vunpack.c.h.b16 %v227
    %v623 = vunpack.c.l.b16 %v228
    %v624 = vunpack.c.h.b16 %v228
    %v625 = vunpack.c.l.b16 %v229
    %v626 = vunpack.c.l.b16 %v230
    %v627 = vunpack.c.h.b16 %v230
    %v628 = vunpack.c.l.b16 %v231
    %v629 = vunpack.c.h.b16 %v231
    %v630 = vunpack.c.l.b16 %v232
    %v631 = vunpack.c.h.b16 %v232
    %v632 = vunpack.c.l.b16 %v233
    %v633 = vpack.c.b16 %v416, %v409
    %v634 = vpack.c.b16 %v417, %v410
    %v635 = vpack.c.b16 %v418, %v411
    %v636 = vpack.c.b16 %v419, %v412
    %v637 = vpack.c.b16 %v420, %v413
    %v638 = vpack.c.b16 %v421, %v414
    %v639 = vpack.c.b16 %v422, %v415
    %v640 = vpack.c.b16 %v430, %v423
    %v641 = vpack.c.b16 %v431, %v424
    %v642 = vpack.c.b16 %v432, %v425
    %v643 = vpack.c.b16 %v433, %v426
    %v644 = vpack.c.b16 %v434, %v427
    %v645 = vpack.c.b16 %v435, %v428
    %v646 = vpack.c.b16 %v436, %v429
    %v647 = vpack.c.b16 %v444, %v437
    %v648 = vpack.c.b16 %v445, %v438
    %v649 = vpack.c.b16 %v446, %v439
    %v650 = vpack.c.b16 %v447, %v440
    %v651 = vpack.c.b16 %v448, %v441
    %v652 = vpack.c.b16 %v449, %v442
    %v653 = vpack.c.b16 %v450, %v443
    %v654 = vpack.c.b16 %v458, %v451
    %v655 = vpack.c.b16 %v459, %v452
    %v656 = vpack.c.b16 %v460, %v453
    %v657 = vpack.c.b16 %v461, %v454
    %v658 = vpack.c.b16 %v462, %v455
    %v659 = vpack.c.b16 %v463, %v456
    %v660 = vpack.c.b16 %v464, %v457
    %v661 = vpack.c.b16 %v472, %v465
    %v662 = vpack.c.b16 %v473, %v466
    %v663 = vpack.c.b16 %v474, %v467
    %v664 = vpack.c.b16 %v475, %v468
    %v665 = vpack.c.b16 %v476, %v469
    %v666 = vpack.c.b16 %v477, %v470
    %v667 = vpack.c.b16 %v478, %v471
    %v668 = vpack.c.b16 %v486, %v479
    %v669 = vpack.c.b16 %v487, %v480
    %v670 = vpack.c.b16 %v488, %v481
    %v671 = vpack.c.b16 %v489, %v482
    %v672 = vpack.c.b16 %v490, %v483
    %v673 = vpack.c.b16 %v491, %v484
    %v674 = vpack.c.b16 %v492, %v485
    %v675 = vpack.c.b16 %v500, %v493
    %v676 = vpack.c.b16 %v501, %v494
    %v677 = vpack.c.b16 %v502, %v495
    %v678 = vpack.c.b16 %v503, %v496
    %v679 = vpack.c.b16 %v504, %v497
    %v680 = vpack.c.b16 %v505, %v498
    %v681 = vpack.c.b16 %v506, %v499
    %v682 = vpack.c.b16 %v514, %v507
    %v683 = vpack.c.b16 %v515, %v508
    %v684 = vpack.c.b16 %v516, %v509
    %v685 = vpack.c.b16 %v517, %v510
    %v686 = vpack.c.b16 %v518, %v511
    %v687 = vpack.c.b16 %v519, %v512
    %v688 = vpack.c.b16 %v520, %v513
    %v689 = vpack.c.b16 %v528, %v521
    %v690 = vpack.c.b16 %v529, %v522
    %v691 = vpack.c.b16 %v530, %v523
    %v692 = vpack.c.b16 %v531, %v524
    %v693 = vpack.c.b16 %v532, %v525
    %v694 = vpack.c.b16 %v533, %v526
    %v695 = vpack.c.b16 %v534, %v527
    %v696 = vpack.c.b16 %v542, %v535
    %v697 = vpack.c.b16 %v543, %v536
    %v698 = vpack.c.b16 %v544, %v537
    %v699 = vpack.c.b16 %v545, %v538
    %v700 = vpack.c.b16 %v546, %v539
    %v701 = vpack.c.b16 %v547, %v540
    %v702 = vpack.c.b16 %v548, %v541
    %v703 = vpack.c.b16 %v556, %v549
    %v704 = vpack.c.b16 %v557, %v550
    %v705 = vpack.c.b16 %v558, %v551
    %v706 = vpack.c.b16 %v559, %v552
    %v707 = vpack.c.b16 %v560, %v553
    %v708 = vpack.c.b16 %v561, %v554
    %v709 = vpack.c.b16 %v562, %v555
    %v710 = vpack.c.b16 %v570, %v563
    %v711 = vpack.c.b16 %v571, %v564
    %v712 = vpack.c.b16 %v572, %v565
    %v713 = vpack.c.b16 %v573, %v566
    %v714 = vpack.c.b16 %v574, %v567
    %v715 = vpack.c.b16 %v575, %v568
    %v716 = vpack.c.b16 %v576, %v569
    %v717 = vpack.c.b16 %v584, %v577
    %v718 = vpack.c.b16 %v585, %v578
    %v719 = vpack.c.b16 %v586, %v579
    %v720 = vpack.c.b16 %v587, %v580
    %v721 = vpack.c.b16 %v588, %v581
    %v722 = vpack.c.b16 %v589, %v582
    %v723 = vpack.c.b16 %v590, %v583
    %v724 = vpack.c.b16 %v598, %v591
    %v725 = vpack.c.b16 %v599, %v592
    %v726 = vpack.c.b16 %v600, %v593
    %v727 = vpack.c.b16 %v601, %v594
    %v728 = vpack.c.b16 %v602, %v595
    %v729 = vpack.c.b16 %v603, %v596
    %v730 = vpack.c.b16 %v604, %v597
    %v731 = vpack.c.b16 %v612, %v605
    %v732 = vpack.c.b16 %v613, %v606
    %v733 = vpack.c.b16 %v614, %v607
    %v734 = vpack.c.b16 %v615, %v608
    %v735 = vpack.c.b16 %v616, %v609
    %v736 = vpack.c.b16 %v617, %v610
    %v737 = vpack.c.b16 %v618, %v611
    %v738 = vpack.c.b16 %v626, %v619
    %v739 = vpack.c.b16 %v627, %v620
    %v740 = vpack.c.b16 %v628, %v621
    %v741 = vpack.c.b16 %v629, %v622
    %v742 = vpack.c.b16 %v630, %v623
    %v743 = vpack.c.b16 %v631, %v624
    %v744 = vpack.c.b16 %v632, %v625
    %857 = vmatprep.subr.bf16.mxu0 %v634
    %858 = vmatpush1.bf16.msra.mxu0 %v633
    %859 = vmatprep.subr.bf16.mxu0 %v641
    %860 = vmatpush1.bf16.msra.mxu0 %v640
    %861 = vmatprep.subr.bf16.mxu0 %v648
    %862 = vmatpush1.bf16.msra.mxu0 %v647
    %863 = vmatprep.subr.bf16.mxu0 %v655
    %864 = vmatpush1.bf16.msra.mxu0 %v654
    %865 = vmatprep.subr.bf16.mxu0 %v662
    %866 = vmatpush1.bf16.msra.mxu0 %v661
    %867 = vmatprep.subr.bf16.mxu0 %v669
    %868 = vmatpush1.bf16.msra.mxu0 %v668
    %869 = vmatprep.subr.bf16.mxu0 %v676
    %870 = vmatpush1.bf16.msra.mxu0 %v675
    %871 = vmatprep.subr.bf16.mxu0 %v683
    %872 = vmatpush1.bf16.msra.mxu0 %v682
    %873 = vmatprep.subr.bf16.mxu0 %v690
    %874 = vmatpush1.bf16.msra.mxu0 %v689
    %875 = vmatprep.subr.bf16.mxu0 %v697
    %876 = vmatpush1.bf16.msra.mxu0 %v696
    %877 = vmatprep.subr.bf16.mxu0 %v704
    %878 = vmatpush1.bf16.msra.mxu0 %v703
    %879 = vmatprep.subr.bf16.mxu0 %v711
    %880 = vmatpush1.bf16.msra.mxu0 %v710
    %881 = vmatprep.subr.bf16.mxu0 %v718
    %882 = vmatpush1.bf16.msra.mxu0 %v717
    %883 = vmatprep.subr.bf16.mxu0 %v725
    %884 = vmatpush1.bf16.msra.mxu0 %v724
    %885 = vmatprep.subr.bf16.mxu0 %v732
    %886 = vmatpush1.bf16.msra.mxu0 %v731
    %887 = vmatprep.subr.bf16.mxu0 %v739
    %888 = vmatpush1.bf16.msra.mxu0 %v738
    %889 = vmatprep.mubr.bf16.mxu0 %v278
    %890 = vmatmul.mubr.bf16.gmra.mrb[0].mxu0 %v277
    %v891 = vpop.f32.mrb[0].mxu0
    %v892 = vadd.f32 %v239, %v891
    %v893 = vpop.f32.mrb[0].mxu0
    %v894 = vadd.f32 %v243, %v893
    %v895 = vpop.f32.mrb[0].mxu0
    %v896 = vadd.f32 %v239, %v895
    %v897 = vpop.f32.mrb[0].mxu0
    %v898 = vadd.f32 %v243, %v897
    %899 = vdwg.mxu0
    %900 = vmatprep.subr.bf16.mxu0 %v636
    %901 = vmatpush1.bf16.msra.mxu0 %v635
    %902 = vmatprep.subr.bf16.mxu0 %v643
    %903 = vmatpush1.bf16.msra.mxu0 %v642
    %904 = vmatprep.subr.bf16.mxu0 %v650
    %905 = vmatpush1.bf16.msra.mxu0 %v649
    %906 = vmatprep.subr.bf16.mxu0 %v657
    %907 = vmatpush1.bf16.msra.mxu0 %v656
    %908 = vmatprep.subr.bf16.mxu0 %v664
    %909 = vmatpush1.bf16.msra.mxu0 %v663
    %910 = vmatprep.subr.bf16.mxu0 %v671
    %911 = vmatpush1.bf16.msra.mxu0 %v670
    %912 = vmatprep.subr.bf16.mxu0 %v678
    %913 = vmatpush1.bf16.msra.mxu0 %v677
    %914 = vmatprep.subr.bf16.mxu0 %v685
    %915 = vmatpush1.bf16.msra.mxu0 %v684
    %916 = vmatprep.subr.bf16.mxu0 %v692
    %917 = vmatpush1.bf16.msra.mxu0 %v691
    %918 = vmatprep.subr.bf16.mxu0 %v699
    %919 = vmatpush1.bf16.msra.mxu0 %v698
    %920 = vmatprep.subr.bf16.mxu0 %v706
    %921 = vmatpush1.bf16.msra.mxu0 %v705
    %922 = vmatprep.subr.bf16.mxu0 %v713
    %923 = vmatpush1.bf16.msra.mxu0 %v712
    %924 = vmatprep.subr.bf16.mxu0 %v720
    %925 = vmatpush1.bf16.msra.mxu0 %v719
    %926 = vmatprep.subr.bf16.mxu0 %v727
    %927 = vmatpush1.bf16.msra.mxu0 %v726
    %928 = vmatprep.subr.bf16.mxu0 %v734
    %929 = vmatpush1.bf16.msra.mxu0 %v733
    %930 = vmatprep.subr.bf16.mxu0 %v741
    %931 = vmatpush1.bf16.msra.mxu0 %v740
    %932 = vmatprep.mubr.bf16.mxu0 %v278
    %933 = vmatmul.mubr.bf16.gmra.mrb[0].mxu0 %v277
    %v934 = vpop.f32.mrb[0].mxu0
    %v935 = vadd.f32 %v247, %v934
    %v936 = vpop.f32.mrb[0].mxu0
    %v937 = vadd.f32 %v251, %v936
    %v938 = vpop.f32.mrb[0].mxu0
    %v939 = vadd.f32 %v247, %v938
    %v940 = vpop.f32.mrb[0].mxu0
    %v941 = vadd.f32 %v251, %v940
    %942 = vdwg.mxu0
    %943 = vmatprep.subr.bf16.mxu0 %v638
    %944 = vmatpush1.bf16.msra.mxu0 %v637
    %945 = vmatprep.subr.bf16.mxu0 %v645
    %946 = vmatpush1.bf16.msra.mxu0 %v644
    %947 = vmatprep.subr.bf16.mxu0 %v652
    %948 = vmatpush1.bf16.msra.mxu0 %v651
    %949 = vmatprep.subr.bf16.mxu0 %v659
    %950 = vmatpush1.bf16.msra.mxu0 %v658
    %951 = vmatprep.subr.bf16.mxu0 %v666
    %952 = vmatpush1.bf16.msra.mxu0 %v665
    %953 = vmatprep.subr.bf16.mxu0 %v673
    %954 = vmatpush1.bf16.msra.mxu0 %v672
    %955 = vmatprep.subr.bf16.mxu0 %v680
    %956 = vmatpush1.bf16.msra.mxu0 %v679
    %957 = vmatprep.subr.bf16.mxu0 %v687
    %958 = vmatpush1.bf16.msra.mxu0 %v686
    %959 = vmatprep.subr.bf16.mxu0 %v694
    %960 = vmatpush1.bf16.msra.mxu0 %v693
    %961 = vmatprep.subr.bf16.mxu0 %v701
    %962 = vmatpush1.bf16.msra.mxu0 %v700
    %963 = vmatprep.subr.bf16.mxu0 %v708
    %964 = vmatpush1.bf16.msra.mxu0 %v707
    %965 = vmatprep.subr.bf16.mxu0 %v715
    %966 = vmatpush1.bf16.msra.mxu0 %v714
    %967 = vmatprep.subr.bf16.mxu0 %v722
    %968 = vmatpush1.bf16.msra.mxu0 %v721
    %969 = vmatprep.subr.bf16.mxu0 %v729
    %970 = vmatpush1.bf16.msra.mxu0 %v728
    %971 = vmatprep.subr.bf16.mxu0 %v736
    %972 = vmatpush1.bf16.msra.mxu0 %v735
    %973 = vmatprep.subr.bf16.mxu0 %v743
    %974 = vmatpush1.bf16.msra.mxu0 %v742
    %975 = vmatprep.mubr.bf16.mxu0 %v278
    %976 = vmatmul.mubr.bf16.gmra.mrb[0].mxu0 %v277
    %v977 = vpop.f32.mrb[0].mxu0
    %v978 = vadd.f32 %v255, %v977
    %v979 = vpop.f32.mrb[0].mxu0
    %v980 = vadd.f32 %v259, %v979
    %v981 = vpop.f32.mrb[0].mxu0
    %v982 = vadd.f32 %v255, %v981
    %v983 = vpop.f32.mrb[0].mxu0
    %v984 = vadd.f32 %v259, %v983
    %985 = vdwg.mxu0
    %986 = vmatprep.subr.bf16.mxu0 0
    %987 = vmatpush1.bf16.msra.mxu0 %v639
    %988 = vmatprep.subr.bf16.mxu0 0
    %989 = vmatpush1.bf16.msra.mxu0 %v646
    %990 = vmatprep.subr.bf16.mxu0 0
    %991 = vmatpush1.bf16.msra.mxu0 %v653
    %992 = vmatprep.subr.bf16.mxu0 0
    %993 = vmatpush1.bf16.msra.mxu0 %v660
    %994 = vmatprep.subr.bf16.mxu0 0
    %995 = vmatpush1.bf16.msra.mxu0 %v667
    %996 = vmatprep.subr.bf16.mxu0 0
    %997 = vmatpush1.bf16.msra.mxu0 %v674
    %998 = vmatprep.subr.bf16.mxu0 0
    %999 = vmatpush1.bf16.msra.mxu0 %v681
    %1000 = vmatprep.subr.bf16.mxu0 0
    %1001 = vmatpush1.bf16.msra.mxu0 %v688
    %1002 = vmatprep.subr.bf16.mxu0 0
    %1003 = vmatpush1.bf16.msra.mxu0 %v695
    %1004 = vmatprep.subr.bf16.mxu0 0
    %1005 = vmatpush1.bf16.msra.mxu0 %v702
    %1006 = vmatprep.subr.bf16.mxu0 0
    %1007 = vmatpush1.bf16.msra.mxu0 %v709
    %1008 = vmatprep.subr.bf16.mxu0 0
    %1009 = vmatpush1.bf16.msra.mxu0 %v716
    %1010 = vmatprep.subr.bf16.mxu0 0
    %1011 = vmatpush1.bf16.msra.mxu0 %v723
    %1012 = vmatprep.subr.bf16.mxu0 0
    %1013 = vmatpush1.bf16.msra.mxu0 %v730
    %1014 = vmatprep.subr.bf16.mxu0 0
    %1015 = vmatpush1.bf16.msra.mxu0 %v737
    %1016 = vmatprep.subr.bf16.mxu0 0
    %1017 = vmatpush1.bf16.msra.mxu0 %v744
    %1018 = vmatprep.mubr.bf16.mxu0 %v278
    %1019 = vmatmul.mubr.bf16.gmra.mrb[0].mxu0 %v277
    %v1020 = vpop.f32.mrb[0].mxu0
    %v1021 = vadd.f32 %v263, %v1020
    %v1022 = vpop.f32.mrb[0].mxu0
    %v1023 = vpop.f32.mrb[0].mxu0
    %v1024 = vadd.f32 %v263, %v1023
    %v1025 = vpop.f32.mrb[0].mxu0
    %1026 = vdwg.mxu0
    %v1027 = vmax.f32 %v892, 0.0
    %v1028 = vmax.f32 %v894, 0.0
    %v1029 = vmax.f32 %v935, 0.0
    %v1030 = vmax.f32 %v937, 0.0
    %v1031 = vmax.f32 %v978, 0.0
    %v1032 = vmax.f32 %v980, 0.0
    %v1033 = vmax.f32 %v1021, 0.0
    %v1034 = vmax.f32 %v896, 0.0
    %v1035 = vmax.f32 %v898, 0.0
    %v1036 = vmax.f32 %v939, 0.0
    %v1037 = vmax.f32 %v941, 0.0
    %v1038 = vmax.f32 %v982, 0.0
    %v1039 = vmax.f32 %v984, 0.0
    %v1040 = vmax.f32 %v1024, 0.0
    %v1041 = vpack.c.bf16 %v1034, %v1027
    %v1042 = vpack.c.bf16 %v1035, %v1028
    %v1043 = vpack.c.bf16 %v1036, %v1029
    %v1044 = vpack.c.bf16 %v1037, %v1030
    %v1045 = vpack.c.bf16 %v1038, %v1031
    %v1046 = vpack.c.bf16 %v1039, %v1032
    %v1047 = vpack.c.bf16 %v1040, %v1033
    %v1048 = vld [vmem:[#allocation7] sm:$0xff]
    %v1049 = vld [vmem:[#allocation7 + $0x8] sm:$0xff]
    %v1050 = vld [vmem:[#allocation7 + $0x10] sm:$0xff]
    %v1051 = vld [vmem:[#allocation7 + $0x18] sm:$0xf]
    %v1052 = vld [vmem:[#allocation7 + $0x1c] sm:$0xff]
    %v1053 = vld [vmem:[#allocation7 + $0x24] sm:$0xff]
    %v1054 = vld [vmem:[#allocation7 + $0x2c] sm:$0xff]
    %v1055 = vld [vmem:[#allocation7 + $0x34] sm:$0xf]
    %v1056 = vld [vmem:[#allocation7 + $0x38] sm:$0xff]
    %v1057 = vld [vmem:[#allocation7 + $0x40] sm:$0xff]
    %v1058 = vld [vmem:[#allocation7 + $0x48] sm:$0xff]
    %v1059 = vld [vmem:[#allocation7 + $0x50] sm:$0xf]
    %v1060 = vld [vmem:[#allocation7 + $0x54] sm:$0xff]
    %v1061 = vld [vmem:[#allocation7 + $0x5c] sm:$0xff]
    %v1062 = vld [vmem:[#allocation7 + $0x64] sm:$0xff]
    %v1063 = vld [vmem:[#allocation7 + $0x6c] sm:$0xf]
    %v1064 = vld [vmem:[#allocation7 + $0x70] sm:$0xff]
    %v1065 = vld [vmem:[#allocation7 + $0x78] sm:$0xff]
    %v1066 = vld [vmem:[#allocation7 + $0x80] sm:$0xff]
    %v1067 = vld [vmem:[#allocation7 + $0x88] sm:$0xf]
    %v1068 = vld [vmem:[#allocation7 + $0x8c] sm:$0xff]
    %v1069 = vld [vmem:[#allocation7 + $0x94] sm:$0xff]
    %v1070 = vld [vmem:[#allocation7 + $0x9c] sm:$0xff]
    %v1071 = vld [vmem:[#allocation7 + $0xa4] sm:$0xf]
    %v1072 = vld [vmem:[#allocation7 + $0xa8] sm:$0xff]
    %v1073 = vld [vmem:[#allocation7 + $0xb0] sm:$0xff]
    %v1074 = vld [vmem:[#allocation7 + $0xb8] sm:$0xff]
    %v1075 = vld [vmem:[#allocation7 + $0xc0] sm:$0xf]
    %v1076 = vld [vmem:[#allocation7 + $0xc4] sm:$0xff]
    %v1077 = vld [vmem:[#allocation7 + $0xcc] sm:$0xff]
    %v1078 = vld [vmem:[#allocation7 + $0xd4] sm:$0xff]
    %v1079 = vld [vmem:[#allocation7 + $0xdc] sm:$0xf]
    %v1080 = vld [vmem:[#allocation7 + $0xe0] sm:$0xff]
    %v1081 = vld [vmem:[#allocation7 + $0xe8] sm:$0xff]
    %v1082 = vld [vmem:[#allocation7 + $0xf0] sm:$0xff]
    %v1083 = vld [vmem:[#allocation7 + $0xf8] sm:$0xf]
    %v1084 = vld [vmem:[#allocation7 + $0xfc] sm:$0xff]
    %v1085 = vld [vmem:[#allocation7 + $0x104] sm:$0xff]
    %v1086 = vld [vmem:[#allocation7 + $0x10c] sm:$0xff]
    %v1087 = vld [vmem:[#allocation7 + $0x114] sm:$0xf]
    %v1088 = vld [vmem:[#allocation7 + $0x118] sm:$0xff]
    %v1089 = vld [vmem:[#allocation7 + $0x120] sm:$0xff]
    %v1090 = vld [vmem:[#allocation7 + $0x128] sm:$0xff]
    %v1091 = vld [vmem:[#allocation7 + $0x130] sm:$0xf]
    %v1092 = vld [vmem:[#allocation7 + $0x134] sm:$0xff]
    %v1093 = vld [vmem:[#allocation7 + $0x13c] sm:$0xff]
    %v1094 = vld [vmem:[#allocation7 + $0x144] sm:$0xff]
    %v1095 = vld [vmem:[#allocation7 + $0x14c] sm:$0xf]
    %v1096 = vld [vmem:[#allocation7 + $0x150] sm:$0xff]
    %v1097 = vld [vmem:[#allocation7 + $0x158] sm:$0xff]
    %v1098 = vld [vmem:[#allocation7 + $0x160] sm:$0xff]
    %v1099 = vld [vmem:[#allocation7 + $0x168] sm:$0xf]
    %v1100 = vld [vmem:[#allocation7 + $0x16c] sm:$0xff]
    %v1101 = vld [vmem:[#allocation7 + $0x174] sm:$0xff]
    %v1102 = vld [vmem:[#allocation7 + $0x17c] sm:$0xff]
    %v1103 = vld [vmem:[#allocation7 + $0x184] sm:$0xf]
    %v1104 = vld [vmem:[#allocation7 + $0x188] sm:$0xff]
    %v1105 = vld [vmem:[#allocation7 + $0x190] sm:$0xff]
    %v1106 = vld [vmem:[#allocation7 + $0x198] sm:$0xff]
    %v1107 = vld [vmem:[#allocation7 + $0x1a0] sm:$0xf]
    %v1108 = vld [vmem:[#allocation7 + $0x1a4] sm:$0xff]
    %v1109 = vld [vmem:[#allocation7 + $0x1ac] sm:$0xff]
    %v1110 = vld [vmem:[#allocation7 + $0x1b4] sm:$0xff]
    %v1111 = vld [vmem:[#allocation7 + $0x1bc] sm:$0xf]
    %v1112 = vld [vmem:[#allocation7 + $0x1c0] sm:$0xff]
    %v1113 = vld [vmem:[#allocation7 + $0x1c8] sm:$0xff]
    %v1114 = vld [vmem:[#allocation7 + $0x1d0] sm:$0xff]
    %v1115 = vld [vmem:[#allocation7 + $0x1d8] sm:$0xf]
    %v1116 = vld [vmem:[#allocation7 + $0x1dc] sm:$0xff]
    %v1117 = vld [vmem:[#allocation7 + $0x1e4] sm:$0xff]
    %v1118 = vld [vmem:[#allocation7 + $0x1ec] sm:$0xff]
    %v1119 = vld [vmem:[#allocation7 + $0x1f4] sm:$0xf]
    %v1120 = vld [vmem:[#allocation7 + $0x1f8] sm:$0xff]
    %v1121 = vld [vmem:[#allocation7 + $0x200] sm:$0xff]
    %v1122 = vld [vmem:[#allocation7 + $0x208] sm:$0xff]
    %v1123 = vld [vmem:[#allocation7 + $0x210] sm:$0xf]
    %v1124 = vld [vmem:[#allocation7 + $0x214] sm:$0xff]
    %v1125 = vld [vmem:[#allocation7 + $0x21c] sm:$0xff]
    %v1126 = vld [vmem:[#allocation7 + $0x224] sm:$0xff]
    %v1127 = vld [vmem:[#allocation7 + $0x22c] sm:$0xf]
    %v1128 = vld [vmem:[#allocation7 + $0x230] sm:$0xff]
    %v1129 = vld [vmem:[#allocation7 + $0x238] sm:$0xff]
    %v1130 = vld [vmem:[#allocation7 + $0x240] sm:$0xff]
    %v1131 = vld [vmem:[#allocation7 + $0x248] sm:$0xf]
    %v1132 = vld [vmem:[#allocation7 + $0x24c] sm:$0xff]
    %v1133 = vld [vmem:[#allocation7 + $0x254] sm:$0xff]
    %v1134 = vld [vmem:[#allocation7 + $0x25c] sm:$0xff]
    %v1135 = vld [vmem:[#allocation7 + $0x264] sm:$0xf]
    %v1136 = vld [vmem:[#allocation7 + $0x268] sm:$0xff]
    %v1137 = vld [vmem:[#allocation7 + $0x270] sm:$0xff]
    %v1138 = vld [vmem:[#allocation7 + $0x278] sm:$0xff]
    %v1139 = vld [vmem:[#allocation7 + $0x280] sm:$0xf]
    %v1140 = vld [vmem:[#allocation7 + $0x284] sm:$0xff]
    %v1141 = vld [vmem:[#allocation7 + $0x28c] sm:$0xff]
    %v1142 = vld [vmem:[#allocation7 + $0x294] sm:$0xff]
    %v1143 = vld [vmem:[#allocation7 + $0x29c] sm:$0xf]
    %v1144 = vld [vmem:[#allocation7 + $0x2a0] sm:$0xff]
    %v1145 = vld [vmem:[#allocation7 + $0x2a8] sm:$0xff]
    %v1146 = vld [vmem:[#allocation7 + $0x2b0] sm:$0xff]
    %v1147 = vld [vmem:[#allocation7 + $0x2b8] sm:$0xf]
    %v1148 = vld [vmem:[#allocation7 + $0x2bc] sm:$0xff]
    %v1149 = vld [vmem:[#allocation7 + $0x2c4] sm:$0xff]
    %v1150 = vld [vmem:[#allocation7 + $0x2cc] sm:$0xff]
    %v1151 = vld [vmem:[#allocation7 + $0x2d4] sm:$0xf]
    %v1152 = vld [vmem:[#allocation7 + $0x2d8] sm:$0xff]
    %v1153 = vld [vmem:[#allocation7 + $0x2e0] sm:$0xff]
    %v1154 = vld [vmem:[#allocation7 + $0x2e8] sm:$0xff]
    %v1155 = vld [vmem:[#allocation7 + $0x2f0] sm:$0xf]
    %v1156 = vld [vmem:[#allocation7 + $0x2f4] sm:$0xff]
    %v1157 = vld [vmem:[#allocation7 + $0x2fc] sm:$0xff]
    %v1158 = vld [vmem:[#allocation7 + $0x304] sm:$0xff]
    %v1159 = vld [vmem:[#allocation7 + $0x30c] sm:$0xf]
    %v1160 = vld [vmem:[#allocation7 + $0x310] sm:$0xff]
    %v1161 = vld [vmem:[#allocation7 + $0x318] sm:$0xff]
    %v1162 = vld [vmem:[#allocation7 + $0x320] sm:$0xff]
    %v1163 = vld [vmem:[#allocation7 + $0x328] sm:$0xf]
    %v1164 = vld [vmem:[#allocation7 + $0x32c] sm:$0xff]
    %v1165 = vld [vmem:[#allocation7 + $0x334] sm:$0xff]
    %v1166 = vld [vmem:[#allocation7 + $0x33c] sm:$0xff]
    %v1167 = vld [vmem:[#allocation7 + $0x344] sm:$0xf]
    %v1168 = vld [vmem:[#allocation7 + $0x348] sm:$0xff]
    %v1169 = vld [vmem:[#allocation7 + $0x350] sm:$0xff]
    %v1170 = vld [vmem:[#allocation7 + $0x358] sm:$0xff]
    %v1171 = vld [vmem:[#allocation7 + $0x360] sm:$0xf]
    %v1172 = vld [vmem:[#allocation7 + $0x364] sm:$0xff]
    %v1173 = vld [vmem:[#allocation7 + $0x36c] sm:$0xff]
    %v1174 = vld [vmem:[#allocation7 + $0x374] sm:$0xff]
    %v1175 = vld [vmem:[#allocation7 + $0x37c] sm:$0xf]
    %v1176 = vld [vmem:[#allocation7 + $0x380] sm:$0xff]
    %v1177 = vld [vmem:[#allocation7 + $0x388] sm:$0xff]
    %v1178 = vld [vmem:[#allocation7 + $0x390] sm:$0xff]
    %v1179 = vld [vmem:[#allocation7 + $0x398] sm:$0xf]
    %v1180 = vld [vmem:[#allocation7 + $0x39c] sm:$0xff]
    %v1181 = vld [vmem:[#allocation7 + $0x3a4] sm:$0xff]
    %v1182 = vld [vmem:[#allocation7 + $0x3ac] sm:$0xff]
    %v1183 = vld [vmem:[#allocation7 + $0x3b4] sm:$0xf]
    %v1184 = vld [vmem:[#allocation7 + $0x3b8] sm:$0xff]
    %v1185 = vld [vmem:[#allocation7 + $0x3c0] sm:$0xff]
    %v1186 = vld [vmem:[#allocation7 + $0x3c8] sm:$0xff]
    %v1187 = vld [vmem:[#allocation7 + $0x3d0] sm:$0xf]
    %v1188 = vld [vmem:[#allocation7 + $0x3d4] sm:$0xff]
    %v1189 = vld [vmem:[#allocation7 + $0x3dc] sm:$0xff]
    %v1190 = vld [vmem:[#allocation7 + $0x3e4] sm:$0xff]
    %v1191 = vld [vmem:[#allocation7 + $0x3ec] sm:$0xf]
    %v1192 = vld [vmem:[#allocation7 + $0x3f0] sm:$0xff]
    %v1193 = vld [vmem:[#allocation7 + $0x3f8] sm:$0xff]
    %v1194 = vld [vmem:[#allocation7 + $0x400] sm:$0xff]
    %v1195 = vld [vmem:[#allocation7 + $0x408] sm:$0xf]
    %v1196 = vld [vmem:[#allocation7 + $0x40c] sm:$0xff]
    %v1197 = vld [vmem:[#allocation7 + $0x414] sm:$0xff]
    %v1198 = vld [vmem:[#allocation7 + $0x41c] sm:$0xff]
    %v1199 = vld [vmem:[#allocation7 + $0x424] sm:$0xf]
    %v1200 = vld [vmem:[#allocation7 + $0x428] sm:$0xff]
    %v1201 = vld [vmem:[#allocation7 + $0x430] sm:$0xff]
    %v1202 = vld [vmem:[#allocation7 + $0x438] sm:$0xff]
    %v1203 = vld [vmem:[#allocation7 + $0x440] sm:$0xf]
    %v1204 = vld [vmem:[#allocation7 + $0x444] sm:$0xff]
    %v1205 = vld [vmem:[#allocation7 + $0x44c] sm:$0xff]
    %v1206 = vld [vmem:[#allocation7 + $0x454] sm:$0xff]
    %v1207 = vld [vmem:[#allocation7 + $0x45c] sm:$0xf]
    %v1208 = vld [vmem:[#allocation7 + $0x460] sm:$0xff]
    %v1209 = vld [vmem:[#allocation7 + $0x468] sm:$0xff]
    %v1210 = vld [vmem:[#allocation7 + $0x470] sm:$0xff]
    %v1211 = vld [vmem:[#allocation7 + $0x478] sm:$0xf]
    %v1212 = vld [vmem:[#allocation7 + $0x47c] sm:$0xff]
    %v1213 = vld [vmem:[#allocation7 + $0x484] sm:$0xff]
    %v1214 = vld [vmem:[#allocation7 + $0x48c] sm:$0xff]
    %v1215 = vld [vmem:[#allocation7 + $0x494] sm:$0xf]
    %v1216 = vld [vmem:[#allocation7 + $0x498] sm:$0xff]
    %v1217 = vld [vmem:[#allocation7 + $0x4a0] sm:$0xff]
    %v1218 = vld [vmem:[#allocation7 + $0x4a8] sm:$0xff]
    %v1219 = vld [vmem:[#allocation7 + $0x4b0] sm:$0xf]
    %v1220 = vld [vmem:[#allocation7 + $0x4b4] sm:$0xff]
    %v1221 = vld [vmem:[#allocation7 + $0x4bc] sm:$0xff]
    %v1222 = vld [vmem:[#allocation7 + $0x4c4] sm:$0xff]
    %v1223 = vld [vmem:[#allocation7 + $0x4cc] sm:$0xf]
    %v1224 = vld [vmem:[#allocation7 + $0x4d0] sm:$0xff]
    %v1225 = vld [vmem:[#allocation7 + $0x4d8] sm:$0xff]
    %v1226 = vld [vmem:[#allocation7 + $0x4e0] sm:$0xff]
    %v1227 = vld [vmem:[#allocation7 + $0x4e8] sm:$0xf]
    %v1228 = vld [vmem:[#allocation7 + $0x4ec] sm:$0xff]
    %v1229 = vld [vmem:[#allocation7 + $0x4f4] sm:$0xff]
    %v1230 = vld [vmem:[#allocation7 + $0x4fc] sm:$0xff]
    %v1231 = vld [vmem:[#allocation7 + $0x504] sm:$0xf]
    %v1232 = vld [vmem:[#allocation7 + $0x508] sm:$0xff]
    %v1233 = vld [vmem:[#allocation7 + $0x510] sm:$0xff]
    %v1234 = vld [vmem:[#allocation7 + $0x518] sm:$0xff]
    %v1235 = vld [vmem:[#allocation7 + $0x520] sm:$0xf]
    %v1236 = vld [vmem:[#allocation7 + $0x524] sm:$0xff]
    %v1237 = vld [vmem:[#allocation7 + $0x52c] sm:$0xff]
    %v1238 = vld [vmem:[#allocation7 + $0x534] sm:$0xff]
    %v1239 = vld [vmem:[#allocation7 + $0x53c] sm:$0xf]
    %v1240 = vld [vmem:[#allocation7 + $0x540] sm:$0xff]
    %v1241 = vld [vmem:[#allocation7 + $0x548] sm:$0xff]
    %v1242 = vld [vmem:[#allocation7 + $0x550] sm:$0xff]
    %v1243 = vld [vmem:[#allocation7 + $0x558] sm:$0xf]
    %v1244 = vld [vmem:[#allocation7 + $0x55c] sm:$0xff]
    %v1245 = vld [vmem:[#allocation7 + $0x564] sm:$0xff]
    %v1246 = vld [vmem:[#allocation7 + $0x56c] sm:$0xff]
    %v1247 = vld [vmem:[#allocation7 + $0x574] sm:$0xf]
    %v1248 = vld [vmem:[#allocation7 + $0x578] sm:$0xff]
    %v1249 = vld [vmem:[#allocation7 + $0x580] sm:$0xff]
    %v1250 = vld [vmem:[#allocation7 + $0x588] sm:$0xff]
    %v1251 = vld [vmem:[#allocation7 + $0x590] sm:$0xf]
    %v1252 = vld [vmem:[#allocation7 + $0x594] sm:$0xff]
    %v1253 = vld [vmem:[#allocation7 + $0x59c] sm:$0xff]
    %v1254 = vld [vmem:[#allocation7 + $0x5a4] sm:$0xff]
    %v1255 = vld [vmem:[#allocation7 + $0x5ac] sm:$0xf]
    %v1256 = vld [vmem:[#allocation7 + $0x5b0] sm:$0xff]
    %v1257 = vld [vmem:[#allocation7 + $0x5b8] sm:$0xff]
    %v1258 = vld [vmem:[#allocation7 + $0x5c0] sm:$0xff]
    %v1259 = vld [vmem:[#allocation7 + $0x5c8] sm:$0xf]
    %v1260 = vld [vmem:[#allocation7 + $0x5cc] sm:$0xff]
    %v1261 = vld [vmem:[#allocation7 + $0x5d4] sm:$0xff]
    %v1262 = vld [vmem:[#allocation7 + $0x5dc] sm:$0xff]
    %v1263 = vld [vmem:[#allocation7 + $0x5e4] sm:$0xf]
    %v1264 = vld [vmem:[#allocation7 + $0x5e8] sm:$0xff]
    %v1265 = vld [vmem:[#allocation7 + $0x5f0] sm:$0xff]
    %v1266 = vld [vmem:[#allocation7 + $0x5f8] sm:$0xff]
    %v1267 = vld [vmem:[#allocation7 + $0x600] sm:$0xf]
    %v1268 = vld [vmem:[#allocation7 + $0x604] sm:$0xff]
    %v1269 = vld [vmem:[#allocation7 + $0x60c] sm:$0xff]
    %v1270 = vld [vmem:[#allocation7 + $0x614] sm:$0xff]
    %v1271 = vld [vmem:[#allocation7 + $0x61c] sm:$0xf]
    %v1272 = vld [vmem:[#allocation7 + $0x620] sm:$0xff]
    %v1273 = vld [vmem:[#allocation7 + $0x628] sm:$0xff]
    %v1274 = vld [vmem:[#allocation7 + $0x630] sm:$0xff]
    %v1275 = vld [vmem:[#allocation7 + $0x638] sm:$0xf]
    %v1276 = vld [vmem:[#allocation7 + $0x63c] sm:$0xff]
    %v1277 = vld [vmem:[#allocation7 + $0x644] sm:$0xff]
    %v1278 = vld [vmem:[#allocation7 + $0x64c] sm:$0xff]
    %v1279 = vld [vmem:[#allocation7 + $0x654] sm:$0xf]
    %v1280 = vld [vmem:[#allocation7 + $0x658] sm:$0xff]
    %v1281 = vld [vmem:[#allocation7 + $0x660] sm:$0xff]
    %v1282 = vld [vmem:[#allocation7 + $0x668] sm:$0xff]
    %v1283 = vld [vmem:[#allocation7 + $0x670] sm:$0xf]
    %v1284 = vld [vmem:[#allocation7 + $0x674] sm:$0xff]
    %v1285 = vld [vmem:[#allocation7 + $0x67c] sm:$0xff]
    %v1286 = vld [vmem:[#allocation7 + $0x684] sm:$0xff]
    %v1287 = vld [vmem:[#allocation7 + $0x68c] sm:$0xf]
    %v1288 = vld [vmem:[#allocation7 + $0x690] sm:$0xff]
    %v1289 = vld [vmem:[#allocation7 + $0x698] sm:$0xff]
    %v1290 = vld [vmem:[#allocation7 + $0x6a0] sm:$0xff]
    %v1291 = vld [vmem:[#allocation7 + $0x6a8] sm:$0xf]
    %v1292 = vld [vmem:[#allocation7 + $0x6ac] sm:$0xff]
    %v1293 = vld [vmem:[#allocation7 + $0x6b4] sm:$0xff]
    %v1294 = vld [vmem:[#allocation7 + $0x6bc] sm:$0xff]
    %v1295 = vld [vmem:[#allocation7 + $0x6c4] sm:$0xf]
    %v1296 = vld [vmem:[#allocation7 + $0x6c8] sm:$0xff]
    %v1297 = vld [vmem:[#allocation7 + $0x6d0] sm:$0xff]
    %v1298 = vld [vmem:[#allocation7 + $0x6d8] sm:$0xff]
    %v1299 = vld [vmem:[#allocation7 + $0x6e0] sm:$0xf]
    %v1300 = vld [vmem:[#allocation7 + $0x6e4] sm:$0xff]
    %v1301 = vld [vmem:[#allocation7 + $0x6ec] sm:$0xff]
    %v1302 = vld [vmem:[#allocation7 + $0x6f4] sm:$0xff]
    %v1303 = vld [vmem:[#allocation7 + $0x6fc] sm:$0xf]
    %v1304 = vld [vmem:[#allocation7 + $0x700] sm:$0xff]
    %v1305 = vld [vmem:[#allocation7 + $0x708] sm:$0xff]
    %v1306 = vld [vmem:[#allocation7 + $0x710] sm:$0xff]
    %v1307 = vld [vmem:[#allocation7 + $0x718] sm:$0xf]
    %v1308 = vld [vmem:[#allocation7 + $0x71c] sm:$0xff]
    %v1309 = vld [vmem:[#allocation7 + $0x724] sm:$0xff]
    %v1310 = vld [vmem:[#allocation7 + $0x72c] sm:$0xff]
    %v1311 = vld [vmem:[#allocation7 + $0x734] sm:$0xf]
    %v1312 = vld [vmem:[#allocation7 + $0x738] sm:$0xff]
    %v1313 = vld [vmem:[#allocation7 + $0x740] sm:$0xff]
    %v1314 = vld [vmem:[#allocation7 + $0x748] sm:$0xff]
    %v1315 = vld [vmem:[#allocation7 + $0x750] sm:$0xf]
    %v1316 = vld [vmem:[#allocation7 + $0x754] sm:$0xff]
    %v1317 = vld [vmem:[#allocation7 + $0x75c] sm:$0xff]
    %v1318 = vld [vmem:[#allocation7 + $0x764] sm:$0xff]
    %v1319 = vld [vmem:[#allocation7 + $0x76c] sm:$0xf]
    %v1320 = vld [vmem:[#allocation7 + $0x770] sm:$0xff]
    %v1321 = vld [vmem:[#allocation7 + $0x778] sm:$0xff]
    %v1322 = vld [vmem:[#allocation7 + $0x780] sm:$0xff]
    %v1323 = vld [vmem:[#allocation7 + $0x788] sm:$0xf]
    %v1324 = vld [vmem:[#allocation7 + $0x78c] sm:$0xff]
    %v1325 = vld [vmem:[#allocation7 + $0x794] sm:$0xff]
    %v1326 = vld [vmem:[#allocation7 + $0x79c] sm:$0xff]
    %v1327 = vld [vmem:[#allocation7 + $0x7a4] sm:$0xf]
    %v1328 = vld [vmem:[#allocation7 + $0x7a8] sm:$0xff]
    %v1329 = vld [vmem:[#allocation7 + $0x7b0] sm:$0xff]
    %v1330 = vld [vmem:[#allocation7 + $0x7b8] sm:$0xff]
    %v1331 = vld [vmem:[#allocation7 + $0x7c0] sm:$0xf]
    %v1332 = vld [vmem:[#allocation7 + $0x7c4] sm:$0xff]
    %v1333 = vld [vmem:[#allocation7 + $0x7cc] sm:$0xff]
    %v1334 = vld [vmem:[#allocation7 + $0x7d4] sm:$0xff]
    %v1335 = vld [vmem:[#allocation7 + $0x7dc] sm:$0xf]
    %v1336 = vld [vmem:[#allocation7 + $0x7e0] sm:$0xff]
    %v1337 = vld [vmem:[#allocation7 + $0x7e8] sm:$0xff]
    %v1338 = vld [vmem:[#allocation7 + $0x7f0] sm:$0xff]
    %v1339 = vld [vmem:[#allocation7 + $0x7f8] sm:$0xf]
    %v1340 = vld [vmem:[#allocation7 + $0x7fc] sm:$0xff]
    %v1341 = vld [vmem:[#allocation7 + $0x804] sm:$0xff]
    %v1342 = vld [vmem:[#allocation7 + $0x80c] sm:$0xff]
    %v1343 = vld [vmem:[#allocation7 + $0x814] sm:$0xf]
    %v1344 = vld [vmem:[#allocation7 + $0x818] sm:$0xff]
    %v1345 = vld [vmem:[#allocation7 + $0x820] sm:$0xff]
    %v1346 = vld [vmem:[#allocation7 + $0x828] sm:$0xff]
    %v1347 = vld [vmem:[#allocation7 + $0x830] sm:$0xf]
    %v1348 = vld [vmem:[#allocation7 + $0x834] sm:$0xff]
    %v1349 = vld [vmem:[#allocation7 + $0x83c] sm:$0xff]
    %v1350 = vld [vmem:[#allocation7 + $0x844] sm:$0xff]
    %v1351 = vld [vmem:[#allocation7 + $0x84c] sm:$0xf]
    %v1352 = vld [vmem:[#allocation7 + $0x850] sm:$0xff]
    %v1353 = vld [vmem:[#allocation7 + $0x858] sm:$0xff]
    %v1354 = vld [vmem:[#allocation7 + $0x860] sm:$0xff]
    %v1355 = vld [vmem:[#allocation7 + $0x868] sm:$0xf]
    %v1356 = vld [vmem:[#allocation7 + $0x86c] sm:$0xff]
    %v1357 = vld [vmem:[#allocation7 + $0x874] sm:$0xff]
    %v1358 = vld [vmem:[#allocation7 + $0x87c] sm:$0xff]
    %v1359 = vld [vmem:[#allocation7 + $0x884] sm:$0xf]
    %v1360 = vld [vmem:[#allocation7 + $0x888] sm:$0xff]
    %v1361 = vld [vmem:[#allocation7 + $0x890] sm:$0xff]
    %v1362 = vld [vmem:[#allocation7 + $0x898] sm:$0xff]
    %v1363 = vld [vmem:[#allocation7 + $0x8a0] sm:$0xf]
    %v1364 = vld [vmem:[#allocation7 + $0x8a4] sm:$0xff]
    %v1365 = vld [vmem:[#allocation7 + $0x8ac] sm:$0xff]
    %v1366 = vld [vmem:[#allocation7 + $0x8b4] sm:$0xff]
    %v1367 = vld [vmem:[#allocation7 + $0x8bc] sm:$0xf]
    %v1368 = vld [vmem:[#allocation7 + $0x8c0] sm:$0xff]
    %v1369 = vld [vmem:[#allocation7 + $0x8c8] sm:$0xff]
    %v1370 = vld [vmem:[#allocation7 + $0x8d0] sm:$0xff]
    %v1371 = vld [vmem:[#allocation7 + $0x8d8] sm:$0xf]
    %v1372 = vld [vmem:[#allocation7 + $0x8dc] sm:$0xff]
    %v1373 = vld [vmem:[#allocation7 + $0x8e4] sm:$0xff]
    %v1374 = vld [vmem:[#allocation7 + $0x8ec] sm:$0xff]
    %v1375 = vld [vmem:[#allocation7 + $0x8f4] sm:$0xf]
    %v1376 = vld [vmem:[#allocation7 + $0x8f8] sm:$0xff]
    %v1377 = vld [vmem:[#allocation7 + $0x900] sm:$0xff]
    %v1378 = vld [vmem:[#allocation7 + $0x908] sm:$0xff]
    %v1379 = vld [vmem:[#allocation7 + $0x910] sm:$0xf]
    %v1380 = vld [vmem:[#allocation7 + $0x914] sm:$0xff]
    %v1381 = vld [vmem:[#allocation7 + $0x91c] sm:$0xff]
    %v1382 = vld [vmem:[#allocation7 + $0x924] sm:$0xff]
    %v1383 = vld [vmem:[#allocation7 + $0x92c] sm:$0xf]
    %v1384 = vld [vmem:[#allocation7 + $0x930] sm:$0xff]
    %v1385 = vld [vmem:[#allocation7 + $0x938] sm:$0xff]
    %v1386 = vld [vmem:[#allocation7 + $0x940] sm:$0xff]
    %v1387 = vld [vmem:[#allocation7 + $0x948] sm:$0xf]
    %v1388 = vld [vmem:[#allocation7 + $0x94c] sm:$0xff]
    %v1389 = vld [vmem:[#allocation7 + $0x954] sm:$0xff]
    %v1390 = vld [vmem:[#allocation7 + $0x95c] sm:$0xff]
    %v1391 = vld [vmem:[#allocation7 + $0x964] sm:$0xf]
    %v1392 = vld [vmem:[#allocation7 + $0x968] sm:$0xff]
    %v1393 = vld [vmem:[#allocation7 + $0x970] sm:$0xff]
    %v1394 = vld [vmem:[#allocation7 + $0x978] sm:$0xff]
    %v1395 = vld [vmem:[#allocation7 + $0x980] sm:$0xf]
    %v1396 = vld [vmem:[#allocation7 + $0x984] sm:$0xff]
    %v1397 = vld [vmem:[#allocation7 + $0x98c] sm:$0xff]
    %v1398 = vld [vmem:[#allocation7 + $0x994] sm:$0xff]
    %v1399 = vld [vmem:[#allocation7 + $0x99c] sm:$0xf]
    %v1400 = vld [vmem:[#allocation7 + $0x9a0] sm:$0xff]
    %v1401 = vld [vmem:[#allocation7 + $0x9a8] sm:$0xff]
    %v1402 = vld [vmem:[#allocation7 + $0x9b0] sm:$0xff]
    %v1403 = vld [vmem:[#allocation7 + $0x9b8] sm:$0xf]
    %v1404 = vld [vmem:[#allocation7 + $0x9bc] sm:$0xff]
    %v1405 = vld [vmem:[#allocation7 + $0x9c4] sm:$0xff]
    %v1406 = vld [vmem:[#allocation7 + $0x9cc] sm:$0xff]
    %v1407 = vld [vmem:[#allocation7 + $0x9d4] sm:$0xf]
    %v1408 = vld [vmem:[#allocation7 + $0x9d8] sm:$0xff]
    %v1409 = vld [vmem:[#allocation7 + $0x9e0] sm:$0xff]
    %v1410 = vld [vmem:[#allocation7 + $0x9e8] sm:$0xff]
    %v1411 = vld [vmem:[#allocation7 + $0x9f0] sm:$0xf]
    %v1412 = vld [vmem:[#allocation7 + $0x9f4] sm:$0xff]
    %v1413 = vld [vmem:[#allocation7 + $0x9fc] sm:$0xff]
    %v1414 = vld [vmem:[#allocation7 + $0xa04] sm:$0xff]
    %v1415 = vld [vmem:[#allocation7 + $0xa0c] sm:$0xf]
    %v1416 = vld [vmem:[#allocation7 + $0xa10] sm:$0xff]
    %v1417 = vld [vmem:[#allocation7 + $0xa18] sm:$0xff]
    %v1418 = vld [vmem:[#allocation7 + $0xa20] sm:$0xff]
    %v1419 = vld [vmem:[#allocation7 + $0xa28] sm:$0xf]
    %v1420 = vld [vmem:[#allocation7 + $0xa2c] sm:$0xff]
    %v1421 = vld [vmem:[#allocation7 + $0xa34] sm:$0xff]
    %v1422 = vld [vmem:[#allocation7 + $0xa3c] sm:$0xff]
    %v1423 = vld [vmem:[#allocation7 + $0xa44] sm:$0xf]
    %v1424 = vld [vmem:[#allocation7 + $0xa48] sm:$0xff]
    %v1425 = vld [vmem:[#allocation7 + $0xa50] sm:$0xff]
    %v1426 = vld [vmem:[#allocation7 + $0xa58] sm:$0xff]
    %v1427 = vld [vmem:[#allocation7 + $0xa60] sm:$0xf]
    %v1428 = vld [vmem:[#allocation7 + $0xa64] sm:$0xff]
    %v1429 = vld [vmem:[#allocation7 + $0xa6c] sm:$0xff]
    %v1430 = vld [vmem:[#allocation7 + $0xa74] sm:$0xff]
    %v1431 = vld [vmem:[#allocation7 + $0xa7c] sm:$0xf]
    %v1432 = vld [vmem:[#allocation7 + $0xa80] sm:$0xff]
    %v1433 = vld [vmem:[#allocation7 + $0xa88] sm:$0xff]
    %v1434 = vld [vmem:[#allocation7 + $0xa90] sm:$0xff]
    %v1435 = vld [vmem:[#allocation7 + $0xa98] sm:$0xf]
    %v1436 = vld [vmem:[#allocation7 + $0xa9c] sm:$0xff]
    %v1437 = vld [vmem:[#allocation7 + $0xaa4] sm:$0xff]
    %v1438 = vld [vmem:[#allocation7 + $0xaac] sm:$0xff]
    %v1439 = vld [vmem:[#allocation7 + $0xab4] sm:$0xf]
    %v1440 = vld [vmem:[#allocation7 + $0xab8] sm:$0xff]
    %v1441 = vld [vmem:[#allocation7 + $0xac0] sm:$0xff]
    %v1442 = vld [vmem:[#allocation7 + $0xac8] sm:$0xff]
    %v1443 = vld [vmem:[#allocation7 + $0xad0] sm:$0xf]
    %v1444 = vld [vmem:[#allocation7 + $0xad4] sm:$0xff]
    %v1445 = vld [vmem:[#allocation7 + $0xadc] sm:$0xff]
    %v1446 = vld [vmem:[#allocation7 + $0xae4] sm:$0xff]
    %v1447 = vld [vmem:[#allocation7 + $0xaec] sm:$0xf]
    %v1448 = vld [vmem:[#allocation7 + $0xaf0] sm:$0xff]
    %v1449 = vld [vmem:[#allocation7 + $0xaf8] sm:$0xff]
    %v1450 = vld [vmem:[#allocation7 + $0xb00] sm:$0xff]
    %v1451 = vld [vmem:[#allocation7 + $0xb08] sm:$0xf]
    %v1452 = vld [vmem:[#allocation7 + $0xb0c] sm:$0xff]
    %v1453 = vld [vmem:[#allocation7 + $0xb14] sm:$0xff]
    %v1454 = vld [vmem:[#allocation7 + $0xb1c] sm:$0xff]
    %v1455 = vld [vmem:[#allocation7 + $0xb24] sm:$0xf]
    %v1456 = vld [vmem:[#allocation7 + $0xb28] sm:$0xff]
    %v1457 = vld [vmem:[#allocation7 + $0xb30] sm:$0xff]
    %v1458 = vld [vmem:[#allocation7 + $0xb38] sm:$0xff]
    %v1459 = vld [vmem:[#allocation7 + $0xb40] sm:$0xf]
    %v1460 = vld [vmem:[#allocation7 + $0xb44] sm:$0xff]
    %v1461 = vld [vmem:[#allocation7 + $0xb4c] sm:$0xff]
    %v1462 = vld [vmem:[#allocation7 + $0xb54] sm:$0xff]
    %v1463 = vld [vmem:[#allocation7 + $0xb5c] sm:$0xf]
    %v1464 = vld [vmem:[#allocation7 + $0xb60] sm:$0xff]
    %v1465 = vld [vmem:[#allocation7 + $0xb68] sm:$0xff]
    %v1466 = vld [vmem:[#allocation7 + $0xb70] sm:$0xff]
    %v1467 = vld [vmem:[#allocation7 + $0xb78] sm:$0xf]
    %v1468 = vld [vmem:[#allocation7 + $0xb7c] sm:$0xff]
    %v1469 = vld [vmem:[#allocation7 + $0xb84] sm:$0xff]
    %v1470 = vld [vmem:[#allocation7 + $0xb8c] sm:$0xff]
    %v1471 = vld [vmem:[#allocation7 + $0xb94] sm:$0xf]
    %v1472 = vld [vmem:[#allocation7 + $0xb98] sm:$0xff]
    %v1473 = vld [vmem:[#allocation7 + $0xba0] sm:$0xff]
    %v1474 = vld [vmem:[#allocation7 + $0xba8] sm:$0xff]
    %v1475 = vld [vmem:[#allocation7 + $0xbb0] sm:$0xf]
    %v1476 = vld [vmem:[#allocation7 + $0xbb4] sm:$0xff]
    %v1477 = vld [vmem:[#allocation7 + $0xbbc] sm:$0xff]
    %v1478 = vld [vmem:[#allocation7 + $0xbc4] sm:$0xff]
    %v1479 = vld [vmem:[#allocation7 + $0xbcc] sm:$0xf]
    %v1480 = vld [vmem:[#allocation7 + $0xbd0] sm:$0xff]
    %v1481 = vld [vmem:[#allocation7 + $0xbd8] sm:$0xff]
    %v1482 = vld [vmem:[#allocation7 + $0xbe0] sm:$0xff]
    %v1483 = vld [vmem:[#allocation7 + $0xbe8] sm:$0xf]
    %v1484 = vld [vmem:[#allocation7 + $0xbec] sm:$0xff]
    %v1485 = vld [vmem:[#allocation7 + $0xbf4] sm:$0xff]
    %v1486 = vld [vmem:[#allocation7 + $0xbfc] sm:$0xff]
    %v1487 = vld [vmem:[#allocation7 + $0xc04] sm:$0xf]
    %v1488 = vld [vmem:[#allocation7 + $0xc08] sm:$0xff]
    %v1489 = vld [vmem:[#allocation7 + $0xc10] sm:$0xff]
    %v1490 = vld [vmem:[#allocation7 + $0xc18] sm:$0xff]
    %v1491 = vld [vmem:[#allocation7 + $0xc20] sm:$0xf]
    %v1492 = vld [vmem:[#allocation7 + $0xc24] sm:$0xff]
    %v1493 = vld [vmem:[#allocation7 + $0xc2c] sm:$0xff]
    %v1494 = vld [vmem:[#allocation7 + $0xc34] sm:$0xff]
    %v1495 = vld [vmem:[#allocation7 + $0xc3c] sm:$0xf]
    %v1496 = vld [vmem:[#allocation8] sm:$0xff]
    %v1498 = vlaneseq
    %v1499 = vshrl.u32 %v1498, 7
    %v1500 = vsub.s32 0, %v1499
    %v1501 = vrot.slane %v1496, %v1500
    %v1502 = vlaneseq
    %v1503 = vshrl.u32 %v1502, 7
    %v1504 = vsub.s32 1, %v1503
    %v1505 = vrot.slane %v1496, %v1504
    %v1506 = vlaneseq
    %v1507 = vshrl.u32 %v1506, 7
    %v1508 = vsub.s32 2, %v1507
    %v1509 = vrot.slane %v1496, %v1508
    %v1510 = vlaneseq
    %v1511 = vshrl.u32 %v1510, 7
    %v1512 = vsub.s32 3, %v1511
    %v1513 = vrot.slane %v1496, %v1512
    %v1514 = vlaneseq
    %v1515 = vshrl.u32 %v1514, 7
    %v1516 = vsub.s32 4, %v1515
    %v1517 = vrot.slane %v1496, %v1516
    %v1518 = vlaneseq
    %v1519 = vshrl.u32 %v1518, 7
    %v1520 = vsub.s32 5, %v1519
    %v1521 = vrot.slane %v1496, %v1520
    %v1522 = vlaneseq
    %v1523 = vshrl.u32 %v1522, 7
    %v1524 = vsub.s32 6, %v1523
    %v1525 = vrot.slane %v1496, %v1524
    %v1981 = vunpack.c.l.b16 %v1048
    %v1982 = vunpack.c.h.b16 %v1048
    %v1983 = vunpack.c.l.b16 %v1049
    %v1984 = vunpack.c.h.b16 %v1049
    %v1985 = vunpack.c.l.b16 %v1050
    %v1986 = vunpack.c.h.b16 %v1050
    %v1987 = vunpack.c.l.b16 %v1051
    %v1988 = vunpack.c.l.b16 %v1052
    %v1989 = vunpack.c.h.b16 %v1052
    %v1990 = vunpack.c.l.b16 %v1053
    %v1991 = vunpack.c.h.b16 %v1053
    %v1992 = vunpack.c.l.b16 %v1054
    %v1993 = vunpack.c.h.b16 %v1054
    %v1994 = vunpack.c.l.b16 %v1055
    %v1995 = vunpack.c.l.b16 %v1056
    %v1996 = vunpack.c.h.b16 %v1056
    %v1997 = vunpack.c.l.b16 %v1057
    %v1998 = vunpack.c.h.b16 %v1057
    %v1999 = vunpack.c.l.b16 %v1058
    %v2000 = vunpack.c.h.b16 %v1058
    %v2001 = vunpack.c.l.b16 %v1059
    %v2002 = vunpack.c.l.b16 %v1060
    %v2003 = vunpack.c.h.b16 %v1060
    %v2004 = vunpack.c.l.b16 %v1061
    %v2005 = vunpack.c.h.b16 %v1061
    %v2006 = vunpack.c.l.b16 %v1062
    %v2007 = vunpack.c.h.b16 %v1062
    %v2008 = vunpack.c.l.b16 %v1063
    %v2009 = vunpack.c.l.b16 %v1064
    %v2010 = vunpack.c.h.b16 %v1064
    %v2011 = vunpack.c.l.b16 %v1065
    %v2012 = vunpack.c.h.b16 %v1065
    %v2013 = vunpack.c.l.b16 %v1066
    %v2014 = vunpack.c.h.b16 %v1066
    %v2015 = vunpack.c.l.b16 %v1067
    %v2016 = vunpack.c.l.b16 %v1068
    %v2017 = vunpack.c.h.b16 %v1068
    %v2018 = vunpack.c.l.b16 %v1069
    %v2019 = vunpack.c.h.b16 %v1069
    %v2020 = vunpack.c.l.b16 %v1070
    %v2021 = vunpack.c.h.b16 %v1070
    %v2022 = vunpack.c.l.b16 %v1071
    %v2023 = vunpack.c.l.b16 %v1072
    %v2024 = vunpack.c.h.b16 %v1072
    %v2025 = vunpack.c.l.b16 %v1073
    %v2026 = vunpack.c.h.b16 %v1073
    %v2027 = vunpack.c.l.b16 %v1074
    %v2028 = vunpack.c.h.b16 %v1074
    %v2029 = vunpack.c.l.b16 %v1075
    %v2030 = vunpack.c.l.b16 %v1076
    %v2031 = vunpack.c.h.b16 %v1076
    %v2032 = vunpack.c.l.b16 %v1077
    %v2033 = vunpack.c.h.b16 %v1077
    %v2034 = vunpack.c.l.b16 %v1078
    %v2035 = vunpack.c.h.b16 %v1078
    %v2036 = vunpack.c.l.b16 %v1079
    %v2037 = vunpack.c.l.b16 %v1080
    %v2038 = vunpack.c.h.b16 %v1080
    %v2039 = vunpack.c.l.b16 %v1081
    %v2040 = vunpack.c.h.b16 %v1081
    %v2041 = vunpack.c.l.b16 %v1082
    %v2042 = vunpack.c.h.b16 %v1082
    %v2043 = vunpack.c.l.b16 %v1083
    %v2044 = vunpack.c.l.b16 %v1084
    %v2045 = vunpack.c.h.b16 %v1084
    %v2046 = vunpack.c.l.b16 %v1085
    %v2047 = vunpack.c.h.b16 %v1085
    %v2048 = vunpack.c.l.b16 %v1086
    %v2049 = vunpack.c.h.b16 %v1086
    %v2050 = vunpack.c.l.b16 %v1087
    %v2051 = vunpack.c.l.b16 %v1088
    %v2052 = vunpack.c.h.b16 %v1088
    %v2053 = vunpack.c.l.b16 %v1089
    %v2054 = vunpack.c.h.b16 %v1089
    %v2055 = vunpack.c.l.b16 %v1090
    %v2056 = vunpack.c.h.b16 %v1090
    %v2057 = vunpack.c.l.b16 %v1091
    %v2058 = vunpack.c.l.b16 %v1092
    %v2059 = vunpack.c.h.b16 %v1092
    %v2060 = vunpack.c.l.b16 %v1093
    %v2061 = vunpack.c.h.b16 %v1093
    %v2062 = vunpack.c.l.b16 %v1094
    %v2063 = vunpack.c.h.b16 %v1094
    %v2064 = vunpack.c.l.b16 %v1095
    %v2065 = vunpack.c.l.b16 %v1096
    %v2066 = vunpack.c.h.b16 %v1096
    %v2067 = vunpack.c.l.b16 %v1097
    %v2068 = vunpack.c.h.b16 %v1097
    %v2069 = vunpack.c.l.b16 %v1098
    %v2070 = vunpack.c.h.b16 %v1098
    %v2071 = vunpack.c.l.b16 %v1099
    %v2072 = vunpack.c.l.b16 %v1100
    %v2073 = vunpack.c.h.b16 %v1100
    %v2074 = vunpack.c.l.b16 %v1101
    %v2075 = vunpack.c.h.b16 %v1101
    %v2076 = vunpack.c.l.b16 %v1102
    %v2077 = vunpack.c.h.b16 %v1102
    %v2078 = vunpack.c.l.b16 %v1103
    %v2079 = vunpack.c.l.b16 %v1104
    %v2080 = vunpack.c.h.b16 %v1104
    %v2081 = vunpack.c.l.b16 %v1105
    %v2082 = vunpack.c.h.b16 %v1105
    %v2083 = vunpack.c.l.b16 %v1106
    %v2084 = vunpack.c.h.b16 %v1106
    %v2085 = vunpack.c.l.b16 %v1107
    %v2086 = vunpack.c.l.b16 %v1108
    %v2087 = vunpack.c.h.b16 %v1108
    %v2088 = vunpack.c.l.b16 %v1109
    %v2089 = vunpack.c.h.b16 %v1109
    %v2090 = vunpack.c.l.b16 %v1110
    %v2091 = vunpack.c.h.b16 %v1110
    %v2092 = vunpack.c.l.b16 %v1111
    %v2093 = vunpack.c.l.b16 %v1112
    %v2094 = vunpack.c.h.b16 %v1112
    %v2095 = vunpack.c.l.b16 %v1113
    %v2096 = vunpack.c.h.b16 %v1113
    %v2097 = vunpack.c.l.b16 %v1114
    %v2098 = vunpack.c.h.b16 %v1114
    %v2099 = vunpack.c.l.b16 %v1115
    %v2100 = vunpack.c.l.b16 %v1116
    %v2101 = vunpack.c.h.b16 %v1116
    %v2102 = vunpack.c.l.b16 %v1117
    %v2103 = vunpack.c.h.b16 %v1117
    %v2104 = vunpack.c.l.b16 %v1118
    %v2105 = vunpack.c.h.b16 %v1118
    %v2106 = vunpack.c.l.b16 %v1119
    %v2107 = vunpack.c.l.b16 %v1120
    %v2108 = vunpack.c.h.b16 %v1120
    %v2109 = vunpack.c.l.b16 %v1121
    %v2110 = vunpack.c.h.b16 %v1121
    %v2111 = vunpack.c.l.b16 %v1122
    %v2112 = vunpack.c.h.b16 %v1122
    %v2113 = vunpack.c.l.b16 %v1123
    %v2114 = vunpack.c.l.b16 %v1124
    %v2115 = vunpack.c.h.b16 %v1124
    %v2116 = vunpack.c.l.b16 %v1125
    %v2117 = vunpack.c.h.b16 %v1125
    %v2118 = vunpack.c.l.b16 %v1126
    %v2119 = vunpack.c.h.b16 %v1126
    %v2120 = vunpack.c.l.b16 %v1127
    %v2121 = vunpack.c.l.b16 %v1128
    %v2122 = vunpack.c.h.b16 %v1128
    %v2123 = vunpack.c.l.b16 %v1129
    %v2124 = vunpack.c.h.b16 %v1129
    %v2125 = vunpack.c.l.b16 %v1130
    %v2126 = vunpack.c.h.b16 %v1130
    %v2127 = vunpack.c.l.b16 %v1131
    %v2128 = vunpack.c.l.b16 %v1132
    %v2129 = vunpack.c.h.b16 %v1132
    %v2130 = vunpack.c.l.b16 %v1133
    %v2131 = vunpack.c.h.b16 %v1133
    %v2132 = vunpack.c.l.b16 %v1134
    %v2133 = vunpack.c.h.b16 %v1134
    %v2134 = vunpack.c.l.b16 %v1135
    %v2135 = vunpack.c.l.b16 %v1136
    %v2136 = vunpack.c.h.b16 %v1136
    %v2137 = vunpack.c.l.b16 %v1137
    %v2138 = vunpack.c.h.b16 %v1137
    %v2139 = vunpack.c.l.b16 %v1138
    %v2140 = vunpack.c.h.b16 %v1138
    %v2141 = vunpack.c.l.b16 %v1139
    %v2142 = vunpack.c.l.b16 %v1140
    %v2143 = vunpack.c.h.b16 %v1140
    %v2144 = vunpack.c.l.b16 %v1141
    %v2145 = vunpack.c.h.b16 %v1141
    %v2146 = vunpack.c.l.b16 %v1142
    %v2147 = vunpack.c.h.b16 %v1142
    %v2148 = vunpack.c.l.b16 %v1143
    %v2149 = vunpack.c.l.b16 %v1144
    %v2150 = vunpack.c.h.b16 %v1144
    %v2151 = vunpack.c.l.b16 %v1145
    %v2152 = vunpack.c.h.b16 %v1145
    %v2153 = vunpack.c.l.b16 %v1146
    %v2154 = vunpack.c.h.b16 %v1146
    %v2155 = vunpack.c.l.b16 %v1147
    %v2156 = vunpack.c.l.b16 %v1148
    %v2157 = vunpack.c.h.b16 %v1148
    %v2158 = vunpack.c.l.b16 %v1149
    %v2159 = vunpack.c.h.b16 %v1149
    %v2160 = vunpack.c.l.b16 %v1150
    %v2161 = vunpack.c.h.b16 %v1150
    %v2162 = vunpack.c.l.b16 %v1151
    %v2163 = vunpack.c.l.b16 %v1152
    %v2164 = vunpack.c.h.b16 %v1152
    %v2165 = vunpack.c.l.b16 %v1153
    %v2166 = vunpack.c.h.b16 %v1153
    %v2167 = vunpack.c.l.b16 %v1154
    %v2168 = vunpack.c.h.b16 %v1154
    %v2169 = vunpack.c.l.b16 %v1155
    %v2170 = vunpack.c.l.b16 %v1156
    %v2171 = vunpack.c.h.b16 %v1156
    %v2172 = vunpack.c.l.b16 %v1157
    %v2173 = vunpack.c.h.b16 %v1157
    %v2174 = vunpack.c.l.b16 %v1158
    %v2175 = vunpack.c.h.b16 %v1158
    %v2176 = vunpack.c.l.b16 %v1159
    %v2177 = vunpack.c.l.b16 %v1160
    %v2178 = vunpack.c.h.b16 %v1160
    %v2179 = vunpack.c.l.b16 %v1161
    %v2180 = vunpack.c.h.b16 %v1161
    %v2181 = vunpack.c.l.b16 %v1162
    %v2182 = vunpack.c.h.b16 %v1162
    %v2183 = vunpack.c.l.b16 %v1163
    %v2184 = vunpack.c.l.b16 %v1164
    %v2185 = vunpack.c.h.b16 %v1164
    %v2186 = vunpack.c.l.b16 %v1165
    %v2187 = vunpack.c.h.b16 %v1165
    %v2188 = vunpack.c.l.b16 %v1166
    %v2189 = vunpack.c.h.b16 %v1166
    %v2190 = vunpack.c.l.b16 %v1167
    %v2191 = vunpack.c.l.b16 %v1168
    %v2192 = vunpack.c.h.b16 %v1168
    %v2193 = vunpack.c.l.b16 %v1169
    %v2194 = vunpack.c.h.b16 %v1169
    %v2195 = vunpack.c.l.b16 %v1170
    %v2196 = vunpack.c.h.b16 %v1170
    %v2197 = vunpack.c.l.b16 %v1171
    %v2198 = vunpack.c.l.b16 %v1172
    %v2199 = vunpack.c.h.b16 %v1172
    %v2200 = vunpack.c.l.b16 %v1173
    %v2201 = vunpack.c.h.b16 %v1173
    %v2202 = vunpack.c.l.b16 %v1174
    %v2203 = vunpack.c.h.b16 %v1174
    %v2204 = vunpack.c.l.b16 %v1175
    %v2205 = vunpack.c.l.b16 %v1176
    %v2206 = vunpack.c.h.b16 %v1176
    %v2207 = vunpack.c.l.b16 %v1177
    %v2208 = vunpack.c.h.b16 %v1177
    %v2209 = vunpack.c.l.b16 %v1178
    %v2210 = vunpack.c.h.b16 %v1178
    %v2211 = vunpack.c.l.b16 %v1179
    %v2212 = vunpack.c.l.b16 %v1180
    %v2213 = vunpack.c.h.b16 %v1180
    %v2214 = vunpack.c.l.b16 %v1181
    %v2215 = vunpack.c.h.b16 %v1181
    %v2216 = vunpack.c.l.b16 %v1182
    %v2217 = vunpack.c.h.b16 %v1182
    %v2218 = vunpack.c.l.b16 %v1183
    %v2219 = vunpack.c.l.b16 %v1184
    %v2220 = vunpack.c.h.b16 %v1184
    %v2221 = vunpack.c.l.b16 %v1185
    %v2222 = vunpack.c.h.b16 %v1185
    %v2223 = vunpack.c.l.b16 %v1186
    %v2224 = vunpack.c.h.b16 %v1186
    %v2225 = vunpack.c.l.b16 %v1187
    %v2226 = vunpack.c.l.b16 %v1188
    %v2227 = vunpack.c.h.b16 %v1188
    %v2228 = vunpack.c.l.b16 %v1189
    %v2229 = vunpack.c.h.b16 %v1189
    %v2230 = vunpack.c.l.b16 %v1190
    %v2231 = vunpack.c.h.b16 %v1190
    %v2232 = vunpack.c.l.b16 %v1191
    %v2233 = vunpack.c.l.b16 %v1192
    %v2234 = vunpack.c.h.b16 %v1192
    %v2235 = vunpack.c.l.b16 %v1193
    %v2236 = vunpack.c.h.b16 %v1193
    %v2237 = vunpack.c.l.b16 %v1194
    %v2238 = vunpack.c.h.b16 %v1194
    %v2239 = vunpack.c.l.b16 %v1195
    %v2240 = vunpack.c.l.b16 %v1196
    %v2241 = vunpack.c.h.b16 %v1196
    %v2242 = vunpack.c.l.b16 %v1197
    %v2243 = vunpack.c.h.b16 %v1197
    %v2244 = vunpack.c.l.b16 %v1198
    %v2245 = vunpack.c.h.b16 %v1198
    %v2246 = vunpack.c.l.b16 %v1199
    %v2247 = vunpack.c.l.b16 %v1200
    %v2248 = vunpack.c.h.b16 %v1200
    %v2249 = vunpack.c.l.b16 %v1201
    %v2250 = vunpack.c.h.b16 %v1201
    %v2251 = vunpack.c.l.b16 %v1202
    %v2252 = vunpack.c.h.b16 %v1202
    %v2253 = vunpack.c.l.b16 %v1203
    %v2254 = vunpack.c.l.b16 %v1204
    %v2255 = vunpack.c.h.b16 %v1204
    %v2256 = vunpack.c.l.b16 %v1205
    %v2257 = vunpack.c.h.b16 %v1205
    %v2258 = vunpack.c.l.b16 %v1206
    %v2259 = vunpack.c.h.b16 %v1206
    %v2260 = vunpack.c.l.b16 %v1207
    %v2261 = vunpack.c.l.b16 %v1208
    %v2262 = vunpack.c.h.b16 %v1208
    %v2263 = vunpack.c.l.b16 %v1209
    %v2264 = vunpack.c.h.b16 %v1209
    %v2265 = vunpack.c.l.b16 %v1210
    %v2266 = vunpack.c.h.b16 %v1210
    %v2267 = vunpack.c.l.b16 %v1211
    %v2268 = vunpack.c.l.b16 %v1212
    %v2269 = vunpack.c.h.b16 %v1212
    %v2270 = vunpack.c.l.b16 %v1213
    %v2271 = vunpack.c.h.b16 %v1213
    %v2272 = vunpack.c.l.b16 %v1214
    %v2273 = vunpack.c.h.b16 %v1214
    %v2274 = vunpack.c.l.b16 %v1215
    %v2275 = vunpack.c.l.b16 %v1216
    %v2276 = vunpack.c.h.b16 %v1216
    %v2277 = vunpack.c.l.b16 %v1217
    %v2278 = vunpack.c.h.b16 %v1217
    %v2279 = vunpack.c.l.b16 %v1218
    %v2280 = vunpack.c.h.b16 %v1218
    %v2281 = vunpack.c.l.b16 %v1219
    %v2282 = vunpack.c.l.b16 %v1220
    %v2283 = vunpack.c.h.b16 %v1220
    %v2284 = vunpack.c.l.b16 %v1221
    %v2285 = vunpack.c.h.b16 %v1221
    %v2286 = vunpack.c.l.b16 %v1222
    %v2287 = vunpack.c.h.b16 %v1222
    %v2288 = vunpack.c.l.b16 %v1223
    %v2289 = vunpack.c.l.b16 %v1224
    %v2290 = vunpack.c.h.b16 %v1224
    %v2291 = vunpack.c.l.b16 %v1225
    %v2292 = vunpack.c.h.b16 %v1225
    %v2293 = vunpack.c.l.b16 %v1226
    %v2294 = vunpack.c.h.b16 %v1226
    %v2295 = vunpack.c.l.b16 %v1227
    %v2296 = vunpack.c.l.b16 %v1228
    %v2297 = vunpack.c.h.b16 %v1228
    %v2298 = vunpack.c.l.b16 %v1229
    %v2299 = vunpack.c.h.b16 %v1229
    %v2300 = vunpack.c.l.b16 %v1230
    %v2301 = vunpack.c.h.b16 %v1230
    %v2302 = vunpack.c.l.b16 %v1231
    %v2303 = vunpack.c.l.b16 %v1232
    %v2304 = vunpack.c.h.b16 %v1232
    %v2305 = vunpack.c.l.b16 %v1233
    %v2306 = vunpack.c.h.b16 %v1233
    %v2307 = vunpack.c.l.b16 %v1234
    %v2308 = vunpack.c.h.b16 %v1234
    %v2309 = vunpack.c.l.b16 %v1235
    %v2310 = vunpack.c.l.b16 %v1236
    %v2311 = vunpack.c.h.b16 %v1236
    %v2312 = vunpack.c.l.b16 %v1237
    %v2313 = vunpack.c.h.b16 %v1237
    %v2314 = vunpack.c.l.b16 %v1238
    %v2315 = vunpack.c.h.b16 %v1238
    %v2316 = vunpack.c.l.b16 %v1239
    %v2317 = vunpack.c.l.b16 %v1240
    %v2318 = vunpack.c.h.b16 %v1240
    %v2319 = vunpack.c.l.b16 %v1241
    %v2320 = vunpack.c.h.b16 %v1241
    %v2321 = vunpack.c.l.b16 %v1242
    %v2322 = vunpack.c.h.b16 %v1242
    %v2323 = vunpack.c.l.b16 %v1243
    %v2324 = vunpack.c.l.b16 %v1244
    %v2325 = vunpack.c.h.b16 %v1244
    %v2326 = vunpack.c.l.b16 %v1245
    %v2327 = vunpack.c.h.b16 %v1245
    %v2328 = vunpack.c.l.b16 %v1246
    %v2329 = vunpack.c.h.b16 %v1246
    %v2330 = vunpack.c.l.b16 %v1247
    %v2331 = vunpack.c.l.b16 %v1248
    %v2332 = vunpack.c.h.b16 %v1248
    %v2333 = vunpack.c.l.b16 %v1249
    %v2334 = vunpack.c.h.b16 %v1249
    %v2335 = vunpack.c.l.b16 %v1250
    %v2336 = vunpack.c.h.b16 %v1250
    %v2337 = vunpack.c.l.b16 %v1251
    %v2338 = vunpack.c.l.b16 %v1252
    %v2339 = vunpack.c.h.b16 %v1252
    %v2340 = vunpack.c.l.b16 %v1253
    %v2341 = vunpack.c.h.b16 %v1253
    %v2342 = vunpack.c.l.b16 %v1254
    %v2343 = vunpack.c.h.b16 %v1254
    %v2344 = vunpack.c.l.b16 %v1255
    %v2345 = vunpack.c.l.b16 %v1256
    %v2346 = vunpack.c.h.b16 %v1256
    %v2347 = vunpack.c.l.b16 %v1257
    %v2348 = vunpack.c.h.b16 %v1257
    %v2349 = vunpack.c.l.b16 %v1258
    %v2350 = vunpack.c.h.b16 %v1258
    %v2351 = vunpack.c.l.b16 %v1259
    %v2352 = vunpack.c.l.b16 %v1260
    %v2353 = vunpack.c.h.b16 %v1260
    %v2354 = vunpack.c.l.b16 %v1261
    %v2355 = vunpack.c.h.b16 %v1261
    %v2356 = vunpack.c.l.b16 %v1262
    %v2357 = vunpack.c.h.b16 %v1262
    %v2358 = vunpack.c.l.b16 %v1263
    %v2359 = vunpack.c.l.b16 %v1264
    %v2360 = vunpack.c.h.b16 %v1264
    %v2361 = vunpack.c.l.b16 %v1265
    %v2362 = vunpack.c.h.b16 %v1265
    %v2363 = vunpack.c.l.b16 %v1266
    %v2364 = vunpack.c.h.b16 %v1266
    %v2365 = vunpack.c.l.b16 %v1267
    %v2366 = vunpack.c.l.b16 %v1268
    %v2367 = vunpack.c.h.b16 %v1268
    %v2368 = vunpack.c.l.b16 %v1269
    %v2369 = vunpack.c.h.b16 %v1269
    %v2370 = vunpack.c.l.b16 %v1270
    %v2371 = vunpack.c.h.b16 %v1270
    %v2372 = vunpack.c.l.b16 %v1271
    %v2373 = vunpack.c.l.b16 %v1272
    %v2374 = vunpack.c.h.b16 %v1272
    %v2375 = vunpack.c.l.b16 %v1273
    %v2376 = vunpack.c.h.b16 %v1273
    %v2377 = vunpack.c.l.b16 %v1274
    %v2378 = vunpack.c.h.b16 %v1274
    %v2379 = vunpack.c.l.b16 %v1275
    %v2380 = vunpack.c.l.b16 %v1276
    %v2381 = vunpack.c.h.b16 %v1276
    %v2382 = vunpack.c.l.b16 %v1277
    %v2383 = vunpack.c.h.b16 %v1277
    %v2384 = vunpack.c.l.b16 %v1278
    %v2385 = vunpack.c.h.b16 %v1278
    %v2386 = vunpack.c.l.b16 %v1279
    %v2387 = vunpack.c.l.b16 %v1280
    %v2388 = vunpack.c.h.b16 %v1280
    %v2389 = vunpack.c.l.b16 %v1281
    %v2390 = vunpack.c.h.b16 %v1281
    %v2391 = vunpack.c.l.b16 %v1282
    %v2392 = vunpack.c.h.b16 %v1282
    %v2393 = vunpack.c.l.b16 %v1283
    %v2394 = vunpack.c.l.b16 %v1284
    %v2395 = vunpack.c.h.b16 %v1284
    %v2396 = vunpack.c.l.b16 %v1285
    %v2397 = vunpack.c.h.b16 %v1285
    %v2398 = vunpack.c.l.b16 %v1286
    %v2399 = vunpack.c.h.b16 %v1286
    %v2400 = vunpack.c.l.b16 %v1287
    %v2401 = vunpack.c.l.b16 %v1288
    %v2402 = vunpack.c.h.b16 %v1288
    %v2403 = vunpack.c.l.b16 %v1289
    %v2404 = vunpack.c.h.b16 %v1289
    %v2405 = vunpack.c.l.b16 %v1290
    %v2406 = vunpack.c.h.b16 %v1290
    %v2407 = vunpack.c.l.b16 %v1291
    %v2408 = vunpack.c.l.b16 %v1292
    %v2409 = vunpack.c.h.b16 %v1292
    %v2410 = vunpack.c.l.b16 %v1293
    %v2411 = vunpack.c.h.b16 %v1293
    %v2412 = vunpack.c.l.b16 %v1294
    %v2413 = vunpack.c.h.b16 %v1294
    %v2414 = vunpack.c.l.b16 %v1295
    %v2415 = vunpack.c.l.b16 %v1296
    %v2416 = vunpack.c.h.b16 %v1296
    %v2417 = vunpack.c.l.b16 %v1297
    %v2418 = vunpack.c.h.b16 %v1297
    %v2419 = vunpack.c.l.b16 %v1298
    %v2420 = vunpack.c.h.b16 %v1298
    %v2421 = vunpack.c.l.b16 %v1299
    %v2422 = vunpack.c.l.b16 %v1300
    %v2423 = vunpack.c.h.b16 %v1300
    %v2424 = vunpack.c.l.b16 %v1301
    %v2425 = vunpack.c.h.b16 %v1301
    %v2426 = vunpack.c.l.b16 %v1302
    %v2427 = vunpack.c.h.b16 %v1302
    %v2428 = vunpack.c.l.b16 %v1303
    %v2429 = vunpack.c.l.b16 %v1304
    %v2430 = vunpack.c.h.b16 %v1304
    %v2431 = vunpack.c.l.b16 %v1305
    %v2432 = vunpack.c.h.b16 %v1305
    %v2433 = vunpack.c.l.b16 %v1306
    %v2434 = vunpack.c.h.b16 %v1306
    %v2435 = vunpack.c.l.b16 %v1307
    %v2436 = vunpack.c.l.b16 %v1308
    %v2437 = vunpack.c.h.b16 %v1308
    %v2438 = vunpack.c.l.b16 %v1309
    %v2439 = vunpack.c.h.b16 %v1309
    %v2440 = vunpack.c.l.b16 %v1310
    %v2441 = vunpack.c.h.b16 %v1310
    %v2442 = vunpack.c.l.b16 %v1311
    %v2443 = vunpack.c.l.b16 %v1312
    %v2444 = vunpack.c.h.b16 %v1312
    %v2445 = vunpack.c.l.b16 %v1313
    %v2446 = vunpack.c.h.b16 %v1313
    %v2447 = vunpack.c.l.b16 %v1314
    %v2448 = vunpack.c.h.b16 %v1314
    %v2449 = vunpack.c.l.b16 %v1315
    %v2450 = vunpack.c.l.b16 %v1316
    %v2451 = vunpack.c.h.b16 %v1316
    %v2452 = vunpack.c.l.b16 %v1317
    %v2453 = vunpack.c.h.b16 %v1317
    %v2454 = vunpack.c.l.b16 %v1318
    %v2455 = vunpack.c.h.b16 %v1318
    %v2456 = vunpack.c.l.b16 %v1319
    %v2457 = vunpack.c.l.b16 %v1320
    %v2458 = vunpack.c.h.b16 %v1320
    %v2459 = vunpack.c.l.b16 %v1321
    %v2460 = vunpack.c.h.b16 %v1321
    %v2461 = vunpack.c.l.b16 %v1322
    %v2462 = vunpack.c.h.b16 %v1322
    %v2463 = vunpack.c.l.b16 %v1323
    %v2464 = vunpack.c.l.b16 %v1324
    %v2465 = vunpack.c.h.b16 %v1324
    %v2466 = vunpack.c.l.b16 %v1325
    %v2467 = vunpack.c.h.b16 %v1325
    %v2468 = vunpack.c.l.b16 %v1326
    %v2469 = vunpack.c.h.b16 %v1326
    %v2470 = vunpack.c.l.b16 %v1327
    %v2471 = vunpack.c.l.b16 %v1328
    %v2472 = vunpack.c.h.b16 %v1328
    %v2473 = vunpack.c.l.b16 %v1329
    %v2474 = vunpack.c.h.b16 %v1329
    %v2475 = vunpack.c.l.b16 %v1330
    %v2476 = vunpack.c.h.b16 %v1330
    %v2477 = vunpack.c.l.b16 %v1331
    %v2478 = vunpack.c.l.b16 %v1332
    %v2479 = vunpack.c.h.b16 %v1332
    %v2480 = vunpack.c.l.b16 %v1333
    %v2481 = vunpack.c.h.b16 %v1333
    %v2482 = vunpack.c.l.b16 %v1334
    %v2483 = vunpack.c.h.b16 %v1334
    %v2484 = vunpack.c.l.b16 %v1335
    %v2485 = vunpack.c.l.b16 %v1336
    %v2486 = vunpack.c.h.b16 %v1336
    %v2487 = vunpack.c.l.b16 %v1337
    %v2488 = vunpack.c.h.b16 %v1337
    %v2489 = vunpack.c.l.b16 %v1338
    %v2490 = vunpack.c.h.b16 %v1338
    %v2491 = vunpack.c.l.b16 %v1339
    %v2492 = vunpack.c.l.b16 %v1340
    %v2493 = vunpack.c.h.b16 %v1340
    %v2494 = vunpack.c.l.b16 %v1341
    %v2495 = vunpack.c.h.b16 %v1341
    %v2496 = vunpack.c.l.b16 %v1342
    %v2497 = vunpack.c.h.b16 %v1342
    %v2498 = vunpack.c.l.b16 %v1343
    %v2499 = vunpack.c.l.b16 %v1344
    %v2500 = vunpack.c.h.b16 %v1344
    %v2501 = vunpack.c.l.b16 %v1345
    %v2502 = vunpack.c.h.b16 %v1345
    %v2503 = vunpack.c.l.b16 %v1346
    %v2504 = vunpack.c.h.b16 %v1346
    %v2505 = vunpack.c.l.b16 %v1347
    %v2506 = vunpack.c.l.b16 %v1348
    %v2507 = vunpack.c.h.b16 %v1348
    %v2508 = vunpack.c.l.b16 %v1349
    %v2509 = vunpack.c.h.b16 %v1349
    %v2510 = vunpack.c.l.b16 %v1350
    %v2511 = vunpack.c.h.b16 %v1350
    %v2512 = vunpack.c.l.b16 %v1351
    %v2513 = vunpack.c.l.b16 %v1352
    %v2514 = vunpack.c.h.b16 %v1352
    %v2515 = vunpack.c.l.b16 %v1353
    %v2516 = vunpack.c.h.b16 %v1353
    %v2517 = vunpack.c.l.b16 %v1354
    %v2518 = vunpack.c.h.b16 %v1354
    %v2519 = vunpack.c.l.b16 %v1355
    %v2520 = vunpack.c.l.b16 %v1356
    %v2521 = vunpack.c.h.b16 %v1356
    %v2522 = vunpack.c.l.b16 %v1357
    %v2523 = vunpack.c.h.b16 %v1357
    %v2524 = vunpack.c.l.b16 %v1358
    %v2525 = vunpack.c.h.b16 %v1358
    %v2526 = vunpack.c.l.b16 %v1359
    %v2527 = vunpack.c.l.b16 %v1360
    %v2528 = vunpack.c.h.b16 %v1360
    %v2529 = vunpack.c.l.b16 %v1361
    %v2530 = vunpack.c.h.b16 %v1361
    %v2531 = vunpack.c.l.b16 %v1362
    %v2532 = vunpack.c.h.b16 %v1362
    %v2533 = vunpack.c.l.b16 %v1363
    %v2534 = vunpack.c.l.b16 %v1364
    %v2535 = vunpack.c.h.b16 %v1364
    %v2536 = vunpack.c.l.b16 %v1365
    %v2537 = vunpack.c.h.b16 %v1365
    %v2538 = vunpack.c.l.b16 %v1366
    %v2539 = vunpack.c.h.b16 %v1366
    %v2540 = vunpack.c.l.b16 %v1367
    %v2541 = vunpack.c.l.b16 %v1368
    %v2542 = vunpack.c.h.b16 %v1368
    %v2543 = vunpack.c.l.b16 %v1369
    %v2544 = vunpack.c.h.b16 %v1369
    %v2545 = vunpack.c.l.b16 %v1370
    %v2546 = vunpack.c.h.b16 %v1370
    %v2547 = vunpack.c.l.b16 %v1371
    %v2548 = vunpack.c.l.b16 %v1372
    %v2549 = vunpack.c.h.b16 %v1372
    %v2550 = vunpack.c.l.b16 %v1373
    %v2551 = vunpack.c.h.b16 %v1373
    %v2552 = vunpack.c.l.b16 %v1374
    %v2553 = vunpack.c.h.b16 %v1374
    %v2554 = vunpack.c.l.b16 %v1375
    %v2555 = vunpack.c.l.b16 %v1376
    %v2556 = vunpack.c.h.b16 %v1376
    %v2557 = vunpack.c.l.b16 %v1377
    %v2558 = vunpack.c.h.b16 %v1377
    %v2559 = vunpack.c.l.b16 %v1378
    %v2560 = vunpack.c.h.b16 %v1378
    %v2561 = vunpack.c.l.b16 %v1379
    %v2562 = vunpack.c.l.b16 %v1380
    %v2563 = vunpack.c.h.b16 %v1380
    %v2564 = vunpack.c.l.b16 %v1381
    %v2565 = vunpack.c.h.b16 %v1381
    %v2566 = vunpack.c.l.b16 %v1382
    %v2567 = vunpack.c.h.b16 %v1382
    %v2568 = vunpack.c.l.b16 %v1383
    %v2569 = vunpack.c.l.b16 %v1384
    %v2570 = vunpack.c.h.b16 %v1384
    %v2571 = vunpack.c.l.b16 %v1385
    %v2572 = vunpack.c.h.b16 %v1385
    %v2573 = vunpack.c.l.b16 %v1386
    %v2574 = vunpack.c.h.b16 %v1386
    %v2575 = vunpack.c.l.b16 %v1387
    %v2576 = vunpack.c.l.b16 %v1388
    %v2577 = vunpack.c.h.b16 %v1388
    %v2578 = vunpack.c.l.b16 %v1389
    %v2579 = vunpack.c.h.b16 %v1389
    %v2580 = vunpack.c.l.b16 %v1390
    %v2581 = vunpack.c.h.b16 %v1390
    %v2582 = vunpack.c.l.b16 %v1391
    %v2583 = vunpack.c.l.b16 %v1392
    %v2584 = vunpack.c.h.b16 %v1392
    %v2585 = vunpack.c.l.b16 %v1393
    %v2586 = vunpack.c.h.b16 %v1393
    %v2587 = vunpack.c.l.b16 %v1394
    %v2588 = vunpack.c.h.b16 %v1394
    %v2589 = vunpack.c.l.b16 %v1395
    %v2590 = vunpack.c.l.b16 %v1396
    %v2591 = vunpack.c.h.b16 %v1396
    %v2592 = vunpack.c.l.b16 %v1397
    %v2593 = vunpack.c.h.b16 %v1397
    %v2594 = vunpack.c.l.b16 %v1398
    %v2595 = vunpack.c.h.b16 %v1398
    %v2596 = vunpack.c.l.b16 %v1399
    %v2597 = vunpack.c.l.b16 %v1400
    %v2598 = vunpack.c.h.b16 %v1400
    %v2599 = vunpack.c.l.b16 %v1401
    %v2600 = vunpack.c.h.b16 %v1401
    %v2601 = vunpack.c.l.b16 %v1402
    %v2602 = vunpack.c.h.b16 %v1402
    %v2603 = vunpack.c.l.b16 %v1403
    %v2604 = vunpack.c.l.b16 %v1404
    %v2605 = vunpack.c.h.b16 %v1404
    %v2606 = vunpack.c.l.b16 %v1405
    %v2607 = vunpack.c.h.b16 %v1405
    %v2608 = vunpack.c.l.b16 %v1406
    %v2609 = vunpack.c.h.b16 %v1406
    %v2610 = vunpack.c.l.b16 %v1407
    %v2611 = vunpack.c.l.b16 %v1408
    %v2612 = vunpack.c.h.b16 %v1408
    %v2613 = vunpack.c.l.b16 %v1409
    %v2614 = vunpack.c.h.b16 %v1409
    %v2615 = vunpack.c.l.b16 %v1410
    %v2616 = vunpack.c.h.b16 %v1410
    %v2617 = vunpack.c.l.b16 %v1411
    %v2618 = vunpack.c.l.b16 %v1412
    %v2619 = vunpack.c.h.b16 %v1412
    %v2620 = vunpack.c.l.b16 %v1413
    %v2621 = vunpack.c.h.b16 %v1413
    %v2622 = vunpack.c.l.b16 %v1414
    %v2623 = vunpack.c.h.b16 %v1414
    %v2624 = vunpack.c.l.b16 %v1415
    %v2625 = vunpack.c.l.b16 %v1416
    %v2626 = vunpack.c.h.b16 %v1416
    %v2627 = vunpack.c.l.b16 %v1417
    %v2628 = vunpack.c.h.b16 %v1417
    %v2629 = vunpack.c.l.b16 %v1418
    %v2630 = vunpack.c.h.b16 %v1418
    %v2631 = vunpack.c.l.b16 %v1419
    %v2632 = vunpack.c.l.b16 %v1420
    %v2633 = vunpack.c.h.b16 %v1420
    %v2634 = vunpack.c.l.b16 %v1421
    %v2635 = vunpack.c.h.b16 %v1421
    %v2636 = vunpack.c.l.b16 %v1422
    %v2637 = vunpack.c.h.b16 %v1422
    %v2638 = vunpack.c.l.b16 %v1423
    %v2639 = vunpack.c.l.b16 %v1424
    %v2640 = vunpack.c.h.b16 %v1424
    %v2641 = vunpack.c.l.b16 %v1425
    %v2642 = vunpack.c.h.b16 %v1425
    %v2643 = vunpack.c.l.b16 %v1426
    %v2644 = vunpack.c.h.b16 %v1426
    %v2645 = vunpack.c.l.b16 %v1427
    %v2646 = vunpack.c.l.b16 %v1428
    %v2647 = vunpack.c.h.b16 %v1428
    %v2648 = vunpack.c.l.b16 %v1429
    %v2649 = vunpack.c.h.b16 %v1429
    %v2650 = vunpack.c.l.b16 %v1430
    %v2651 = vunpack.c.h.b16 %v1430
    %v2652 = vunpack.c.l.b16 %v1431
    %v2653 = vunpack.c.l.b16 %v1432
    %v2654 = vunpack.c.h.b16 %v1432
    %v2655 = vunpack.c.l.b16 %v1433
    %v2656 = vunpack.c.h.b16 %v1433
    %v2657 = vunpack.c.l.b16 %v1434
    %v2658 = vunpack.c.h.b16 %v1434
    %v2659 = vunpack.c.l.b16 %v1435
    %v2660 = vunpack.c.l.b16 %v1436
    %v2661 = vunpack.c.h.b16 %v1436
    %v2662 = vunpack.c.l.b16 %v1437
    %v2663 = vunpack.c.h.b16 %v1437
    %v2664 = vunpack.c.l.b16 %v1438
    %v2665 = vunpack.c.h.b16 %v1438
    %v2666 = vunpack.c.l.b16 %v1439
    %v2667 = vunpack.c.l.b16 %v1440
    %v2668 = vunpack.c.h.b16 %v1440
    %v2669 = vunpack.c.l.b16 %v1441
    %v2670 = vunpack.c.h.b16 %v1441
    %v2671 = vunpack.c.l.b16 %v1442
    %v2672 = vunpack.c.h.b16 %v1442
    %v2673 = vunpack.c.l.b16 %v1443
    %v2674 = vunpack.c.l.b16 %v1444
    %v2675 = vunpack.c.h.b16 %v1444
    %v2676 = vunpack.c.l.b16 %v1445
    %v2677 = vunpack.c.h.b16 %v1445
    %v2678 = vunpack.c.l.b16 %v1446
    %v2679 = vunpack.c.h.b16 %v1446
    %v2680 = vunpack.c.l.b16 %v1447
    %v2681 = vunpack.c.l.b16 %v1448
    %v2682 = vunpack.c.h.b16 %v1448
    %v2683 = vunpack.c.l.b16 %v1449
    %v2684 = vunpack.c.h.b16 %v1449
    %v2685 = vunpack.c.l.b16 %v1450
    %v2686 = vunpack.c.h.b16 %v1450
    %v2687 = vunpack.c.l.b16 %v1451
    %v2688 = vunpack.c.l.b16 %v1452
    %v2689 = vunpack.c.h.b16 %v1452
    %v2690 = vunpack.c.l.b16 %v1453
    %v2691 = vunpack.c.h.b16 %v1453
    %v2692 = vunpack.c.l.b16 %v1454
    %v2693 = vunpack.c.h.b16 %v1454
    %v2694 = vunpack.c.l.b16 %v1455
    %v2695 = vunpack.c.l.b16 %v1456
    %v2696 = vunpack.c.h.b16 %v1456
    %v2697 = vunpack.c.l.b16 %v1457
    %v2698 = vunpack.c.h.b16 %v1457
    %v2699 = vunpack.c.l.b16 %v1458
    %v2700 = vunpack.c.h.b16 %v1458
    %v2701 = vunpack.c.l.b16 %v1459
    %v2702 = vunpack.c.l.b16 %v1460
    %v2703 = vunpack.c.h.b16 %v1460
    %v2704 = vunpack.c.l.b16 %v1461
    %v2705 = vunpack.c.h.b16 %v1461
    %v2706 = vunpack.c.l.b16 %v1462
    %v2707 = vunpack.c.h.b16 %v1462
    %v2708 = vunpack.c.l.b16 %v1463
    %v2709 = vunpack.c.l.b16 %v1464
    %v2710 = vunpack.c.h.b16 %v1464
    %v2711 = vunpack.c.l.b16 %v1465
    %v2712 = vunpack.c.h.b16 %v1465
    %v2713 = vunpack.c.l.b16 %v1466
    %v2714 = vunpack.c.h.b16 %v1466
    %v2715 = vunpack.c.l.b16 %v1467
    %v2716 = vunpack.c.l.b16 %v1468
    %v2717 = vunpack.c.h.b16 %v1468
    %v2718 = vunpack.c.l.b16 %v1469
    %v2719 = vunpack.c.h.b16 %v1469
    %v2720 = vunpack.c.l.b16 %v1470
    %v2721 = vunpack.c.h.b16 %v1470
    %v2722 = vunpack.c.l.b16 %v1471
    %v2723 = vunpack.c.l.b16 %v1472
    %v2724 = vunpack.c.h.b16 %v1472
    %v2725 = vunpack.c.l.b16 %v1473
    %v2726 = vunpack.c.h.b16 %v1473
    %v2727 = vunpack.c.l.b16 %v1474
    %v2728 = vunpack.c.h.b16 %v1474
    %v2729 = vunpack.c.l.b16 %v1475
    %v2730 = vunpack.c.l.b16 %v1476
    %v2731 = vunpack.c.h.b16 %v1476
    %v2732 = vunpack.c.l.b16 %v1477
    %v2733 = vunpack.c.h.b16 %v1477
    %v2734 = vunpack.c.l.b16 %v1478
    %v2735 = vunpack.c.h.b16 %v1478
    %v2736 = vunpack.c.l.b16 %v1479
    %v2737 = vunpack.c.l.b16 %v1480
    %v2738 = vunpack.c.h.b16 %v1480
    %v2739 = vunpack.c.l.b16 %v1481
    %v2740 = vunpack.c.h.b16 %v1481
    %v2741 = vunpack.c.l.b16 %v1482
    %v2742 = vunpack.c.h.b16 %v1482
    %v2743 = vunpack.c.l.b16 %v1483
    %v2744 = vunpack.c.l.b16 %v1484
    %v2745 = vunpack.c.h.b16 %v1484
    %v2746 = vunpack.c.l.b16 %v1485
    %v2747 = vunpack.c.h.b16 %v1485
    %v2748 = vunpack.c.l.b16 %v1486
    %v2749 = vunpack.c.h.b16 %v1486
    %v2750 = vunpack.c.l.b16 %v1487
    %v2751 = vunpack.c.l.b16 %v1488
    %v2752 = vunpack.c.h.b16 %v1488
    %v2753 = vunpack.c.l.b16 %v1489
    %v2754 = vunpack.c.h.b16 %v1489
    %v2755 = vunpack.c.l.b16 %v1490
    %v2756 = vunpack.c.h.b16 %v1490
    %v2757 = vunpack.c.l.b16 %v1491
    %v2758 = vunpack.c.l.b16 %v1492
    %v2759 = vunpack.c.h.b16 %v1492
    %v2760 = vunpack.c.l.b16 %v1493
    %v2761 = vunpack.c.h.b16 %v1493
    %v2762 = vunpack.c.l.b16 %v1494
    %v2763 = vunpack.c.h.b16 %v1494
    %v2764 = vunpack.c.l.b16 %v1495
    %v2765 = vpack.c.b16 %v1988, %v1981
    %v2766 = vpack.c.b16 %v1989, %v1982
    %v2767 = vpack.c.b16 %v1990, %v1983
    %v2768 = vpack.c.b16 %v1991, %v1984
    %v2769 = vpack.c.b16 %v1992, %v1985
    %v2770 = vpack.c.b16 %v1993, %v1986
    %v2771 = vpack.c.b16 %v1994, %v1987
    %v2772 = vpack.c.b16 %v2002, %v1995
    %v2773 = vpack.c.b16 %v2003, %v1996
    %v2774 = vpack.c.b16 %v2004, %v1997
    %v2775 = vpack.c.b16 %v2005, %v1998
    %v2776 = vpack.c.b16 %v2006, %v1999
    %v2777 = vpack.c.b16 %v2007, %v2000
    %v2778 = vpack.c.b16 %v2008, %v2001
    %v2779 = vpack.c.b16 %v2016, %v2009
    %v2780 = vpack.c.b16 %v2017, %v2010
    %v2781 = vpack.c.b16 %v2018, %v2011
    %v2782 = vpack.c.b16 %v2019, %v2012
    %v2783 = vpack.c.b16 %v2020, %v2013
    %v2784 = vpack.c.b16 %v2021, %v2014
    %v2785 = vpack.c.b16 %v2022, %v2015
    %v2786 = vpack.c.b16 %v2030, %v2023
    %v2787 = vpack.c.b16 %v2031, %v2024
    %v2788 = vpack.c.b16 %v2032, %v2025
    %v2789 = vpack.c.b16 %v2033, %v2026
    %v2790 = vpack.c.b16 %v2034, %v2027
    %v2791 = vpack.c.b16 %v2035, %v2028
    %v2792 = vpack.c.b16 %v2036, %v2029
    %v2793 = vpack.c.b16 %v2044, %v2037
    %v2794 = vpack.c.b16 %v2045, %v2038
    %v2795 = vpack.c.b16 %v2046, %v2039
    %v2796 = vpack.c.b16 %v2047, %v2040
    %v2797 = vpack.c.b16 %v2048, %v2041
    %v2798 = vpack.c.b16 %v2049, %v2042
    %v2799 = vpack.c.b16 %v2050, %v2043
    %v2800 = vpack.c.b16 %v2058, %v2051
    %v2801 = vpack.c.b16 %v2059, %v2052
    %v2802 = vpack.c.b16 %v2060, %v2053
    %v2803 = vpack.c.b16 %v2061, %v2054
    %v2804 = vpack.c.b16 %v2062, %v2055
    %v2805 = vpack.c.b16 %v2063, %v2056
    %v2806 = vpack.c.b16 %v2064, %v2057
    %v2807 = vpack.c.b16 %v2072, %v2065
    %v2808 = vpack.c.b16 %v2073, %v2066
    %v2809 = vpack.c.b16 %v2074, %v2067
    %v2810 = vpack.c.b16 %v2075, %v2068
    %v2811 = vpack.c.b16 %v2076, %v2069
    %v2812 = vpack.c.b16 %v2077, %v2070
    %v2813 = vpack.c.b16 %v2078, %v2071
    %v2814 = vpack.c.b16 %v2086, %v2079
    %v2815 = vpack.c.b16 %v2087, %v2080
    %v2816 = vpack.c.b16 %v2088, %v2081
    %v2817 = vpack.c.b16 %v2089, %v2082
    %v2818 = vpack.c.b16 %v2090, %v2083
    %v2819 = vpack.c.b16 %v2091, %v2084
    %v2820 = vpack.c.b16 %v2092, %v2085
    %v2821 = vpack.c.b16 %v2100, %v2093
    %v2822 = vpack.c.b16 %v2101, %v2094
    %v2823 = vpack.c.b16 %v2102, %v2095
    %v2824 = vpack.c.b16 %v2103, %v2096
    %v2825 = vpack.c.b16 %v2104, %v2097
    %v2826 = vpack.c.b16 %v2105, %v2098
    %v2827 = vpack.c.b16 %v2106, %v2099
    %v2828 = vpack.c.b16 %v2114, %v2107
    %v2829 = vpack.c.b16 %v2115, %v2108
    %v2830 = vpack.c.b16 %v2116, %v2109
    %v2831 = vpack.c.b16 %v2117, %v2110
    %v2832 = vpack.c.b16 %v2118, %v2111
    %v2833 = vpack.c.b16 %v2119, %v2112
    %v2834 = vpack.c.b16 %v2120, %v2113
    %v2835 = vpack.c.b16 %v2128, %v2121
    %v2836 = vpack.c.b16 %v2129, %v2122
    %v2837 = vpack.c.b16 %v2130, %v2123
    %v2838 = vpack.c.b16 %v2131, %v2124
    %v2839 = vpack.c.b16 %v2132, %v2125
    %v2840 = vpack.c.b16 %v2133, %v2126
    %v2841 = vpack.c.b16 %v2134, %v2127
    %v2842 = vpack.c.b16 %v2142, %v2135
    %v2843 = vpack.c.b16 %v2143, %v2136
    %v2844 = vpack.c.b16 %v2144, %v2137
    %v2845 = vpack.c.b16 %v2145, %v2138
    %v2846 = vpack.c.b16 %v2146, %v2139
    %v2847 = vpack.c.b16 %v2147, %v2140
    %v2848 = vpack.c.b16 %v2148, %v2141
    %v2849 = vpack.c.b16 %v2156, %v2149
    %v2850 = vpack.c.b16 %v2157, %v2150
    %v2851 = vpack.c.b16 %v2158, %v2151
    %v2852 = vpack.c.b16 %v2159, %v2152
    %v2853 = vpack.c.b16 %v2160, %v2153
    %v2854 = vpack.c.b16 %v2161, %v2154
    %v2855 = vpack.c.b16 %v2162, %v2155
    %v2856 = vpack.c.b16 %v2170, %v2163
    %v2857 = vpack.c.b16 %v2171, %v2164
    %v2858 = vpack.c.b16 %v2172, %v2165
    %v2859 = vpack.c.b16 %v2173, %v2166
    %v2860 = vpack.c.b16 %v2174, %v2167
    %v2861 = vpack.c.b16 %v2175, %v2168
    %v2862 = vpack.c.b16 %v2176, %v2169
    %v2863 = vpack.c.b16 %v2184, %v2177
    %v2864 = vpack.c.b16 %v2185, %v2178
    %v2865 = vpack.c.b16 %v2186, %v2179
    %v2866 = vpack.c.b16 %v2187, %v2180
    %v2867 = vpack.c.b16 %v2188, %v2181
    %v2868 = vpack.c.b16 %v2189, %v2182
    %v2869 = vpack.c.b16 %v2190, %v2183
    %v2870 = vpack.c.b16 %v2198, %v2191
    %v2871 = vpack.c.b16 %v2199, %v2192
    %v2872 = vpack.c.b16 %v2200, %v2193
    %v2873 = vpack.c.b16 %v2201, %v2194
    %v2874 = vpack.c.b16 %v2202, %v2195
    %v2875 = vpack.c.b16 %v2203, %v2196
    %v2876 = vpack.c.b16 %v2204, %v2197
    %v2877 = vpack.c.b16 %v2212, %v2205
    %v2878 = vpack.c.b16 %v2213, %v2206
    %v2879 = vpack.c.b16 %v2214, %v2207
    %v2880 = vpack.c.b16 %v2215, %v2208
    %v2881 = vpack.c.b16 %v2216, %v2209
    %v2882 = vpack.c.b16 %v2217, %v2210
    %v2883 = vpack.c.b16 %v2218, %v2211
    %v2884 = vpack.c.b16 %v2226, %v2219
    %v2885 = vpack.c.b16 %v2227, %v2220
    %v2886 = vpack.c.b16 %v2228, %v2221
    %v2887 = vpack.c.b16 %v2229, %v2222
    %v2888 = vpack.c.b16 %v2230, %v2223
    %v2889 = vpack.c.b16 %v2231, %v2224
    %v2890 = vpack.c.b16 %v2232, %v2225
    %v2891 = vpack.c.b16 %v2240, %v2233
    %v2892 = vpack.c.b16 %v2241, %v2234
    %v2893 = vpack.c.b16 %v2242, %v2235
    %v2894 = vpack.c.b16 %v2243, %v2236
    %v2895 = vpack.c.b16 %v2244, %v2237
    %v2896 = vpack.c.b16 %v2245, %v2238
    %v2897 = vpack.c.b16 %v2246, %v2239
    %v2898 = vpack.c.b16 %v2254, %v2247
    %v2899 = vpack.c.b16 %v2255, %v2248
    %v2900 = vpack.c.b16 %v2256, %v2249
    %v2901 = vpack.c.b16 %v2257, %v2250
    %v2902 = vpack.c.b16 %v2258, %v2251
    %v2903 = vpack.c.b16 %v2259, %v2252
    %v2904 = vpack.c.b16 %v2260, %v2253
    %v2905 = vpack.c.b16 %v2268, %v2261
    %v2906 = vpack.c.b16 %v2269, %v2262
    %v2907 = vpack.c.b16 %v2270, %v2263
    %v2908 = vpack.c.b16 %v2271, %v2264
    %v2909 = vpack.c.b16 %v2272, %v2265
    %v2910 = vpack.c.b16 %v2273, %v2266
    %v2911 = vpack.c.b16 %v2274, %v2267
    %v2912 = vpack.c.b16 %v2282, %v2275
    %v2913 = vpack.c.b16 %v2283, %v2276
    %v2914 = vpack.c.b16 %v2284, %v2277
    %v2915 = vpack.c.b16 %v2285, %v2278
    %v2916 = vpack.c.b16 %v2286, %v2279
    %v2917 = vpack.c.b16 %v2287, %v2280
    %v2918 = vpack.c.b16 %v2288, %v2281
    %v2919 = vpack.c.b16 %v2296, %v2289
    %v2920 = vpack.c.b16 %v2297, %v2290
    %v2921 = vpack.c.b16 %v2298, %v2291
    %v2922 = vpack.c.b16 %v2299, %v2292
    %v2923 = vpack.c.b16 %v2300, %v2293
    %v2924 = vpack.c.b16 %v2301, %v2294
    %v2925 = vpack.c.b16 %v2302, %v2295
    %v2926 = vpack.c.b16 %v2310, %v2303
    %v2927 = vpack.c.b16 %v2311, %v2304
    %v2928 = vpack.c.b16 %v2312, %v2305
    %v2929 = vpack.c.b16 %v2313, %v2306
    %v2930 = vpack.c.b16 %v2314, %v2307
    %v2931 = vpack.c.b16 %v2315, %v2308
    %v2932 = vpack.c.b16 %v2316, %v2309
    %v2933 = vpack.c.b16 %v2324, %v2317
    %v2934 = vpack.c.b16 %v2325, %v2318
    %v2935 = vpack.c.b16 %v2326, %v2319
    %v2936 = vpack.c.b16 %v2327, %v2320
    %v2937 = vpack.c.b16 %v2328, %v2321
    %v2938 = vpack.c.b16 %v2329, %v2322
    %v2939 = vpack.c.b16 %v2330, %v2323
    %v2940 = vpack.c.b16 %v2338, %v2331
    %v2941 = vpack.c.b16 %v2339, %v2332
    %v2942 = vpack.c.b16 %v2340, %v2333
    %v2943 = vpack.c.b16 %v2341, %v2334
    %v2944 = vpack.c.b16 %v2342, %v2335
    %v2945 = vpack.c.b16 %v2343, %v2336
    %v2946 = vpack.c.b16 %v2344, %v2337
    %v2947 = vpack.c.b16 %v2352, %v2345
    %v2948 = vpack.c.b16 %v2353, %v2346
    %v2949 = vpack.c.b16 %v2354, %v2347
    %v2950 = vpack.c.b16 %v2355, %v2348
    %v2951 = vpack.c.b16 %v2356, %v2349
    %v2952 = vpack.c.b16 %v2357, %v2350
    %v2953 = vpack.c.b16 %v2358, %v2351
    %v2954 = vpack.c.b16 %v2366, %v2359
    %v2955 = vpack.c.b16 %v2367, %v2360
    %v2956 = vpack.c.b16 %v2368, %v2361
    %v2957 = vpack.c.b16 %v2369, %v2362
    %v2958 = vpack.c.b16 %v2370, %v2363
    %v2959 = vpack.c.b16 %v2371, %v2364
    %v2960 = vpack.c.b16 %v2372, %v2365
    %v2961 = vpack.c.b16 %v2380, %v2373
    %v2962 = vpack.c.b16 %v2381, %v2374
    %v2963 = vpack.c.b16 %v2382, %v2375
    %v2964 = vpack.c.b16 %v2383, %v2376
    %v2965 = vpack.c.b16 %v2384, %v2377
    %v2966 = vpack.c.b16 %v2385, %v2378
    %v2967 = vpack.c.b16 %v2386, %v2379
    %v2968 = vpack.c.b16 %v2394, %v2387
    %v2969 = vpack.c.b16 %v2395, %v2388
    %v2970 = vpack.c.b16 %v2396, %v2389
    %v2971 = vpack.c.b16 %v2397, %v2390
    %v2972 = vpack.c.b16 %v2398, %v2391
    %v2973 = vpack.c.b16 %v2399, %v2392
    %v2974 = vpack.c.b16 %v2400, %v2393
    %v2975 = vpack.c.b16 %v2408, %v2401
    %v2976 = vpack.c.b16 %v2409, %v2402
    %v2977 = vpack.c.b16 %v2410, %v2403
    %v2978 = vpack.c.b16 %v2411, %v2404
    %v2979 = vpack.c.b16 %v2412, %v2405
    %v2980 = vpack.c.b16 %v2413, %v2406
    %v2981 = vpack.c.b16 %v2414, %v2407
    %v2982 = vpack.c.b16 %v2422, %v2415
    %v2983 = vpack.c.b16 %v2423, %v2416
    %v2984 = vpack.c.b16 %v2424, %v2417
    %v2985 = vpack.c.b16 %v2425, %v2418
    %v2986 = vpack.c.b16 %v2426, %v2419
    %v2987 = vpack.c.b16 %v2427, %v2420
    %v2988 = vpack.c.b16 %v2428, %v2421
    %v2989 = vpack.c.b16 %v2436, %v2429
    %v2990 = vpack.c.b16 %v2437, %v2430
    %v2991 = vpack.c.b16 %v2438, %v2431
    %v2992 = vpack.c.b16 %v2439, %v2432
    %v2993 = vpack.c.b16 %v2440, %v2433
    %v2994 = vpack.c.b16 %v2441, %v2434
    %v2995 = vpack.c.b16 %v2442, %v2435
    %v2996 = vpack.c.b16 %v2450, %v2443
    %v2997 = vpack.c.b16 %v2451, %v2444
    %v2998 = vpack.c.b16 %v2452, %v2445
    %v2999 = vpack.c.b16 %v2453, %v2446
    %v3000 = vpack.c.b16 %v2454, %v2447
    %v3001 = vpack.c.b16 %v2455, %v2448
    %v3002 = vpack.c.b16 %v2456, %v2449
    %v3003 = vpack.c.b16 %v2464, %v2457
    %v3004 = vpack.c.b16 %v2465, %v2458
    %v3005 = vpack.c.b16 %v2466, %v2459
    %v3006 = vpack.c.b16 %v2467, %v2460
    %v3007 = vpack.c.b16 %v2468, %v2461
    %v3008 = vpack.c.b16 %v2469, %v2462
    %v3009 = vpack.c.b16 %v2470, %v2463
    %v3010 = vpack.c.b16 %v2478, %v2471
    %v3011 = vpack.c.b16 %v2479, %v2472
    %v3012 = vpack.c.b16 %v2480, %v2473
    %v3013 = vpack.c.b16 %v2481, %v2474
    %v3014 = vpack.c.b16 %v2482, %v2475
    %v3015 = vpack.c.b16 %v2483, %v2476
    %v3016 = vpack.c.b16 %v2484, %v2477
    %v3017 = vpack.c.b16 %v2492, %v2485
    %v3018 = vpack.c.b16 %v2493, %v2486
    %v3019 = vpack.c.b16 %v2494, %v2487
    %v3020 = vpack.c.b16 %v2495, %v2488
    %v3021 = vpack.c.b16 %v2496, %v2489
    %v3022 = vpack.c.b16 %v2497, %v2490
    %v3023 = vpack.c.b16 %v2498, %v2491
    %v3024 = vpack.c.b16 %v2506, %v2499
    %v3025 = vpack.c.b16 %v2507, %v2500
    %v3026 = vpack.c.b16 %v2508, %v2501
    %v3027 = vpack.c.b16 %v2509, %v2502
    %v3028 = vpack.c.b16 %v2510, %v2503
    %v3029 = vpack.c.b16 %v2511, %v2504
    %v3030 = vpack.c.b16 %v2512, %v2505
    %v3031 = vpack.c.b16 %v2520, %v2513
    %v3032 = vpack.c.b16 %v2521, %v2514
    %v3033 = vpack.c.b16 %v2522, %v2515
    %v3034 = vpack.c.b16 %v2523, %v2516
    %v3035 = vpack.c.b16 %v2524, %v2517
    %v3036 = vpack.c.b16 %v2525, %v2518
    %v3037 = vpack.c.b16 %v2526, %v2519
    %v3038 = vpack.c.b16 %v2534, %v2527
    %v3039 = vpack.c.b16 %v2535, %v2528
    %v3040 = vpack.c.b16 %v2536, %v2529
    %v3041 = vpack.c.b16 %v2537, %v2530
    %v3042 = vpack.c.b16 %v2538, %v2531
    %v3043 = vpack.c.b16 %v2539, %v2532
    %v3044 = vpack.c.b16 %v2540, %v2533
    %v3045 = vpack.c.b16 %v2548, %v2541
    %v3046 = vpack.c.b16 %v2549, %v2542
    %v3047 = vpack.c.b16 %v2550, %v2543
    %v3048 = vpack.c.b16 %v2551, %v2544
    %v3049 = vpack.c.b16 %v2552, %v2545
    %v3050 = vpack.c.b16 %v2553, %v2546
    %v3051 = vpack.c.b16 %v2554, %v2547
    %v3052 = vpack.c.b16 %v2562, %v2555
    %v3053 = vpack.c.b16 %v2563, %v2556
    %v3054 = vpack.c.b16 %v2564, %v2557
    %v3055 = vpack.c.b16 %v2565, %v2558
    %v3056 = vpack.c.b16 %v2566, %v2559
    %v3057 = vpack.c.b16 %v2567, %v2560
    %v3058 = vpack.c.b16 %v2568, %v2561
    %v3059 = vpack.c.b16 %v2576, %v2569
    %v3060 = vpack.c.b16 %v2577, %v2570
    %v3061 = vpack.c.b16 %v2578, %v2571
    %v3062 = vpack.c.b16 %v2579, %v2572
    %v3063 = vpack.c.b16 %v2580, %v2573
    %v3064 = vpack.c.b16 %v2581, %v2574
    %v3065 = vpack.c.b16 %v2582, %v2575
    %v3066 = vpack.c.b16 %v2590, %v2583
    %v3067 = vpack.c.b16 %v2591, %v2584
    %v3068 = vpack.c.b16 %v2592, %v2585
    %v3069 = vpack.c.b16 %v2593, %v2586
    %v3070 = vpack.c.b16 %v2594, %v2587
    %v3071 = vpack.c.b16 %v2595, %v2588
    %v3072 = vpack.c.b16 %v2596, %v2589
    %v3073 = vpack.c.b16 %v2604, %v2597
    %v3074 = vpack.c.b16 %v2605, %v2598
    %v3075 = vpack.c.b16 %v2606, %v2599
    %v3076 = vpack.c.b16 %v2607, %v2600
    %v3077 = vpack.c.b16 %v2608, %v2601
    %v3078 = vpack.c.b16 %v2609, %v2602
    %v3079 = vpack.c.b16 %v2610, %v2603
    %v3080 = vpack.c.b16 %v2618, %v2611
    %v3081 = vpack.c.b16 %v2619, %v2612
    %v3082 = vpack.c.b16 %v2620, %v2613
    %v3083 = vpack.c.b16 %v2621, %v2614
    %v3084 = vpack.c.b16 %v2622, %v2615
    %v3085 = vpack.c.b16 %v2623, %v2616
    %v3086 = vpack.c.b16 %v2624, %v2617
    %v3087 = vpack.c.b16 %v2632, %v2625
    %v3088 = vpack.c.b16 %v2633, %v2626
    %v3089 = vpack.c.b16 %v2634, %v2627
    %v3090 = vpack.c.b16 %v2635, %v2628
    %v3091 = vpack.c.b16 %v2636, %v2629
    %v3092 = vpack.c.b16 %v2637, %v2630
    %v3093 = vpack.c.b16 %v2638, %v2631
    %v3094 = vpack.c.b16 %v2646, %v2639
    %v3095 = vpack.c.b16 %v2647, %v2640
    %v3096 = vpack.c.b16 %v2648, %v2641
    %v3097 = vpack.c.b16 %v2649, %v2642
    %v3098 = vpack.c.b16 %v2650, %v2643
    %v3099 = vpack.c.b16 %v2651, %v2644
    %v3100 = vpack.c.b16 %v2652, %v2645
    %v3101 = vpack.c.b16 %v2660, %v2653
    %v3102 = vpack.c.b16 %v2661, %v2654
    %v3103 = vpack.c.b16 %v2662, %v2655
    %v3104 = vpack.c.b16 %v2663, %v2656
    %v3105 = vpack.c.b16 %v2664, %v2657
    %v3106 = vpack.c.b16 %v2665, %v2658
    %v3107 = vpack.c.b16 %v2666, %v2659
    %v3108 = vpack.c.b16 %v2674, %v2667
    %v3109 = vpack.c.b16 %v2675, %v2668
    %v3110 = vpack.c.b16 %v2676, %v2669
    %v3111 = vpack.c.b16 %v2677, %v2670
    %v3112 = vpack.c.b16 %v2678, %v2671
    %v3113 = vpack.c.b16 %v2679, %v2672
    %v3114 = vpack.c.b16 %v2680, %v2673
    %v3115 = vpack.c.b16 %v2688, %v2681
    %v3116 = vpack.c.b16 %v2689, %v2682
    %v3117 = vpack.c.b16 %v2690, %v2683
    %v3118 = vpack.c.b16 %v2691, %v2684
    %v3119 = vpack.c.b16 %v2692, %v2685
    %v3120 = vpack.c.b16 %v2693, %v2686
    %v3121 = vpack.c.b16 %v2694, %v2687
    %v3122 = vpack.c.b16 %v2702, %v2695
    %v3123 = vpack.c.b16 %v2703, %v2696
    %v3124 = vpack.c.b16 %v2704, %v2697
    %v3125 = vpack.c.b16 %v2705, %v2698
    %v3126 = vpack.c.b16 %v2706, %v2699
    %v3127 = vpack.c.b16 %v2707, %v2700
    %v3128 = vpack.c.b16 %v2708, %v2701
    %v3129 = vpack.c.b16 %v2716, %v2709
    %v3130 = vpack.c.b16 %v2717, %v2710
    %v3131 = vpack.c.b16 %v2718, %v2711
    %v3132 = vpack.c.b16 %v2719, %v2712
    %v3133 = vpack.c.b16 %v2720, %v2713
    %v3134 = vpack.c.b16 %v2721, %v2714
    %v3135 = vpack.c.b16 %v2722, %v2715
    %v3136 = vpack.c.b16 %v2730, %v2723
    %v3137 = vpack.c.b16 %v2731, %v2724
    %v3138 = vpack.c.b16 %v2732, %v2725
    %v3139 = vpack.c.b16 %v2733, %v2726
    %v3140 = vpack.c.b16 %v2734, %v2727
    %v3141 = vpack.c.b16 %v2735, %v2728
    %v3142 = vpack.c.b16 %v2736, %v2729
    %v3143 = vpack.c.b16 %v2744, %v2737
    %v3144 = vpack.c.b16 %v2745, %v2738
    %v3145 = vpack.c.b16 %v2746, %v2739
    %v3146 = vpack.c.b16 %v2747, %v2740
    %v3147 = vpack.c.b16 %v2748, %v2741
    %v3148 = vpack.c.b16 %v2749, %v2742
    %v3149 = vpack.c.b16 %v2750, %v2743
    %v3150 = vpack.c.b16 %v2758, %v2751
    %v3151 = vpack.c.b16 %v2759, %v2752
    %v3152 = vpack.c.b16 %v2760, %v2753
    %v3153 = vpack.c.b16 %v2761, %v2754
    %v3154 = vpack.c.b16 %v2762, %v2755
    %v3155 = vpack.c.b16 %v2763, %v2756
    %v3156 = vpack.c.b16 %v2764, %v2757
    %3549 = vmatprep.subr.bf16.mxu0 %v2766
    %3550 = vmatpush1.bf16.msra.mxu0 %v2765
    %3551 = vmatprep.subr.bf16.mxu0 %v2773
    %3552 = vmatpush1.bf16.msra.mxu0 %v2772
    %3553 = vmatprep.subr.bf16.mxu0 %v2780
    %3554 = vmatpush1.bf16.msra.mxu0 %v2779
    %3555 = vmatprep.subr.bf16.mxu0 %v2787
    %3556 = vmatpush1.bf16.msra.mxu0 %v2786
    %3557 = vmatprep.subr.bf16.mxu0 %v2794
    %3558 = vmatpush1.bf16.msra.mxu0 %v2793
    %3559 = vmatprep.subr.bf16.mxu0 %v2801
    %3560 = vmatpush1.bf16.msra.mxu0 %v2800
    %3561 = vmatprep.subr.bf16.mxu0 %v2808
    %3562 = vmatpush1.bf16.msra.mxu0 %v2807
    %3563 = vmatprep.subr.bf16.mxu0 %v2815
    %3564 = vmatpush1.bf16.msra.mxu0 %v2814
    %3565 = vmatprep.subr.bf16.mxu0 %v2822
    %3566 = vmatpush1.bf16.msra.mxu0 %v2821
    %3567 = vmatprep.subr.bf16.mxu0 %v2829
    %3568 = vmatpush1.bf16.msra.mxu0 %v2828
    %3569 = vmatprep.subr.bf16.mxu0 %v2836
    %3570 = vmatpush1.bf16.msra.mxu0 %v2835
    %3571 = vmatprep.subr.bf16.mxu0 %v2843
    %3572 = vmatpush1.bf16.msra.mxu0 %v2842
    %3573 = vmatprep.subr.bf16.mxu0 %v2850
    %3574 = vmatpush1.bf16.msra.mxu0 %v2849
    %3575 = vmatprep.subr.bf16.mxu0 %v2857
    %3576 = vmatpush1.bf16.msra.mxu0 %v2856
    %3577 = vmatprep.subr.bf16.mxu0 %v2864
    %3578 = vmatpush1.bf16.msra.mxu0 %v2863
    %3579 = vmatprep.subr.bf16.mxu0 %v2871
    %3580 = vmatpush1.bf16.msra.mxu0 %v2870
    %3581 = vmatprep.mubr.bf16.mxu0 %v1042
    %3582 = vmatmul.mubr.bf16.gmra.mrb[0].mxu0 %v1041
    %v3583 = vpop.f32.mrb[0].mxu0
    %v3584 = vadd.f32 %v1501, %v3583
    %v3585 = vpop.f32.mrb[0].mxu0
    %v3586 = vadd.f32 %v1505, %v3585
    %v3587 = vpop.f32.mrb[0].mxu0
    %v3588 = vadd.f32 %v1501, %v3587
    %v3589 = vpop.f32.mrb[0].mxu0
    %v3590 = vadd.f32 %v1505, %v3589
    %3591 = vdwg.mxu0
    %3592 = vmatprep.subr.bf16.mxu0 %v2878
    %3593 = vmatpush1.bf16.msra.mxu0 %v2877
    %3594 = vmatprep.subr.bf16.mxu0 %v2885
    %3595 = vmatpush1.bf16.msra.mxu0 %v2884
    %3596 = vmatprep.subr.bf16.mxu0 %v2892
    %3597 = vmatpush1.bf16.msra.mxu0 %v2891
    %3598 = vmatprep.subr.bf16.mxu0 %v2899
    %3599 = vmatpush1.bf16.msra.mxu0 %v2898
    %3600 = vmatprep.subr.bf16.mxu0 %v2906
    %3601 = vmatpush1.bf16.msra.mxu0 %v2905
    %3602 = vmatprep.subr.bf16.mxu0 %v2913
    %3603 = vmatpush1.bf16.msra.mxu0 %v2912
    %3604 = vmatprep.subr.bf16.mxu0 %v2920
    %3605 = vmatpush1.bf16.msra.mxu0 %v2919
    %3606 = vmatprep.subr.bf16.mxu0 %v2927
    %3607 = vmatpush1.bf16.msra.mxu0 %v2926
    %3608 = vmatprep.subr.bf16.mxu0 %v2934
    %3609 = vmatpush1.bf16.msra.mxu0 %v2933
    %3610 = vmatprep.subr.bf16.mxu0 %v2941
    %3611 = vmatpush1.bf16.msra.mxu0 %v2940
    %3612 = vmatprep.subr.bf16.mxu0 %v2948
    %3613 = vmatpush1.bf16.msra.mxu0 %v2947
    %3614 = vmatprep.subr.bf16.mxu0 %v2955
    %3615 = vmatpush1.bf16.msra.mxu0 %v2954
    %3616 = vmatprep.subr.bf16.mxu0 %v2962
    %3617 = vmatpush1.bf16.msra.mxu0 %v2961
    %3618 = vmatprep.subr.bf16.mxu0 %v2969
    %3619 = vmatpush1.bf16.msra.mxu0 %v2968
    %3620 = vmatprep.subr.bf16.mxu0 %v2976
    %3621 = vmatpush1.bf16.msra.mxu0 %v2975
    %3622 = vmatprep.subr.bf16.mxu0 %v2983
    %3623 = vmatpush1.bf16.msra.mxu0 %v2982
    %3624 = vmatprep.mubr.bf16.mxu0 %v1044
    %3625 = vmatmul.mubr.bf16.gmra.mrb[0].mxu0 %v1043
    %v3626 = vpop.f32.mrb[0].mxu0
    %v3627 = vadd.f32 %v3584, %v3626
    %v3628 = vpop.f32.mrb[0].mxu0
    %v3629 = vadd.f32 %v3586, %v3628
    %v3630 = vpop.f32.mrb[0].mxu0
    %v3631 = vadd.f32 %v3588, %v3630
    %v3632 = vpop.f32.mrb[0].mxu0
    %v3633 = vadd.f32 %v3590, %v3632
    %3634 = vdwg.mxu0
    %3635 = vmatprep.subr.bf16.mxu0 %v2990
    %3636 = vmatpush1.bf16.msra.mxu0 %v2989
    %3637 = vmatprep.subr.bf16.mxu0 %v2997
    %3638 = vmatpush1.bf16.msra.mxu0 %v2996
    %3639 = vmatprep.subr.bf16.mxu0 %v3004
    %3640 = vmatpush1.bf16.msra.mxu0 %v3003
    %3641 = vmatprep.subr.bf16.mxu0 %v3011
    %3642 = vmatpush1.bf16.msra.mxu0 %v3010
    %3643 = vmatprep.subr.bf16.mxu0 %v3018
    %3644 = vmatpush1.bf16.msra.mxu0 %v3017
    %3645 = vmatprep.subr.bf16.mxu0 %v3025
    %3646 = vmatpush1.bf16.msra.mxu0 %v3024
    %3647 = vmatprep.subr.bf16.mxu0 %v3032
    %3648 = vmatpush1.bf16.msra.mxu0 %v3031
    %3649 = vmatprep.subr.bf16.mxu0 %v3039
    %3650 = vmatpush1.bf16.msra.mxu0 %v3038
    %3651 = vmatprep.subr.bf16.mxu0 %v3046
    %3652 = vmatpush1.bf16.msra.mxu0 %v3045
    %3653 = vmatprep.subr.bf16.mxu0 %v3053
    %3654 = vmatpush1.bf16.msra.mxu0 %v3052
    %3655 = vmatprep.subr.bf16.mxu0 %v3060
    %3656 = vmatpush1.bf16.msra.mxu0 %v3059
    %3657 = vmatprep.subr.bf16.mxu0 %v3067
    %3658 = vmatpush1.bf16.msra.mxu0 %v3066
    %3659 = vmatprep.subr.bf16.mxu0 %v3074
    %3660 = vmatpush1.bf16.msra.mxu0 %v3073
    %3661 = vmatprep.subr.bf16.mxu0 %v3081
    %3662 = vmatpush1.bf16.msra.mxu0 %v3080
    %3663 = vmatprep.subr.bf16.mxu0 %v3088
    %3664 = vmatpush1.bf16.msra.mxu0 %v3087
    %3665 = vmatprep.subr.bf16.mxu0 %v3095
    %3666 = vmatpush1.bf16.msra.mxu0 %v3094
    %3667 = vmatprep.mubr.bf16.mxu0 %v1046
    %3668 = vmatmul.mubr.bf16.gmra.mrb[0].mxu0 %v1045
    %v3669 = vpop.f32.mrb[0].mxu0
    %v3670 = vadd.f32 %v3627, %v3669
    %v3671 = vpop.f32.mrb[0].mxu0
    %v3672 = vadd.f32 %v3629, %v3671
    %v3673 = vpop.f32.mrb[0].mxu0
    %v3674 = vadd.f32 %v3631, %v3673
    %v3675 = vpop.f32.mrb[0].mxu0
    %v3676 = vadd.f32 %v3633, %v3675
    %3677 = vdwg.mxu0
    %3678 = vmatprep.subr.bf16.mxu0 %v3102
    %3679 = vmatpush1.bf16.msra.mxu0 %v3101
    %3680 = vmatprep.subr.bf16.mxu0 %v3109
    %3681 = vmatpush1.bf16.msra.mxu0 %v3108
    %3682 = vmatprep.subr.bf16.mxu0 %v3116
    %3683 = vmatpush1.bf16.msra.mxu0 %v3115
    %3684 = vmatprep.subr.bf16.mxu0 %v3123
    %3685 = vmatpush1.bf16.msra.mxu0 %v3122
    %3686 = vmatprep.subr.bf16.mxu0 %v3130
    %3687 = vmatpush1.bf16.msra.mxu0 %v3129
    %3688 = vmatprep.subr.bf16.mxu0 %v3137
    %3689 = vmatpush1.bf16.msra.mxu0 %v3136
    %3690 = vmatprep.subr.bf16.mxu0 %v3144
    %3691 = vmatpush1.bf16.msra.mxu0 %v3143
    %3692 = vmatprep.subr.bf16.mxu0 %v3151
    %3693 = vmatpush1.bf16.msra.mxu0 %v3150
    %3694 = vmatprep.subr.bf16.mxu0 0
    %3695 = vmatpush1.bf16.msra.mxu0 0
    %3696 = vmatprep.subr.bf16.mxu0 0
    %3697 = vmatpush1.bf16.msra.mxu0 0
    %3698 = vmatprep.subr.bf16.mxu0 0
    %3699 = vmatpush1.bf16.msra.mxu0 0
    %3700 = vmatprep.subr.bf16.mxu0 0
    %3701 = vmatpush1.bf16.msra.mxu0 0
    %3702 = vmatprep.subr.bf16.mxu0 0
    %3703 = vmatpush1.bf16.msra.mxu0 0
    %3704 = vmatprep.subr.bf16.mxu0 0
    %3705 = vmatpush1.bf16.msra.mxu0 0
    %3706 = vmatprep.subr.bf16.mxu0 0
    %3707 = vmatpush1.bf16.msra.mxu0 0
    %3708 = vmatprep.subr.bf16.mxu0 0
    %3709 = vmatpush1.bf16.msra.mxu0 0
    %3710 = vmatprep.mubr.bf16.mxu0 0
    %3711 = vmatmul.mubr.bf16.gmra.mrb[0].mxu0 %v1047
    %v3712 = vpop.f32.mrb[0].mxu0
    %v3713 = vadd.f32 %v3670, %v3712
    %v3714 = vpop.f32.mrb[0].mxu0
    %v3715 = vadd.f32 %v3672, %v3714
    %v3716 = vpop.f32.mrb[0].mxu0
    %v3717 = vadd.f32 %v3674, %v3716
    %v3718 = vpop.f32.mrb[0].mxu0
    %v3719 = vadd.f32 %v3676, %v3718
    %3720 = vdwg.mxu0
    %3721 = vmatprep.subr.bf16.mxu0 %v2768
    %3722 = vmatpush1.bf16.msra.mxu0 %v2767
    %3723 = vmatprep.subr.bf16.mxu0 %v2775
    %3724 = vmatpush1.bf16.msra.mxu0 %v2774
    %3725 = vmatprep.subr.bf16.mxu0 %v2782
    %3726 = vmatpush1.bf16.msra.mxu0 %v2781
    %3727 = vmatprep.subr.bf16.mxu0 %v2789
    %3728 = vmatpush1.bf16.msra.mxu0 %v2788
    %3729 = vmatprep.subr.bf16.mxu0 %v2796
    %3730 = vmatpush1.bf16.msra.mxu0 %v2795
    %3731 = vmatprep.subr.bf16.mxu0 %v2803
    %3732 = vmatpush1.bf16.msra.mxu0 %v2802
    %3733 = vmatprep.subr.bf16.mxu0 %v2810
    %3734 = vmatpush1.bf16.msra.mxu0 %v2809
    %3735 = vmatprep.subr.bf16.mxu0 %v2817
    %3736 = vmatpush1.bf16.msra.mxu0 %v2816
    %3737 = vmatprep.subr.bf16.mxu0 %v2824
    %3738 = vmatpush1.bf16.msra.mxu0 %v2823
    %3739 = vmatprep.subr.bf16.mxu0 %v2831
    %3740 = vmatpush1.bf16.msra.mxu0 %v2830
    %3741 = vmatprep.subr.bf16.mxu0 %v2838
    %3742 = vmatpush1.bf16.msra.mxu0 %v2837
    %3743 = vmatprep.subr.bf16.mxu0 %v2845
    %3744 = vmatpush1.bf16.msra.mxu0 %v2844
    %3745 = vmatprep.subr.bf16.mxu0 %v2852
    %3746 = vmatpush1.bf16.msra.mxu0 %v2851
    %3747 = vmatprep.subr.bf16.mxu0 %v2859
    %3748 = vmatpush1.bf16.msra.mxu0 %v2858
    %3749 = vmatprep.subr.bf16.mxu0 %v2866
    %3750 = vmatpush1.bf16.msra.mxu0 %v2865
    %3751 = vmatprep.subr.bf16.mxu0 %v2873
    %3752 = vmatpush1.bf16.msra.mxu0 %v2872
    %3753 = vmatprep.mubr.bf16.mxu0 %v1042
    %3754 = vmatmul.mubr.bf16.gmra.mrb[0].mxu0 %v1041
    %v3755 = vpop.f32.mrb[0].mxu0
    %v3756 = vadd.f32 %v1509, %v3755
    %v3757 = vpop.f32.mrb[0].mxu0
    %v3758 = vadd.f32 %v1513, %v3757
    %v3759 = vpop.f32.mrb[0].mxu0
    %v3760 = vadd.f32 %v1509, %v3759
    %v3761 = vpop.f32.mrb[0].mxu0
    %v3762 = vadd.f32 %v1513, %v3761
    %3763 = vdwg.mxu0
    %3764 = vmatprep.subr.bf16.mxu0 %v2880
    %3765 = vmatpush1.bf16.msra.mxu0 %v2879
    %3766 = vmatprep.subr.bf16.mxu0 %v2887
    %3767 = vmatpush1.bf16.msra.mxu0 %v2886
    %3768 = vmatprep.subr.bf16.mxu0 %v2894
    %3769 = vmatpush1.bf16.msra.mxu0 %v2893
    %3770 = vmatprep.subr.bf16.mxu0 %v2901
    %3771 = vmatpush1.bf16.msra.mxu0 %v2900
    %3772 = vmatprep.subr.bf16.mxu0 %v2908
    %3773 = vmatpush1.bf16.msra.mxu0 %v2907
    %3774 = vmatprep.subr.bf16.mxu0 %v2915
    %3775 = vmatpush1.bf16.msra.mxu0 %v2914
    %3776 = vmatprep.subr.bf16.mxu0 %v2922
    %3777 = vmatpush1.bf16.msra.mxu0 %v2921
    %3778 = vmatprep.subr.bf16.mxu0 %v2929
    %3779 = vmatpush1.bf16.msra.mxu0 %v2928
    %3780 = vmatprep.subr.bf16.mxu0 %v2936
    %3781 = vmatpush1.bf16.msra.mxu0 %v2935
    %3782 = vmatprep.subr.bf16.mxu0 %v2943
    %3783 = vmatpush1.bf16.msra.mxu0 %v2942
    %3784 = vmatprep.subr.bf16.mxu0 %v2950
    %3785 = vmatpush1.bf16.msra.mxu0 %v2949
    %3786 = vmatprep.subr.bf16.mxu0 %v2957
    %3787 = vmatpush1.bf16.msra.mxu0 %v2956
    %3788 = vmatprep.subr.bf16.mxu0 %v2964
    %3789 = vmatpush1.bf16.msra.mxu0 %v2963
    %3790 = vmatprep.subr.bf16.mxu0 %v2971
    %3791 = vmatpush1.bf16.msra.mxu0 %v2970
    %3792 = vmatprep.subr.bf16.mxu0 %v2978
    %3793 = vmatpush1.bf16.msra.mxu0 %v2977
    %3794 = vmatprep.subr.bf16.mxu0 %v2985
    %3795 = vmatpush1.bf16.msra.mxu0 %v2984
    %3796 = vmatprep.mubr.bf16.mxu0 %v1044
    %3797 = vmatmul.mubr.bf16.gmra.mrb[0].mxu0 %v1043
    %v3798 = vpop.f32.mrb[0].mxu0
    %v3799 = vadd.f32 %v3756, %v3798
    %v3800 = vpop.f32.mrb[0].mxu0
    %v3801 = vadd.f32 %v3758, %v3800
    %v3802 = vpop.f32.mrb[0].mxu0
    %v3803 = vadd.f32 %v3760, %v3802
    %v3804 = vpop.f32.mrb[0].mxu0
    %v3805 = vadd.f32 %v3762, %v3804
    %3806 = vdwg.mxu0
    %3807 = vmatprep.subr.bf16.mxu0 %v2992
    %3808 = vmatpush1.bf16.msra.mxu0 %v2991
    %3809 = vmatprep.subr.bf16.mxu0 %v2999
    %3810 = vmatpush1.bf16.msra.mxu0 %v2998
    %3811 = vmatprep.subr.bf16.mxu0 %v3006
    %3812 = vmatpush1.bf16.msra.mxu0 %v3005
    %3813 = vmatprep.subr.bf16.mxu0 %v3013
    %3814 = vmatpush1.bf16.msra.mxu0 %v3012
    %3815 = vmatprep.subr.bf16.mxu0 %v3020
    %3816 = vmatpush1.bf16.msra.mxu0 %v3019
    %3817 = vmatprep.subr.bf16.mxu0 %v3027
    %3818 = vmatpush1.bf16.msra.mxu0 %v3026
    %3819 = vmatprep.subr.bf16.mxu0 %v3034
    %3820 = vmatpush1.bf16.msra.mxu0 %v3033
    %3821 = vmatprep.subr.bf16.mxu0 %v3041
    %3822 = vmatpush1.bf16.msra.mxu0 %v3040
    %3823 = vmatprep.subr.bf16.mxu0 %v3048
    %3824 = vmatpush1.bf16.msra.mxu0 %v3047
    %3825 = vmatprep.subr.bf16.mxu0 %v3055
    %3826 = vmatpush1.bf16.msra.mxu0 %v3054
    %3827 = vmatprep.subr.bf16.mxu0 %v3062
    %3828 = vmatpush1.bf16.msra.mxu0 %v3061
    %3829 = vmatprep.subr.bf16.mxu0 %v3069
    %3830 = vmatpush1.bf16.msra.mxu0 %v3068
    %3831 = vmatprep.subr.bf16.mxu0 %v3076
    %3832 = vmatpush1.bf16.msra.mxu0 %v3075
    %3833 = vmatprep.subr.bf16.mxu0 %v3083
    %3834 = vmatpush1.bf16.msra.mxu0 %v3082
    %3835 = vmatprep.subr.bf16.mxu0 %v3090
    %3836 = vmatpush1.bf16.msra.mxu0 %v3089
    %3837 = vmatprep.subr.bf16.mxu0 %v3097
    %3838 = vmatpush1.bf16.msra.mxu0 %v3096
    %3839 = vmatprep.mubr.bf16.mxu0 %v1046
    %3840 = vmatmul.mubr.bf16.gmra.mrb[0].mxu0 %v1045
    %v3841 = vpop.f32.mrb[0].mxu0
    %v3842 = vadd.f32 %v3799, %v3841
    %v3843 = vpop.f32.mrb[0].mxu0
    %v3844 = vadd.f32 %v3801, %v3843
    %v3845 = vpop.f32.mrb[0].mxu0
    %v3846 = vadd.f32 %v3803, %v3845
    %v3847 = vpop.f32.mrb[0].mxu0
    %v3848 = vadd.f32 %v3805, %v3847
    %3849 = vdwg.mxu0
    %3850 = vmatprep.subr.bf16.mxu0 %v3104
    %3851 = vmatpush1.bf16.msra.mxu0 %v3103
    %3852 = vmatprep.subr.bf16.mxu0 %v3111
    %3853 = vmatpush1.bf16.msra.mxu0 %v3110
    %3854 = vmatprep.subr.bf16.mxu0 %v3118
    %3855 = vmatpush1.bf16.msra.mxu0 %v3117
    %3856 = vmatprep.subr.bf16.mxu0 %v3125
    %3857 = vmatpush1.bf16.msra.mxu0 %v3124
    %3858 = vmatprep.subr.bf16.mxu0 %v3132
    %3859 = vmatpush1.bf16.msra.mxu0 %v3131
    %3860 = vmatprep.subr.bf16.mxu0 %v3139
    %3861 = vmatpush1.bf16.msra.mxu0 %v3138
    %3862 = vmatprep.subr.bf16.mxu0 %v3146
    %3863 = vmatpush1.bf16.msra.mxu0 %v3145
    %3864 = vmatprep.subr.bf16.mxu0 %v3153
    %3865 = vmatpush1.bf16.msra.mxu0 %v3152
    %3866 = vmatprep.subr.bf16.mxu0 0
    %3867 = vmatpush1.bf16.msra.mxu0 0
    %3868 = vmatprep.subr.bf16.mxu0 0
    %3869 = vmatpush1.bf16.msra.mxu0 0
    %3870 = vmatprep.subr.bf16.mxu0 0
    %3871 = vmatpush1.bf16.msra.mxu0 0
    %3872 = vmatprep.subr.bf16.mxu0 0
    %3873 = vmatpush1.bf16.msra.mxu0 0
    %3874 = vmatprep.subr.bf16.mxu0 0
    %3875 = vmatpush1.bf16.msra.mxu0 0
    %3876 = vmatprep.subr.bf16.mxu0 0
    %3877 = vmatpush1.bf16.msra.mxu0 0
    %3878 = vmatprep.subr.bf16.mxu0 0
    %3879 = vmatpush1.bf16.msra.mxu0 0
    %3880 = vmatprep.subr.bf16.mxu0 0
    %3881 = vmatpush1.bf16.msra.mxu0 0
    %3882 = vmatprep.mubr.bf16.mxu0 0
    %3883 = vmatmul.mubr.bf16.gmra.mrb[0].mxu0 %v1047
    %v3884 = vpop.f32.mrb[0].mxu0
    %v3885 = vadd.f32 %v3842, %v3884
    %v3886 = vpop.f32.mrb[0].mxu0
    %v3887 = vadd.f32 %v3844, %v3886
    %v3888 = vpop.f32.mrb[0].mxu0
    %v3889 = vadd.f32 %v3846, %v3888
    %v3890 = vpop.f32.mrb[0].mxu0
    %v3891 = vadd.f32 %v3848, %v3890
    %3892 = vdwg.mxu0
    %3893 = vmatprep.subr.bf16.mxu0 %v2770
    %3894 = vmatpush1.bf16.msra.mxu0 %v2769
    %3895 = vmatprep.subr.bf16.mxu0 %v2777
    %3896 = vmatpush1.bf16.msra.mxu0 %v2776
    %3897 = vmatprep.subr.bf16.mxu0 %v2784
    %3898 = vmatpush1.bf16.msra.mxu0 %v2783
    %3899 = vmatprep.subr.bf16.mxu0 %v2791
    %3900 = vmatpush1.bf16.msra.mxu0 %v2790
    %3901 = vmatprep.subr.bf16.mxu0 %v2798
    %3902 = vmatpush1.bf16.msra.mxu0 %v2797
    %3903 = vmatprep.subr.bf16.mxu0 %v2805
    %3904 = vmatpush1.bf16.msra.mxu0 %v2804
    %3905 = vmatprep.subr.bf16.mxu0 %v2812
    %3906 = vmatpush1.bf16.msra.mxu0 %v2811
    %3907 = vmatprep.subr.bf16.mxu0 %v2819
    %3908 = vmatpush1.bf16.msra.mxu0 %v2818
    %3909 = vmatprep.subr.bf16.mxu0 %v2826
    %3910 = vmatpush1.bf16.msra.mxu0 %v2825
    %3911 = vmatprep.subr.bf16.mxu0 %v2833
    %3912 = vmatpush1.bf16.msra.mxu0 %v2832
    %3913 = vmatprep.subr.bf16.mxu0 %v2840
    %3914 = vmatpush1.bf16.msra.mxu0 %v2839
    %3915 = vmatprep.subr.bf16.mxu0 %v2847
    %3916 = vmatpush1.bf16.msra.mxu0 %v2846
    %3917 = vmatprep.subr.bf16.mxu0 %v2854
    %3918 = vmatpush1.bf16.msra.mxu0 %v2853
    %3919 = vmatprep.subr.bf16.mxu0 %v2861
    %3920 = vmatpush1.bf16.msra.mxu0 %v2860
    %3921 = vmatprep.subr.bf16.mxu0 %v2868
    %3922 = vmatpush1.bf16.msra.mxu0 %v2867
    %3923 = vmatprep.subr.bf16.mxu0 %v2875
    %3924 = vmatpush1.bf16.msra.mxu0 %v2874
    %3925 = vmatprep.mubr.bf16.mxu0 %v1042
    %3926 = vmatmul.mubr.bf16.gmra.mrb[0].mxu0 %v1041
    %v3927 = vpop.f32.mrb[0].mxu0
    %v3928 = vadd.f32 %v1517, %v3927
    %v3929 = vpop.f32.mrb[0].mxu0
    %v3930 = vadd.f32 %v1521, %v3929
    %v3931 = vpop.f32.mrb[0].mxu0
    %v3932 = vadd.f32 %v1517, %v3931
    %v3933 = vpop.f32.mrb[0].mxu0
    %v3934 = vadd.f32 %v1521, %v3933
    %3935 = vdwg.mxu0
    %3936 = vmatprep.subr.bf16.mxu0 %v2882
    %3937 = vmatpush1.bf16.msra.mxu0 %v2881
    %3938 = vmatprep.subr.bf16.mxu0 %v2889
    %3939 = vmatpush1.bf16.msra.mxu0 %v2888
    %3940 = vmatprep.subr.bf16.mxu0 %v2896
    %3941 = vmatpush1.bf16.msra.mxu0 %v2895
    %3942 = vmatprep.subr.bf16.mxu0 %v2903
    %3943 = vmatpush1.bf16.msra.mxu0 %v2902
    %3944 = vmatprep.subr.bf16.mxu0 %v2910
    %3945 = vmatpush1.bf16.msra.mxu0 %v2909
    %3946 = vmatprep.subr.bf16.mxu0 %v2917
    %3947 = vmatpush1.bf16.msra.mxu0 %v2916
    %3948 = vmatprep.subr.bf16.mxu0 %v2924
    %3949 = vmatpush1.bf16.msra.mxu0 %v2923
    %3950 = vmatprep.subr.bf16.mxu0 %v2931
    %3951 = vmatpush1.bf16.msra.mxu0 %v2930
    %3952 = vmatprep.subr.bf16.mxu0 %v2938
    %3953 = vmatpush1.bf16.msra.mxu0 %v2937
    %3954 = vmatprep.subr.bf16.mxu0 %v2945
    %3955 = vmatpush1.bf16.msra.mxu0 %v2944
    %3956 = vmatprep.subr.bf16.mxu0 %v2952
    %3957 = vmatpush1.bf16.msra.mxu0 %v2951
    %3958 = vmatprep.subr.bf16.mxu0 %v2959
    %3959 = vmatpush1.bf16.msra.mxu0 %v2958
    %3960 = vmatprep.subr.bf16.mxu0 %v2966
    %3961 = vmatpush1.bf16.msra.mxu0 %v2965
    %3962 = vmatprep.subr.bf16.mxu0 %v2973
    %3963 = vmatpush1.bf16.msra.mxu0 %v2972
    %3964 = vmatprep.subr.bf16.mxu0 %v2980
    %3965 = vmatpush1.bf16.msra.mxu0 %v2979
    %3966 = vmatprep.subr.bf16.mxu0 %v2987
    %3967 = vmatpush1.bf16.msra.mxu0 %v2986
    %3968 = vmatprep.mubr.bf16.mxu0 %v1044
    %3969 = vmatmul.mubr.bf16.gmra.mrb[0].mxu0 %v1043
    %v3970 = vpop.f32.mrb[0].mxu0
    %v3971 = vadd.f32 %v3928, %v3970
    %v3972 = vpop.f32.mrb[0].mxu0
    %v3973 = vadd.f32 %v3930, %v3972
    %v3974 = vpop.f32.mrb[0].mxu0
    %v3975 = vadd.f32 %v3932, %v3974
    %v3976 = vpop.f32.mrb[0].mxu0
    %v3977 = vadd.f32 %v3934, %v3976
    %3978 = vdwg.mxu0
    %3979 = vmatprep.subr.bf16.mxu0 %v2994
    %3980 = vmatpush1.bf16.msra.mxu0 %v2993
    %3981 = vmatprep.subr.bf16.mxu0 %v3001
    %3982 = vmatpush1.bf16.msra.mxu0 %v3000
    %3983 = vmatprep.subr.bf16.mxu0 %v3008
    %3984 = vmatpush1.bf16.msra.mxu0 %v3007
    %3985 = vmatprep.subr.bf16.mxu0 %v3015
    %3986 = vmatpush1.bf16.msra.mxu0 %v3014
    %3987 = vmatprep.subr.bf16.mxu0 %v3022
    %3988 = vmatpush1.bf16.msra.mxu0 %v3021
    %3989 = vmatprep.subr.bf16.mxu0 %v3029
    %3990 = vmatpush1.bf16.msra.mxu0 %v3028
    %3991 = vmatprep.subr.bf16.mxu0 %v3036
    %3992 = vmatpush1.bf16.msra.mxu0 %v3035
    %3993 = vmatprep.subr.bf16.mxu0 %v3043
    %3994 = vmatpush1.bf16.msra.mxu0 %v3042
    %3995 = vmatprep.subr.bf16.mxu0 %v3050
    %3996 = vmatpush1.bf16.msra.mxu0 %v3049
    %3997 = vmatprep.subr.bf16.mxu0 %v3057
    %3998 = vmatpush1.bf16.msra.mxu0 %v3056
    %3999 = vmatprep.subr.bf16.mxu0 %v3064
    %4000 = vmatpush1.bf16.msra.mxu0 %v3063
    %4001 = vmatprep.subr.bf16.mxu0 %v3071
    %4002 = vmatpush1.bf16.msra.mxu0 %v3070
    %4003 = vmatprep.subr.bf16.mxu0 %v3078
    %4004 = vmatpush1.bf16.msra.mxu0 %v3077
    %4005 = vmatprep.subr.bf16.mxu0 %v3085
    %4006 = vmatpush1.bf16.msra.mxu0 %v3084
    %4007 = vmatprep.subr.bf16.mxu0 %v3092
    %4008 = vmatpush1.bf16.msra.mxu0 %v3091
    %4009 = vmatprep.subr.bf16.mxu0 %v3099
    %4010 = vmatpush1.bf16.msra.mxu0 %v3098
    %4011 = vmatprep.mubr.bf16.mxu0 %v1046
    %4012 = vmatmul.mubr.bf16.gmra.mrb[0].mxu0 %v1045
    %v4013 = vpop.f32.mrb[0].mxu0
    %v4014 = vadd.f32 %v3971, %v4013
    %v4015 = vpop.f32.mrb[0].mxu0
    %v4016 = vadd.f32 %v3973, %v4015
    %v4017 = vpop.f32.mrb[0].mxu0
    %v4018 = vadd.f32 %v3975, %v4017
    %v4019 = vpop.f32.mrb[0].mxu0
    %v4020 = vadd.f32 %v3977, %v4019
    %4021 = vdwg.mxu0
    %4022 = vmatprep.subr.bf16.mxu0 %v3106
    %4023 = vmatpush1.bf16.msra.mxu0 %v3105
    %4024 = vmatprep.subr.bf16.mxu0 %v3113
    %4025 = vmatpush1.bf16.msra.mxu0 %v3112
    %4026 = vmatprep.subr.bf16.mxu0 %v3120
    %4027 = vmatpush1.bf16.msra.mxu0 %v3119
    %4028 = vmatprep.subr.bf16.mxu0 %v3127
    %4029 = vmatpush1.bf16.msra.mxu0 %v3126
    %4030 = vmatprep.subr.bf16.mxu0 %v3134
    %4031 = vmatpush1.bf16.msra.mxu0 %v3133
    %4032 = vmatprep.subr.bf16.mxu0 %v3141
    %4033 = vmatpush1.bf16.msra.mxu0 %v3140
    %4034 = vmatprep.subr.bf16.mxu0 %v3148
    %4035 = vmatpush1.bf16.msra.mxu0 %v3147
    %4036 = vmatprep.subr.bf16.mxu0 %v3155
    %4037 = vmatpush1.bf16.msra.mxu0 %v3154
    %4038 = vmatprep.subr.bf16.mxu0 0
    %4039 = vmatpush1.bf16.msra.mxu0 0
    %4040 = vmatprep.subr.bf16.mxu0 0
    %4041 = vmatpush1.bf16.msra.mxu0 0
    %4042 = vmatprep.subr.bf16.mxu0 0
    %4043 = vmatpush1.bf16.msra.mxu0 0
    %4044 = vmatprep.subr.bf16.mxu0 0
    %4045 = vmatpush1.bf16.msra.mxu0 0
    %4046 = vmatprep.subr.bf16.mxu0 0
    %4047 = vmatpush1.bf16.msra.mxu0 0
    %4048 = vmatprep.subr.bf16.mxu0 0
    %4049 = vmatpush1.bf16.msra.mxu0 0
    %4050 = vmatprep.subr.bf16.mxu0 0
    %4051 = vmatpush1.bf16.msra.mxu0 0
    %4052 = vmatprep.subr.bf16.mxu0 0
    %4053 = vmatpush1.bf16.msra.mxu0 0
    %4054 = vmatprep.mubr.bf16.mxu0 0
    %4055 = vmatmul.mubr.bf16.gmra.mrb[0].mxu0 %v1047
    %v4056 = vpop.f32.mrb[0].mxu0
    %v4057 = vadd.f32 %v4014, %v4056
    %v4058 = vpop.f32.mrb[0].mxu0
    %v4059 = vadd.f32 %v4016, %v4058
    %v4060 = vpop.f32.mrb[0].mxu0
    %v4061 = vadd.f32 %v4018, %v4060
    %v4062 = vpop.f32.mrb[0].mxu0
    %v4063 = vadd.f32 %v4020, %v4062
    %4064 = vdwg.mxu0
    %4065 = vmatprep.subr.bf16.mxu0 0
    %4066 = vmatpush1.bf16.msra.mxu0 %v2771
    %4067 = vmatprep.subr.bf16.mxu0 0
    %4068 = vmatpush1.bf16.msra.mxu0 %v2778
    %4069 = vmatprep.subr.bf16.mxu0 0
    %4070 = vmatpush1.bf16.msra.mxu0 %v2785
    %4071 = vmatprep.subr.bf16.mxu0 0
    %4072 = vmatpush1.bf16.msra.mxu0 %v2792
    %4073 = vmatprep.subr.bf16.mxu0 0
    %4074 = vmatpush1.bf16.msra.mxu0 %v2799
    %4075 = vmatprep.subr.bf16.mxu0 0
    %4076 = vmatpush1.bf16.msra.mxu0 %v2806
    %4077 = vmatprep.subr.bf16.mxu0 0
    %4078 = vmatpush1.bf16.msra.mxu0 %v2813
    %4079 = vmatprep.subr.bf16.mxu0 0
    %4080 = vmatpush1.bf16.msra.mxu0 %v2820
    %4081 = vmatprep.subr.bf16.mxu0 0
    %4082 = vmatpush1.bf16.msra.mxu0 %v2827
    %4083 = vmatprep.subr.bf16.mxu0 0
    %4084 = vmatpush1.bf16.msra.mxu0 %v2834
    %4085 = vmatprep.subr.bf16.mxu0 0
    %4086 = vmatpush1.bf16.msra.mxu0 %v2841
    %4087 = vmatprep.subr.bf16.mxu0 0
    %4088 = vmatpush1.bf16.msra.mxu0 %v2848
    %4089 = vmatprep.subr.bf16.mxu0 0
    %4090 = vmatpush1.bf16.msra.mxu0 %v2855
    %4091 = vmatprep.subr.bf16.mxu0 0
    %4092 = vmatpush1.bf16.msra.mxu0 %v2862
    %4093 = vmatprep.subr.bf16.mxu0 0
    %4094 = vmatpush1.bf16.msra.mxu0 %v2869
    %4095 = vmatprep.subr.bf16.mxu0 0
    %4096 = vmatpush1.bf16.msra.mxu0 %v2876
    %4097 = vmatprep.mubr.bf16.mxu0 %v1042
    %4098 = vmatmul.mubr.bf16.gmra.mrb[0].mxu0 %v1041
    %v4099 = vpop.f32.mrb[0].mxu0
    %v4100 = vadd.f32 %v1525, %v4099
    %v4101 = vpop.f32.mrb[0].mxu0
    %v4102 = vpop.f32.mrb[0].mxu0
    %v4103 = vadd.f32 %v1525, %v4102
    %v4104 = vpop.f32.mrb[0].mxu0
    %4105 = vdwg.mxu0
    %4106 = vmatprep.subr.bf16.mxu0 0
    %4107 = vmatpush1.bf16.msra.mxu0 %v2883
    %4108 = vmatprep.subr.bf16.mxu0 0
    %4109 = vmatpush1.bf16.msra.mxu0 %v2890
    %4110 = vmatprep.subr.bf16.mxu0 0
    %4111 = vmatpush1.bf16.msra.mxu0 %v2897
    %4112 = vmatprep.subr.bf16.mxu0 0
    %4113 = vmatpush1.bf16.msra.mxu0 %v2904
    %4114 = vmatprep.subr.bf16.mxu0 0
    %4115 = vmatpush1.bf16.msra.mxu0 %v2911
    %4116 = vmatprep.subr.bf16.mxu0 0
    %4117 = vmatpush1.bf16.msra.mxu0 %v2918
    %4118 = vmatprep.subr.bf16.mxu0 0
    %4119 = vmatpush1.bf16.msra.mxu0 %v2925
    %4120 = vmatprep.subr.bf16.mxu0 0
    %4121 = vmatpush1.bf16.msra.mxu0 %v2932
    %4122 = vmatprep.subr.bf16.mxu0 0
    %4123 = vmatpush1.bf16.msra.mxu0 %v2939
    %4124 = vmatprep.subr.bf16.mxu0 0
    %4125 = vmatpush1.bf16.msra.mxu0 %v2946
    %4126 = vmatprep.subr.bf16.mxu0 0
    %4127 = vmatpush1.bf16.msra.mxu0 %v2953
    %4128 = vmatprep.subr.bf16.mxu0 0
    %4129 = vmatpush1.bf16.msra.mxu0 %v2960
    %4130 = vmatprep.subr.bf16.mxu0 0
    %4131 = vmatpush1.bf16.msra.mxu0 %v2967
    %4132 = vmatprep.subr.bf16.mxu0 0
    %4133 = vmatpush1.bf16.msra.mxu0 %v2974
    %4134 = vmatprep.subr.bf16.mxu0 0
    %4135 = vmatpush1.bf16.msra.mxu0 %v2981
    %4136 = vmatprep.subr.bf16.mxu0 0
    %4137 = vmatpush1.bf16.msra.mxu0 %v2988
    %4138 = vmatprep.mubr.bf16.mxu0 %v1044
    %4139 = vmatmul.mubr.bf16.gmra.mrb[0].mxu0 %v1043
    %v4140 = vpop.f32.mrb[0].mxu0
    %v4141 = vadd.f32 %v4100, %v4140
    %v4142 = vpop.f32.mrb[0].mxu0
    %v4143 = vpop.f32.mrb[0].mxu0
    %v4144 = vadd.f32 %v4103, %v4143
    %v4145 = vpop.f32.mrb[0].mxu0
    %4146 = vdwg.mxu0
    %4147 = vmatprep.subr.bf16.mxu0 0
    %4148 = vmatpush1.bf16.msra.mxu0 %v2995
    %4149 = vmatprep.subr.bf16.mxu0 0
    %4150 = vmatpush1.bf16.msra.mxu0 %v3002
    %4151 = vmatprep.subr.bf16.mxu0 0
    %4152 = vmatpush1.bf16.msra.mxu0 %v3009
    %4153 = vmatprep.subr.bf16.mxu0 0
    %4154 = vmatpush1.bf16.msra.mxu0 %v3016
    %4155 = vmatprep.subr.bf16.mxu0 0
    %4156 = vmatpush1.bf16.msra.mxu0 %v3023
    %4157 = vmatprep.subr.bf16.mxu0 0
    %4158 = vmatpush1.bf16.msra.mxu0 %v3030
    %4159 = vmatprep.subr.bf16.mxu0 0
    %4160 = vmatpush1.bf16.msra.mxu0 %v3037
    %4161 = vmatprep.subr.bf16.mxu0 0
    %4162 = vmatpush1.bf16.msra.mxu0 %v3044
    %4163 = vmatprep.subr.bf16.mxu0 0
    %4164 = vmatpush1.bf16.msra.mxu0 %v3051
    %4165 = vmatprep.subr.bf16.mxu0 0
    %4166 = vmatpush1.bf16.msra.mxu0 %v3058
    %4167 = vmatprep.subr.bf16.mxu0 0
    %4168 = vmatpush1.bf16.msra.mxu0 %v3065
    %4169 = vmatprep.subr.bf16.mxu0 0
    %4170 = vmatpush1.bf16.msra.mxu0 %v3072
    %4171 = vmatprep.subr.bf16.mxu0 0
    %4172 = vmatpush1.bf16.msra.mxu0 %v3079
    %4173 = vmatprep.subr.bf16.mxu0 0
    %4174 = vmatpush1.bf16.msra.mxu0 %v3086
    %4175 = vmatprep.subr.bf16.mxu0 0
    %4176 = vmatpush1.bf16.msra.mxu0 %v3093
    %4177 = vmatprep.subr.bf16.mxu0 0
    %4178 = vmatpush1.bf16.msra.mxu0 %v3100
    %4179 = vmatprep.mubr.bf16.mxu0 %v1046
    %4180 = vmatmul.mubr.bf16.gmra.mrb[0].mxu0 %v1045
    %v4181 = vpop.f32.mrb[0].mxu0
    %v4182 = vadd.f32 %v4141, %v4181
    %v4183 = vpop.f32.mrb[0].mxu0
    %v4184 = vpop.f32.mrb[0].mxu0
    %v4185 = vadd.f32 %v4144, %v4184
    %v4186 = vpop.f32.mrb[0].mxu0
    %4187 = vdwg.mxu0
    %4188 = vmatprep.subr.bf16.mxu0 0
    %4189 = vmatpush1.bf16.msra.mxu0 %v3107
    %4190 = vmatprep.subr.bf16.mxu0 0
    %4191 = vmatpush1.bf16.msra.mxu0 %v3114
    %4192 = vmatprep.subr.bf16.mxu0 0
    %4193 = vmatpush1.bf16.msra.mxu0 %v3121
    %4194 = vmatprep.subr.bf16.mxu0 0
    %4195 = vmatpush1.bf16.msra.mxu0 %v3128
    %4196 = vmatprep.subr.bf16.mxu0 0
    %4197 = vmatpush1.bf16.msra.mxu0 %v3135
    %4198 = vmatprep.subr.bf16.mxu0 0
    %4199 = vmatpush1.bf16.msra.mxu0 %v3142
    %4200 = vmatprep.subr.bf16.mxu0 0
    %4201 = vmatpush1.bf16.msra.mxu0 %v3149
    %4202 = vmatprep.subr.bf16.mxu0 0
    %4203 = vmatpush1.bf16.msra.mxu0 %v3156
    %4204 = vmatprep.subr.bf16.mxu0 0
    %4205 = vmatpush1.bf16.msra.mxu0 0
    %4206 = vmatprep.subr.bf16.mxu0 0
    %4207 = vmatpush1.bf16.msra.mxu0 0
    %4208 = vmatprep.subr.bf16.mxu0 0
    %4209 = vmatpush1.bf16.msra.mxu0 0
    %4210 = vmatprep.subr.bf16.mxu0 0
    %4211 = vmatpush1.bf16.msra.mxu0 0
    %4212 = vmatprep.subr.bf16.mxu0 0
    %4213 = vmatpush1.bf16.msra.mxu0 0
    %4214 = vmatprep.subr.bf16.mxu0 0
    %4215 = vmatpush1.bf16.msra.mxu0 0
    %4216 = vmatprep.subr.bf16.mxu0 0
    %4217 = vmatpush1.bf16.msra.mxu0 0
    %4218 = vmatprep.subr.bf16.mxu0 0
    %4219 = vmatpush1.bf16.msra.mxu0 0
    %4220 = vmatprep.mubr.bf16.mxu0 0
    %4221 = vmatmul.mubr.bf16.gmra.mrb[0].mxu0 %v1047
    %v4222 = vpop.f32.mrb[0].mxu0
    %v4223 = vadd.f32 %v4182, %v4222
    %v4224 = vpop.f32.mrb[0].mxu0
    %v4225 = vpop.f32.mrb[0].mxu0
    %v4226 = vadd.f32 %v4185, %v4225
    %v4227 = vpop.f32.mrb[0].mxu0
    %4228 = vdwg.mxu0
    %v4229 = vmax.f32 %v3713, 0.0
    %v4230 = vmax.f32 %v3715, 0.0
    %v4231 = vmax.f32 %v3885, 0.0
    %v4232 = vmax.f32 %v3887, 0.0
    %v4233 = vmax.f32 %v4057, 0.0
    %v4234 = vmax.f32 %v4059, 0.0
    %v4235 = vmax.f32 %v4223, 0.0
    %v4236 = vmax.f32 %v3717, 0.0
    %v4237 = vmax.f32 %v3719, 0.0
    %v4238 = vmax.f32 %v3889, 0.0
    %v4239 = vmax.f32 %v3891, 0.0
    %v4240 = vmax.f32 %v4061, 0.0
    %v4241 = vmax.f32 %v4063, 0.0
    %v4242 = vmax.f32 %v4226, 0.0
    %v4243 = vpack.c.bf16 %v4236, %v4229
    %v4244 = vpack.c.bf16 %v4237, %v4230
    %v4245 = vpack.c.bf16 %v4238, %v4231
    %v4246 = vpack.c.bf16 %v4239, %v4232
    %v4247 = vpack.c.bf16 %v4240, %v4233
    %v4248 = vpack.c.bf16 %v4241, %v4234
    %v4249 = vpack.c.bf16 %v4242, %v4235
    %v4250 = vld [vmem:[#allocation10] sm:$0xf]
    %v4251 = vld [vmem:[#allocation10 + $0x4] sm:$0xf]
    %v4252 = vld [vmem:[#allocation10 + $0x8] sm:$0xf]
    %v4253 = vld [vmem:[#allocation10 + $0xc] sm:$0xf]
    %v4254 = vld [vmem:[#allocation10 + $0x10] sm:$0xf]
    %v4255 = vld [vmem:[#allocation10 + $0x14] sm:$0xf]
    %v4256 = vld [vmem:[#allocation10 + $0x18] sm:$0xf]
    %v4257 = vld [vmem:[#allocation10 + $0x1c] sm:$0xf]
    %v4258 = vld [vmem:[#allocation10 + $0x20] sm:$0xf]
    %v4259 = vld [vmem:[#allocation10 + $0x24] sm:$0xf]
    %v4260 = vld [vmem:[#allocation10 + $0x28] sm:$0xf]
    %v4261 = vld [vmem:[#allocation10 + $0x2c] sm:$0xf]
    %v4262 = vld [vmem:[#allocation10 + $0x30] sm:$0xf]
    %v4263 = vld [vmem:[#allocation10 + $0x34] sm:$0xf]
    %v4264 = vld [vmem:[#allocation10 + $0x38] sm:$0xf]
    %v4265 = vld [vmem:[#allocation10 + $0x3c] sm:$0xf]
    %v4266 = vld [vmem:[#allocation10 + $0x40] sm:$0xf]
    %v4267 = vld [vmem:[#allocation10 + $0x44] sm:$0xf]
    %v4268 = vld [vmem:[#allocation10 + $0x48] sm:$0xf]
    %v4269 = vld [vmem:[#allocation10 + $0x4c] sm:$0xf]
    %v4270 = vld [vmem:[#allocation10 + $0x50] sm:$0xf]
    %v4271 = vld [vmem:[#allocation10 + $0x54] sm:$0xf]
    %v4272 = vld [vmem:[#allocation10 + $0x58] sm:$0xf]
    %v4273 = vld [vmem:[#allocation10 + $0x5c] sm:$0xf]
    %v4274 = vld [vmem:[#allocation10 + $0x60] sm:$0xf]
    %v4275 = vld [vmem:[#allocation10 + $0x64] sm:$0xf]
    %v4276 = vld [vmem:[#allocation10 + $0x68] sm:$0xf]
    %v4277 = vld [vmem:[#allocation10 + $0x6c] sm:$0xf]
    %v4278 = vld [vmem:[#allocation10 + $0x70] sm:$0xf]
    %v4279 = vld [vmem:[#allocation10 + $0x74] sm:$0xf]
    %v4280 = vld [vmem:[#allocation10 + $0x78] sm:$0xf]
    %v4281 = vld [vmem:[#allocation10 + $0x7c] sm:$0xf]
    %v4282 = vld [vmem:[#allocation10 + $0x80] sm:$0xf]
    %v4283 = vld [vmem:[#allocation10 + $0x84] sm:$0xf]
    %v4284 = vld [vmem:[#allocation10 + $0x88] sm:$0xf]
    %v4285 = vld [vmem:[#allocation10 + $0x8c] sm:$0xf]
    %v4286 = vld [vmem:[#allocation10 + $0x90] sm:$0xf]
    %v4287 = vld [vmem:[#allocation10 + $0x94] sm:$0xf]
    %v4288 = vld [vmem:[#allocation10 + $0x98] sm:$0xf]
    %v4289 = vld [vmem:[#allocation10 + $0x9c] sm:$0xf]
    %v4290 = vld [vmem:[#allocation10 + $0xa0] sm:$0xf]
    %v4291 = vld [vmem:[#allocation10 + $0xa4] sm:$0xf]
    %v4292 = vld [vmem:[#allocation10 + $0xa8] sm:$0xf]
    %v4293 = vld [vmem:[#allocation10 + $0xac] sm:$0xf]
    %v4294 = vld [vmem:[#allocation10 + $0xb0] sm:$0xf]
    %v4295 = vld [vmem:[#allocation10 + $0xb4] sm:$0xf]
    %v4296 = vld [vmem:[#allocation10 + $0xb8] sm:$0xf]
    %v4297 = vld [vmem:[#allocation10 + $0xbc] sm:$0xf]
    %v4298 = vld [vmem:[#allocation10 + $0xc0] sm:$0xf]
    %v4299 = vld [vmem:[#allocation10 + $0xc4] sm:$0xf]
    %v4300 = vld [vmem:[#allocation10 + $0xc8] sm:$0xf]
    %v4301 = vld [vmem:[#allocation10 + $0xcc] sm:$0xf]
    %v4302 = vld [vmem:[#allocation10 + $0xd0] sm:$0xf]
    %v4303 = vld [vmem:[#allocation10 + $0xd4] sm:$0xf]
    %v4304 = vld [vmem:[#allocation10 + $0xd8] sm:$0xf]
    %v4305 = vld [vmem:[#allocation10 + $0xdc] sm:$0xf]
    %v4306 = vld [vmem:[#allocation10 + $0xe0] sm:$0xf]
    %v4307 = vld [vmem:[#allocation10 + $0xe4] sm:$0xf]
    %v4308 = vld [vmem:[#allocation10 + $0xe8] sm:$0xf]
    %v4309 = vld [vmem:[#allocation10 + $0xec] sm:$0xf]
    %v4310 = vld [vmem:[#allocation10 + $0xf0] sm:$0xf]
    %v4311 = vld [vmem:[#allocation10 + $0xf4] sm:$0xf]
    %v4312 = vld [vmem:[#allocation10 + $0xf8] sm:$0xf]
    %v4313 = vld [vmem:[#allocation10 + $0xfc] sm:$0xf]
    %v4314 = vld [vmem:[#allocation10 + $0x100] sm:$0xf]
    %v4315 = vld [vmem:[#allocation10 + $0x104] sm:$0xf]
    %v4316 = vld [vmem:[#allocation10 + $0x108] sm:$0xf]
    %v4317 = vld [vmem:[#allocation10 + $0x10c] sm:$0xf]
    %v4318 = vld [vmem:[#allocation10 + $0x110] sm:$0xf]
    %v4319 = vld [vmem:[#allocation10 + $0x114] sm:$0xf]
    %v4320 = vld [vmem:[#allocation10 + $0x118] sm:$0xf]
    %v4321 = vld [vmem:[#allocation10 + $0x11c] sm:$0xf]
    %v4322 = vld [vmem:[#allocation10 + $0x120] sm:$0xf]
    %v4323 = vld [vmem:[#allocation10 + $0x124] sm:$0xf]
    %v4324 = vld [vmem:[#allocation10 + $0x128] sm:$0xf]
    %v4325 = vld [vmem:[#allocation10 + $0x12c] sm:$0xf]
    %v4326 = vld [vmem:[#allocation10 + $0x130] sm:$0xf]
    %v4327 = vld [vmem:[#allocation10 + $0x134] sm:$0xf]
    %v4328 = vld [vmem:[#allocation10 + $0x138] sm:$0xf]
    %v4329 = vld [vmem:[#allocation10 + $0x13c] sm:$0xf]
    %v4330 = vld [vmem:[#allocation10 + $0x140] sm:$0xf]
    %v4331 = vld [vmem:[#allocation10 + $0x144] sm:$0xf]
    %v4332 = vld [vmem:[#allocation10 + $0x148] sm:$0xf]
    %v4333 = vld [vmem:[#allocation10 + $0x14c] sm:$0xf]
    %v4334 = vld [vmem:[#allocation10 + $0x150] sm:$0xf]
    %v4335 = vld [vmem:[#allocation10 + $0x154] sm:$0xf]
    %v4336 = vld [vmem:[#allocation10 + $0x158] sm:$0xf]
    %v4337 = vld [vmem:[#allocation10 + $0x15c] sm:$0xf]
    %v4338 = vld [vmem:[#allocation10 + $0x160] sm:$0xf]
    %v4339 = vld [vmem:[#allocation10 + $0x164] sm:$0xf]
    %v4340 = vld [vmem:[#allocation10 + $0x168] sm:$0xf]
    %v4341 = vld [vmem:[#allocation10 + $0x16c] sm:$0xf]
    %v4342 = vld [vmem:[#allocation10 + $0x170] sm:$0xf]
    %v4343 = vld [vmem:[#allocation10 + $0x174] sm:$0xf]
    %v4344 = vld [vmem:[#allocation10 + $0x178] sm:$0xf]
    %v4345 = vld [vmem:[#allocation10 + $0x17c] sm:$0xf]
    %v4346 = vld [vmem:[#allocation10 + $0x180] sm:$0xf]
    %v4347 = vld [vmem:[#allocation10 + $0x184] sm:$0xf]
    %v4348 = vld [vmem:[#allocation10 + $0x188] sm:$0xf]
    %v4349 = vld [vmem:[#allocation10 + $0x18c] sm:$0xf]
    %v4350 = vld [vmem:[#allocation10 + $0x190] sm:$0xf]
    %v4351 = vld [vmem:[#allocation10 + $0x194] sm:$0xf]
    %v4352 = vld [vmem:[#allocation10 + $0x198] sm:$0xf]
    %v4353 = vld [vmem:[#allocation10 + $0x19c] sm:$0xf]
    %v4354 = vld [vmem:[#allocation10 + $0x1a0] sm:$0xf]
    %v4355 = vld [vmem:[#allocation10 + $0x1a4] sm:$0xf]
    %v4356 = vld [vmem:[#allocation10 + $0x1a8] sm:$0xf]
    %v4357 = vld [vmem:[#allocation10 + $0x1ac] sm:$0xf]
    %v4358 = vld [vmem:[#allocation10 + $0x1b0] sm:$0xf]
    %v4359 = vld [vmem:[#allocation10 + $0x1b4] sm:$0xf]
    %v4360 = vld [vmem:[#allocation10 + $0x1b8] sm:$0xf]
    %v4361 = vld [vmem:[#allocation10 + $0x1bc] sm:$0xf]
    %v4362 = vld [vmem:[#allocation11] sm:$0x1]
    %v4364 = vlaneseq
    %v4365 = vshrl.u32 %v4364, 7
    %v4366 = vsub.s32 0, %v4365
    %v4367 = vrot.slane %v4362, %v4366
    %v4481 = vunpack.c.l.b16 %v4250
    %v4482 = vunpack.c.l.b16 %v4251
    %v4483 = vunpack.c.l.b16 %v4252
    %v4484 = vunpack.c.l.b16 %v4253
    %v4485 = vunpack.c.l.b16 %v4254
    %v4486 = vunpack.c.l.b16 %v4255
    %v4487 = vunpack.c.l.b16 %v4256
    %v4488 = vunpack.c.l.b16 %v4257
    %v4489 = vunpack.c.l.b16 %v4258
    %v4490 = vunpack.c.l.b16 %v4259
    %v4491 = vunpack.c.l.b16 %v4260
    %v4492 = vunpack.c.l.b16 %v4261
    %v4493 = vunpack.c.l.b16 %v4262
    %v4494 = vunpack.c.l.b16 %v4263
    %v4495 = vunpack.c.l.b16 %v4264
    %v4496 = vunpack.c.l.b16 %v4265
    %v4497 = vunpack.c.l.b16 %v4266
    %v4498 = vunpack.c.l.b16 %v4267
    %v4499 = vunpack.c.l.b16 %v4268
    %v4500 = vunpack.c.l.b16 %v4269
    %v4501 = vunpack.c.l.b16 %v4270
    %v4502 = vunpack.c.l.b16 %v4271
    %v4503 = vunpack.c.l.b16 %v4272
    %v4504 = vunpack.c.l.b16 %v4273
    %v4505 = vunpack.c.l.b16 %v4274
    %v4506 = vunpack.c.l.b16 %v4275
    %v4507 = vunpack.c.l.b16 %v4276
    %v4508 = vunpack.c.l.b16 %v4277
    %v4509 = vunpack.c.l.b16 %v4278
    %v4510 = vunpack.c.l.b16 %v4279
    %v4511 = vunpack.c.l.b16 %v4280
    %v4512 = vunpack.c.l.b16 %v4281
    %v4513 = vunpack.c.l.b16 %v4282
    %v4514 = vunpack.c.l.b16 %v4283
    %v4515 = vunpack.c.l.b16 %v4284
    %v4516 = vunpack.c.l.b16 %v4285
    %v4517 = vunpack.c.l.b16 %v4286
    %v4518 = vunpack.c.l.b16 %v4287
    %v4519 = vunpack.c.l.b16 %v4288
    %v4520 = vunpack.c.l.b16 %v4289
    %v4521 = vunpack.c.l.b16 %v4290
    %v4522 = vunpack.c.l.b16 %v4291
    %v4523 = vunpack.c.l.b16 %v4292
    %v4524 = vunpack.c.l.b16 %v4293
    %v4525 = vunpack.c.l.b16 %v4294
    %v4526 = vunpack.c.l.b16 %v4295
    %v4527 = vunpack.c.l.b16 %v4296
    %v4528 = vunpack.c.l.b16 %v4297
    %v4529 = vunpack.c.l.b16 %v4298
    %v4530 = vunpack.c.l.b16 %v4299
    %v4531 = vunpack.c.l.b16 %v4300
    %v4532 = vunpack.c.l.b16 %v4301
    %v4533 = vunpack.c.l.b16 %v4302
    %v4534 = vunpack.c.l.b16 %v4303
    %v4535 = vunpack.c.l.b16 %v4304
    %v4536 = vunpack.c.l.b16 %v4305
    %v4537 = vunpack.c.l.b16 %v4306
    %v4538 = vunpack.c.l.b16 %v4307
    %v4539 = vunpack.c.l.b16 %v4308
    %v4540 = vunpack.c.l.b16 %v4309
    %v4541 = vunpack.c.l.b16 %v4310
    %v4542 = vunpack.c.l.b16 %v4311
    %v4543 = vunpack.c.l.b16 %v4312
    %v4544 = vunpack.c.l.b16 %v4313
    %v4545 = vunpack.c.l.b16 %v4314
    %v4546 = vunpack.c.l.b16 %v4315
    %v4547 = vunpack.c.l.b16 %v4316
    %v4548 = vunpack.c.l.b16 %v4317
    %v4549 = vunpack.c.l.b16 %v4318
    %v4550 = vunpack.c.l.b16 %v4319
    %v4551 = vunpack.c.l.b16 %v4320
    %v4552 = vunpack.c.l.b16 %v4321
    %v4553 = vunpack.c.l.b16 %v4322
    %v4554 = vunpack.c.l.b16 %v4323
    %v4555 = vunpack.c.l.b16 %v4324
    %v4556 = vunpack.c.l.b16 %v4325
    %v4557 = vunpack.c.l.b16 %v4326
    %v4558 = vunpack.c.l.b16 %v4327
    %v4559 = vunpack.c.l.b16 %v4328
    %v4560 = vunpack.c.l.b16 %v4329
    %v4561 = vunpack.c.l.b16 %v4330
    %v4562 = vunpack.c.l.b16 %v4331
    %v4563 = vunpack.c.l.b16 %v4332
    %v4564 = vunpack.c.l.b16 %v4333
    %v4565 = vunpack.c.l.b16 %v4334
    %v4566 = vunpack.c.l.b16 %v4335
    %v4567 = vunpack.c.l.b16 %v4336
    %v4568 = vunpack.c.l.b16 %v4337
    %v4569 = vunpack.c.l.b16 %v4338
    %v4570 = vunpack.c.l.b16 %v4339
    %v4571 = vunpack.c.l.b16 %v4340
    %v4572 = vunpack.c.l.b16 %v4341
    %v4573 = vunpack.c.l.b16 %v4342
    %v4574 = vunpack.c.l.b16 %v4343
    %v4575 = vunpack.c.l.b16 %v4344
    %v4576 = vunpack.c.l.b16 %v4345
    %v4577 = vunpack.c.l.b16 %v4346
    %v4578 = vunpack.c.l.b16 %v4347
    %v4579 = vunpack.c.l.b16 %v4348
    %v4580 = vunpack.c.l.b16 %v4349
    %v4581 = vunpack.c.l.b16 %v4350
    %v4582 = vunpack.c.l.b16 %v4351
    %v4583 = vunpack.c.l.b16 %v4352
    %v4584 = vunpack.c.l.b16 %v4353
    %v4585 = vunpack.c.l.b16 %v4354
    %v4586 = vunpack.c.l.b16 %v4355
    %v4587 = vunpack.c.l.b16 %v4356
    %v4588 = vunpack.c.l.b16 %v4357
    %v4589 = vunpack.c.l.b16 %v4358
    %v4590 = vunpack.c.l.b16 %v4359
    %v4591 = vunpack.c.l.b16 %v4360
    %v4592 = vunpack.c.l.b16 %v4361
    %v4593 = vpack.c.b16 %v4482, %v4481
    %v4594 = vpack.c.b16 %v4484, %v4483
    %v4595 = vpack.c.b16 %v4486, %v4485
    %v4596 = vpack.c.b16 %v4488, %v4487
    %v4597 = vpack.c.b16 %v4490, %v4489
    %v4598 = vpack.c.b16 %v4492, %v4491
    %v4599 = vpack.c.b16 %v4494, %v4493
    %v4600 = vpack.c.b16 %v4496, %v4495
    %v4601 = vpack.c.b16 %v4498, %v4497
    %v4602 = vpack.c.b16 %v4500, %v4499
    %v4603 = vpack.c.b16 %v4502, %v4501
    %v4604 = vpack.c.b16 %v4504, %v4503
    %v4605 = vpack.c.b16 %v4506, %v4505
    %v4606 = vpack.c.b16 %v4508, %v4507
    %v4607 = vpack.c.b16 %v4510, %v4509
    %v4608 = vpack.c.b16 %v4512, %v4511
    %v4609 = vpack.c.b16 %v4514, %v4513
    %v4610 = vpack.c.b16 %v4516, %v4515
    %v4611 = vpack.c.b16 %v4518, %v4517
    %v4612 = vpack.c.b16 %v4520, %v4519
    %v4613 = vpack.c.b16 %v4522, %v4521
    %v4614 = vpack.c.b16 %v4524, %v4523
    %v4615 = vpack.c.b16 %v4526, %v4525
    %v4616 = vpack.c.b16 %v4528, %v4527
    %v4617 = vpack.c.b16 %v4530, %v4529
    %v4618 = vpack.c.b16 %v4532, %v4531
    %v4619 = vpack.c.b16 %v4534, %v4533
    %v4620 = vpack.c.b16 %v4536, %v4535
    %v4621 = vpack.c.b16 %v4538, %v4537
    %v4622 = vpack.c.b16 %v4540, %v4539
    %v4623 = vpack.c.b16 %v4542, %v4541
    %v4624 = vpack.c.b16 %v4544, %v4543
    %v4625 = vpack.c.b16 %v4546, %v4545
    %v4626 = vpack.c.b16 %v4548, %v4547
    %v4627 = vpack.c.b16 %v4550, %v4549
    %v4628 = vpack.c.b16 %v4552, %v4551
    %v4629 = vpack.c.b16 %v4554, %v4553
    %v4630 = vpack.c.b16 %v4556, %v4555
    %v4631 = vpack.c.b16 %v4558, %v4557
    %v4632 = vpack.c.b16 %v4560, %v4559
    %v4633 = vpack.c.b16 %v4562, %v4561
    %v4634 = vpack.c.b16 %v4564, %v4563
    %v4635 = vpack.c.b16 %v4566, %v4565
    %v4636 = vpack.c.b16 %v4568, %v4567
    %v4637 = vpack.c.b16 %v4570, %v4569
    %v4638 = vpack.c.b16 %v4572, %v4571
    %v4639 = vpack.c.b16 %v4574, %v4573
    %v4640 = vpack.c.b16 %v4576, %v4575
    %v4641 = vpack.c.b16 %v4578, %v4577
    %v4642 = vpack.c.b16 %v4580, %v4579
    %v4643 = vpack.c.b16 %v4582, %v4581
    %v4644 = vpack.c.b16 %v4584, %v4583
    %v4645 = vpack.c.b16 %v4586, %v4585
    %v4646 = vpack.c.b16 %v4588, %v4587
    %v4647 = vpack.c.b16 %v4590, %v4589
    %v4648 = vpack.c.b16 %v4592, %v4591
    %4705 = vmatprep.subr.bf16.mxu0 0
    %4706 = vmatpush1.bf16.msra.mxu0 %v4593
    %4707 = vmatprep.subr.bf16.mxu0 0
    %4708 = vmatpush1.bf16.msra.mxu0 %v4594
    %4709 = vmatprep.subr.bf16.mxu0 0
    %4710 = vmatpush1.bf16.msra.mxu0 %v4595
    %4711 = vmatprep.subr.bf16.mxu0 0
    %4712 = vmatpush1.bf16.msra.mxu0 %v4596
    %4713 = vmatprep.subr.bf16.mxu0 0
    %4714 = vmatpush1.bf16.msra.mxu0 %v4597
    %4715 = vmatprep.subr.bf16.mxu0 0
    %4716 = vmatpush1.bf16.msra.mxu0 %v4598
    %4717 = vmatprep.subr.bf16.mxu0 0
    %4718 = vmatpush1.bf16.msra.mxu0 %v4599
    %4719 = vmatprep.subr.bf16.mxu0 0
    %4720 = vmatpush1.bf16.msra.mxu0 %v4600
    %4721 = vmatprep.subr.bf16.mxu0 0
    %4722 = vmatpush1.bf16.msra.mxu0 %v4601
    %4723 = vmatprep.subr.bf16.mxu0 0
    %4724 = vmatpush1.bf16.msra.mxu0 %v4602
    %4725 = vmatprep.subr.bf16.mxu0 0
    %4726 = vmatpush1.bf16.msra.mxu0 %v4603
    %4727 = vmatprep.subr.bf16.mxu0 0
    %4728 = vmatpush1.bf16.msra.mxu0 %v4604
    %4729 = vmatprep.subr.bf16.mxu0 0
    %4730 = vmatpush1.bf16.msra.mxu0 %v4605
    %4731 = vmatprep.subr.bf16.mxu0 0
    %4732 = vmatpush1.bf16.msra.mxu0 %v4606
    %4733 = vmatprep.subr.bf16.mxu0 0
    %4734 = vmatpush1.bf16.msra.mxu0 %v4607
    %4735 = vmatprep.subr.bf16.mxu0 0
    %4736 = vmatpush1.bf16.msra.mxu0 %v4608
    %4737 = vmatprep.mubr.bf16.mxu0 %v4244
    %4738 = vmatmul.mubr.bf16.gmra.mrb[0].mxu0 %v4243
    %v4739 = vpop.f32.mrb[0].mxu0
    %v4740 = vadd.f32 %v4367, %v4739
    %v4741 = vpop.f32.mrb[0].mxu0
    %v4742 = vpop.f32.mrb[0].mxu0
    %v4743 = vadd.f32 %v4367, %v4742
    %v4744 = vpop.f32.mrb[0].mxu0
    %4745 = vdwg.mxu0
    %4746 = vmatprep.subr.bf16.mxu0 0
    %4747 = vmatpush1.bf16.msra.mxu0 %v4609
    %4748 = vmatprep.subr.bf16.mxu0 0
    %4749 = vmatpush1.bf16.msra.mxu0 %v4610
    %4750 = vmatprep.subr.bf16.mxu0 0
    %4751 = vmatpush1.bf16.msra.mxu0 %v4611
    %4752 = vmatprep.subr.bf16.mxu0 0
    %4753 = vmatpush1.bf16.msra.mxu0 %v4612
    %4754 = vmatprep.subr.bf16.mxu0 0
    %4755 = vmatpush1.bf16.msra.mxu0 %v4613
    %4756 = vmatprep.subr.bf16.mxu0 0
    %4757 = vmatpush1.bf16.msra.mxu0 %v4614
    %4758 = vmatprep.subr.bf16.mxu0 0
    %4759 = vmatpush1.bf16.msra.mxu0 %v4615
    %4760 = vmatprep.subr.bf16.mxu0 0
    %4761 = vmatpush1.bf16.msra.mxu0 %v4616
    %4762 = vmatprep.subr.bf16.mxu0 0
    %4763 = vmatpush1.bf16.msra.mxu0 %v4617
    %4764 = vmatprep.subr.bf16.mxu0 0
    %4765 = vmatpush1.bf16.msra.mxu0 %v4618
    %4766 = vmatprep.subr.bf16.mxu0 0
    %4767 = vmatpush1.bf16.msra.mxu0 %v4619
    %4768 = vmatprep.subr.bf16.mxu0 0
    %4769 = vmatpush1.bf16.msra.mxu0 %v4620
    %4770 = vmatprep.subr.bf16.mxu0 0
    %4771 = vmatpush1.bf16.msra.mxu0 %v4621
    %4772 = vmatprep.subr.bf16.mxu0 0
    %4773 = vmatpush1.bf16.msra.mxu0 %v4622
    %4774 = vmatprep.subr.bf16.mxu0 0
    %4775 = vmatpush1.bf16.msra.mxu0 %v4623
    %4776 = vmatprep.subr.bf16.mxu0 0
    %4777 = vmatpush1.bf16.msra.mxu0 %v4624
    %4778 = vmatprep.mubr.bf16.mxu0 %v4246
    %4779 = vmatmul.mubr.bf16.gmra.mrb[0].mxu0 %v4245
    %v4780 = vpop.f32.mrb[0].mxu0
    %v4781 = vadd.f32 %v4740, %v4780
    %v4782 = vpop.f32.mrb[0].mxu0
    %v4783 = vpop.f32.mrb[0].mxu0
    %v4784 = vadd.f32 %v4743, %v4783
    %v4785 = vpop.f32.mrb[0].mxu0
    %4786 = vdwg.mxu0
    %4787 = vmatprep.subr.bf16.mxu0 0
    %4788 = vmatpush1.bf16.msra.mxu0 %v4625
    %4789 = vmatprep.subr.bf16.mxu0 0
    %4790 = vmatpush1.bf16.msra.mxu0 %v4626
    %4791 = vmatprep.subr.bf16.mxu0 0
    %4792 = vmatpush1.bf16.msra.mxu0 %v4627
    %4793 = vmatprep.subr.bf16.mxu0 0
    %4794 = vmatpush1.bf16.msra.mxu0 %v4628
    %4795 = vmatprep.subr.bf16.mxu0 0
    %4796 = vmatpush1.bf16.msra.mxu0 %v4629
    %4797 = vmatprep.subr.bf16.mxu0 0
    %4798 = vmatpush1.bf16.msra.mxu0 %v4630
    %4799 = vmatprep.subr.bf16.mxu0 0
    %4800 = vmatpush1.bf16.msra.mxu0 %v4631
    %4801 = vmatprep.subr.bf16.mxu0 0
    %4802 = vmatpush1.bf16.msra.mxu0 %v4632
    %4803 = vmatprep.subr.bf16.mxu0 0
    %4804 = vmatpush1.bf16.msra.mxu0 %v4633
    %4805 = vmatprep.subr.bf16.mxu0 0
    %4806 = vmatpush1.bf16.msra.mxu0 %v4634
    %4807 = vmatprep.subr.bf16.mxu0 0
    %4808 = vmatpush1.bf16.msra.mxu0 %v4635
    %4809 = vmatprep.subr.bf16.mxu0 0
    %4810 = vmatpush1.bf16.msra.mxu0 %v4636
    %4811 = vmatprep.subr.bf16.mxu0 0
    %4812 = vmatpush1.bf16.msra.mxu0 %v4637
    %4813 = vmatprep.subr.bf16.mxu0 0
    %4814 = vmatpush1.bf16.msra.mxu0 %v4638
    %4815 = vmatprep.subr.bf16.mxu0 0
    %4816 = vmatpush1.bf16.msra.mxu0 %v4639
    %4817 = vmatprep.subr.bf16.mxu0 0
    %4818 = vmatpush1.bf16.msra.mxu0 %v4640
    %4819 = vmatprep.mubr.bf16.mxu0 %v4248
    %4820 = vmatmul.mubr.bf16.gmra.mrb[0].mxu0 %v4247
    %v4821 = vpop.f32.mrb[0].mxu0
    %v4822 = vadd.f32 %v4781, %v4821
    %v4823 = vpop.f32.mrb[0].mxu0
    %v4824 = vpop.f32.mrb[0].mxu0
    %v4825 = vadd.f32 %v4784, %v4824
    %v4826 = vpop.f32.mrb[0].mxu0
    %4827 = vdwg.mxu0
    %4828 = vmatprep.subr.bf16.mxu0 0
    %4829 = vmatpush1.bf16.msra.mxu0 %v4641
    %4830 = vmatprep.subr.bf16.mxu0 0
    %4831 = vmatpush1.bf16.msra.mxu0 %v4642
    %4832 = vmatprep.subr.bf16.mxu0 0
    %4833 = vmatpush1.bf16.msra.mxu0 %v4643
    %4834 = vmatprep.subr.bf16.mxu0 0
    %4835 = vmatpush1.bf16.msra.mxu0 %v4644
    %4836 = vmatprep.subr.bf16.mxu0 0
    %4837 = vmatpush1.bf16.msra.mxu0 %v4645
    %4838 = vmatprep.subr.bf16.mxu0 0
    %4839 = vmatpush1.bf16.msra.mxu0 %v4646
    %4840 = vmatprep.subr.bf16.mxu0 0
    %4841 = vmatpush1.bf16.msra.mxu0 %v4647
    %4842 = vmatprep.subr.bf16.mxu0 0
    %4843 = vmatpush1.bf16.msra.mxu0 %v4648
    %4844 = vmatprep.subr.bf16.mxu0 0
    %4845 = vmatpush1.bf16.msra.mxu0 0
    %4846 = vmatprep.subr.bf16.mxu0 0
    %4847 = vmatpush1.bf16.msra.mxu0 0
    %4848 = vmatprep.subr.bf16.mxu0 0
    %4849 = vmatpush1.bf16.msra.mxu0 0
    %4850 = vmatprep.subr.bf16.mxu0 0
    %4851 = vmatpush1.bf16.msra.mxu0 0
    %4852 = vmatprep.subr.bf16.mxu0 0
    %4853 = vmatpush1.bf16.msra.mxu0 0
    %4854 = vmatprep.subr.bf16.mxu0 0
    %4855 = vmatpush1.bf16.msra.mxu0 0
    %4856 = vmatprep.subr.bf16.mxu0 0
    %4857 = vmatpush1.bf16.msra.mxu0 0
    %4858 = vmatprep.subr.bf16.mxu0 0
    %4859 = vmatpush1.bf16.msra.mxu0 0
    %4860 = vmatprep.mubr.bf16.mxu0 0
    %4861 = vmatmul.mubr.bf16.gmra.mrb[0].mxu0 %v4249
    %v4862 = vpop.f32.mrb[0].mxu0
    %v4863 = vadd.f32 %v4822, %v4862
    %v4864 = vpop.f32.mrb[0].mxu0
    %v4865 = vpop.f32.mrb[0].mxu0
    %v4866 = vadd.f32 %v4825, %v4865
    %v4867 = vpop.f32.mrb[0].mxu0
    %4868 = vdwg.mxu0
    %4869 = vst [vmem:[#allocation13] sm:$0xff] %v4863
    %4870 = vst [vmem:[#allocation13 + $0x8] sm:$0xff] %v4866
    // Predicated region
    $region54: #{fwd.1} parent=1 // pred_check
      _
    $region55: #{fwd.1} parent=1 // pred_check_branch
      %4872 = sbr.rel (0) target = $region57
    $region56: #{fwd.1} parent=1 // pred_region
      %s4874 = ssub.s32 256, 128
      %4875 = vsyncadd [#allocation4], %s4874
      %s4876 = sshll.u32 [#allocation13], 4
      %s4877 = int_to_ptr.vmem [resolvable:$true] %s4876
      %4882 = dma.vmem_to_hbm [thread:$0]  %s4877, 128, %s7, [#allocation4], 128, 128, 8
    $region57: #{fwd.1} parent=1 // pred_fallthru
      _
    // Predicated region
    $region58: #{fwd.1} parent=1 // pred_check
      _
    $region59: #{fwd.1} parent=1 // pred_check_branch
      %4884 = sbr.rel (0) target = $region61
    $region60: #{fwd.1} parent=1 // pred_region
      %4885 = dma.done [#allocation4], 256
    $region61: #{fwd.1} parent=1 // pred_fallthru
      _
    %4886 = vsyncpa [#allocation3], 1
    %4887 = vsyncpa [#allocation6], 1
    %4888 = vsyncpa [#allocation9], 1
    %4889 = vsyncpa [#allocation12], 1
    %4890 = vsyncpa [#allocation4], 1

</llo_original>
